<compile_context>
chip_gen: v6e
topology: v6e:2x2x1
jax: 0.10.0
libtpu: 0.0.40
codegen_flags: <defaults>
</compile_context>

<pallas_src>
import jax
import jax.numpy as jnp
from jax.experimental import pallas as pl
from jax.experimental.pallas import tpu as pltpu


# ----------------------------------------------------------------------------
# Fused PNet kernel: one grid step == one image, everything stays in VMEM.
# ----------------------------------------------------------------------------
def _pnet_kernel(x_ref, w1_ref, b1_ref, w2_ref, b2_ref, w3_ref, b3_ref,
                 w4_ref, b4_ref, alpha_ref,
                 out_ref,
                 y1_s, yp_s, y2_s):
    H1, W1, _ = y1_s.shape       # conv1 output spatial
    Hp, Wp, _ = yp_s.shape       # pooled spatial
    H2, W2, _ = y2_s.shape       # conv2 output spatial
    _, H3, W3, _ = out_ref.shape  # conv3 / heads spatial

    a1 = alpha_ref[0]
    a2 = alpha_ref[1]
    a3 = alpha_ref[2]

    def prelu(v, a):
        return jnp.where(v > 0.0, v, a * v)

    def conv3x3_row(load_row, w_ref, b_ref, wo, h):
        # One output row of a valid 3x3 conv: 9 shifted (wo, Cin)@(Cin, Cout) dots.
        cout = w_ref.shape[2]
        acc = jnp.zeros((wo, cout), jnp.float32)
        for kh in range(3):
            row = load_row(h + kh)                      # (W_in, Cin)
            for kw in range(3):
                acc = acc + jnp.dot(row[kw:kw + wo, :], w_ref[kh * 3 + kw],
                                    preferred_element_type=jnp.float32)
        return acc + b_ref[...]

    # ---- conv1 (3 -> 10, k3) + PReLU -------------------------------------
    def c1(h, carry):
        y1_s[h] = prelu(
            conv3x3_row(lambda r: x_ref[0, r], w1_ref, b1_ref, W1, h), a1)
        return carry
    jax.lax.fori_loop(0, H1, c1, 0)

    # ---- 2x2 / stride-2 max pool (floor mode) ----------------------------
    # Column downsampling via exact 0/1 selection matmuls (avoids strided
    # vector loads and in-kernel reshapes).
    jj = jax.lax.broadcasted_iota(jnp.int32, (Wp, W1), 0)
    ww = jax.lax.broadcasted_iota(jnp.int32, (Wp, W1), 1)
    s_even = (ww == 2 * jj).astype(jnp.float32)          # picks column 2j
    s_odd = (ww == 2 * jj + 1).astype(jnp.float32)       # picks column 2j+1

    def pool(hp, carry):
        m = jnp.maximum(y1_s[2 * hp], y1_s[2 * hp + 1])  # vertical pair max
        yp_s[hp] = jnp.maximum(
            jnp.dot(s_even, m, preferred_element_type=jnp.float32),
            jnp.dot(s_odd, m, preferred_element_type=jnp.float32))
        return carry
    jax.lax.fori_loop(0, Hp, pool, 0)

    # ---- conv2 (10 -> 16, k3) + PReLU ------------------------------------
    def c2(h, carry):
        y2_s[h] = prelu(
            conv3x3_row(lambda r: yp_s[r], w2_ref, b2_ref, W2, h), a2)
        return carry
    jax.lax.fori_loop(0, H2, c2, 0)

    # ---- conv3 (16 -> 32, k3) + PReLU, fused heads -----------------------
    # Heads: single matmul with channel-packed weights; column 0 is conv4_1
    # (sigmoid applied), columns 1..4 are conv4_2, columns 5..7 are padding.
    col8 = jax.lax.broadcasted_iota(jnp.int32, (W3, 8), 1)

    def c3(h, carry):
        y = prelu(
            conv3x3_row(lambda r: y2_s[r], w3_ref, b3_ref, W3, h), a3)  # (W3, 32)
        z = jnp.dot(y, w4_ref[...], preferred_element_type=jnp.float32) + b4_ref[...]
        # Exact sigmoid (keeps label strictly within [0, 1]; approx reciprocal
        # could overshoot 1.0 by an ulp).
        sig = 1.0 / (1.0 + jnp.exp(-z))
        out_ref[0, h] = jnp.where(col8 == 0, sig, z)
        return carry
    jax.lax.fori_loop(0, H3, c3, 0)


def _rep_spec(shape, space=None):
    """Full-array block, replicated across the batch grid."""
    zeros = (0,) * len(shape)
    if space is None:
        return pl.BlockSpec(shape, lambda n: zeros)
    return pl.BlockSpec(shape, lambda n: zeros, memory_space=space)


# ----------------------------------------------------------------------------
# Parameter init (deterministic; mirrors weights_init: xavier_uniform + bias 0.1)
# ----------------------------------------------------------------------------
def _xavier_uniform(key, shape, fan_in, fan_out):
    bound = (6.0 / (fan_in + fan_out)) ** 0.5
    return jax.random.uniform(key, shape, jnp.float32, -bound, bound)


def init_pnet_params(key):
    ks = jax.random.split(key, 6)
    p = {}
    # conv weights stored as (kh*kw, cin, cout); PyTorch xavier fans are
    # fan_in = cin*k*k, fan_out = cout*k*k.
    p["w1"] = _xavier_uniform(ks[0], (3, 3, 3, 10), 3 * 9, 10 * 9).reshape(9, 3, 10)
    p["b1"] = jnp.full((10,), 0.1, jnp.float32)
    p["a1"] = 0.25  # nn.PReLU() default (weights_init does not touch PReLU)
    p["w2"] = _xavier_uniform(ks[1], (3, 3, 10, 16), 10 * 9, 16 * 9).reshape(9, 10, 16)
    p["b2"] = jnp.full((16,), 0.1, jnp.float32)
    p["a2"] = 0.25
    p["w3"] = _xavier_uniform(ks[2], (3, 3, 16, 32), 16 * 9, 32 * 9).reshape(9, 16, 32)
    p["b3"] = jnp.full((32,), 0.1, jnp.float32)
    p["a3"] = 0.25
    p["w4_1"] = _xavier_uniform(ks[3], (32, 1), 32, 1)
    p["b4_1"] = jnp.full((1,), 0.1, jnp.float32)
    p["w4_2"] = _xavier_uniform(ks[4], (32, 4), 32, 4)
    p["b4_2"] = jnp.full((4,), 0.1, jnp.float32)
    # conv4_3 (landmark head) exists in PNet.__init__ but forward() never uses it.
    p["w4_3"] = _xavier_uniform(ks[5], (32, 10), 32, 10)
    p["b4_3"] = jnp.full((10,), 0.1, jnp.float32)
    return p


# ----------------------------------------------------------------------------
# Forward pass (matches PNet.forward: returns (label, offset) in NCHW)
# ----------------------------------------------------------------------------
@jax.jit
def pnet_forward(x_nchw, params):
    x = jnp.transpose(x_nchw, (0, 2, 3, 1)).astype(jnp.float32)  # NCHW -> NHWC
    N, H, W, _ = x.shape
    H1, W1 = H - 2, W - 2          # conv1
    Hp, Wp = H1 // 2, W1 // 2      # maxpool (floor mode)
    H2, W2 = Hp - 2, Wp - 2        # conv2
    H3, W3 = H2 - 2, W2 - 2        # conv3 / heads

    # Channel-packed heads: col 0 = conv4_1, cols 1..4 = conv4_2, cols 5..7 pad.
    w4 = jnp.concatenate(
        [params["w4_1"], params["w4_2"], jnp.zeros((32, 3), jnp.float32)], axis=1)
    b4 = jnp.concatenate(
        [params["b4_1"], params["b4_2"], jnp.zeros((3,), jnp.float32)]).reshape(1, 8)
    alphas = jnp.stack([jnp.asarray(params["a1"], jnp.float32),
                        jnp.asarray(params["a2"], jnp.float32),
                        jnp.asarray(params["a3"], jnp.float32)])

    flops = 2 * N * (H1 * W1 * 27 * 10 + H2 * W2 * 90 * 16
                     + H3 * W3 * 144 * 32 + H3 * W3 * 32 * 8)
    bytes_accessed = 4 * (x.size + N * H3 * W3 * 8
                          + 9 * 3 * 10 + 9 * 10 * 16 + 9 * 16 * 32 + 32 * 8)
    cost = pl.CostEstimate(flops=flops, transcendentals=N * H3 * W3,
                           bytes_accessed=bytes_accessed)

    out = pl.pallas_call(
        _pnet_kernel,
        out_shape=jax.ShapeDtypeStruct((N, H3, W3, 8), jnp.float32),
        grid=(N,),
        in_specs=[
            pl.BlockSpec((1, H, W, 3), lambda n: (n, 0, 0, 0)),   # image
            _rep_spec((9, 3, 10)),                                # w1
            _rep_spec((1, 10)),                                   # b1
            _rep_spec((9, 10, 16)),                               # w2
            _rep_spec((1, 16)),                                   # b2
            _rep_spec((9, 16, 32)),                               # w3
            _rep_spec((1, 32)),                                   # b3
            _rep_spec((32, 8)),                                   # packed heads w
            _rep_spec((1, 8)),                                    # packed heads b
            _rep_spec((3,), pltpu.MemorySpace.SMEM),              # PReLU alphas
        ],
        out_specs=pl.BlockSpec((1, H3, W3, 8), lambda n: (n, 0, 0, 0)),
        scratch_shapes=[
            pltpu.VMEM((H1, W1, 10), jnp.float32),   # conv1 output
            pltpu.VMEM((Hp, Wp, 10), jnp.float32),   # pooled
            pltpu.VMEM((H2, W2, 16), jnp.float32),   # conv2 output
        ],
        compiler_params=pltpu.CompilerParams(
            dimension_semantics=("parallel",),
            vmem_limit_bytes=48 * 1024 * 1024,
        ),
        cost_estimate=cost,
    )(x, params["w1"], params["b1"].reshape(1, 10),
      params["w2"], params["b2"].reshape(1, 16),
      params["w3"], params["b3"].reshape(1, 32),
      w4, b4, alphas)

    label = jnp.transpose(out[..., 0:1], (0, 3, 1, 2))   # (N, 1, H3, W3)
    offset = jnp.transpose(out[..., 1:5], (0, 3, 1, 2))  # (N, 4, H3, W3)
    return label, offset


# ----------------------------------------------------------------------------
# Pure-XLA reference (used only for the correctness check in __main__)
# ----------------------------------------------------------------------------
def _pnet_reference(x_nchw, params):
    hp = jax.lax.Precision.HIGHEST
    x = jnp.transpose(x_nchw, (0, 2, 3, 1)).astype(jnp.float32)

    def conv3x3(v, w9, b):
        k = w9.reshape(3, 3, w9.shape[1], w9.shape[2])  # HWIO
        y = jax.lax.conv_general_dilated(
            v, k, (1, 1), "VALID",
            dimension_numbers=("NHWC", "HWIO", "NHWC"), precision=hp)
        return y + b

    def prelu(v, a):
        return jnp.where(v > 0.0, v, a * v)

    y = prelu(conv3x3(x, params["w1"], params["b1"]), params["a1"])
    y = jax.lax.reduce_window(y, -jnp.inf, jax.lax.max,
                              (1, 2, 2, 1), (1, 2, 2, 1), "VALID")
    y = prelu(conv3x3(y, params["w2"], params["b2"]), params["a2"])
    y = prelu(conv3x3(y, params["w3"], params["b3"]), params["a3"])
    lab = 1.0 / (1.0 + jnp.exp(-(jnp.einsum("nhwc,cd->nhwd", y, params["w4_1"],
                                            precision=hp) + params["b4_1"])))
    off = (jnp.einsum("nhwc,cd->nhwd", y, params["w4_2"], precision=hp)
           + params["b4_2"])
    return (jnp.transpose(lab, (0, 3, 1, 2)), jnp.transpose(off, (0, 3, 1, 2)))


if __name__ == "__main__":
    key = jax.random.PRNGKey(0)
    k_param, k_input = jax.random.split(key)
    params = init_pnet_params(k_param)

    # Small input consistent with the module: batch=2, 3 channels, 16x16 spatial.
    x = jax.random.normal(k_input, (2, 3, 16, 16), jnp.float32)

    label, offset = pnet_forward(x, params)
    label, offset = jax.block_until_ready((label, offset))

    assert label.shape == (2, 1, 3, 3), label.shape
    assert offset.shape == (2, 4, 3, 3), offset.shape
    assert bool(jnp.all(jnp.isfinite(label))) and bool(jnp.all(jnp.isfinite(offset)))
    assert bool(jnp.all(label >= 0.0)) and bool(jnp.all(label <= 1.0))

    ref_label, ref_offset = _pnet_reference(x, params)
    assert bool(jnp.allclose(label, ref_label, rtol=3e-2, atol=3e-2)), (
        float(jnp.max(jnp.abs(label - ref_label))))
    assert bool(jnp.allclose(offset, ref_offset, rtol=3e-2, atol=3e-2)), (
        float(jnp.max(jnp.abs(offset - ref_offset))))
    print("KERNEL_OK")
</pallas_src>

<mosaic_0001>
module attributes {stable_mosaic.version = 11 : i64} {
  func.func @_pnet_kernel(%arg0: i32, %arg1: memref<1x16x16x3xf32, #tpu.memory_space<vmem>>, %arg2: memref<9x3x10xf32, #tpu.memory_space<vmem>>, %arg3: memref<1x10xf32, #tpu.memory_space<vmem>>, %arg4: memref<9x10x16xf32, #tpu.memory_space<vmem>>, %arg5: memref<1x16xf32, #tpu.memory_space<vmem>>, %arg6: memref<9x16x32xf32, #tpu.memory_space<vmem>>, %arg7: memref<1x32xf32, #tpu.memory_space<vmem>>, %arg8: memref<32x8xf32, #tpu.memory_space<vmem>>, %arg9: memref<1x8xf32, #tpu.memory_space<vmem>>, %arg10: memref<3xf32, #tpu.memory_space<smem>>, %arg11: memref<1x3x3x8xf32, #tpu.memory_space<vmem>>, %arg12: memref<14x14x10xf32, #tpu.memory_space<vmem>>, %arg13: memref<7x7x10xf32, #tpu.memory_space<vmem>>, %arg14: memref<5x5x16xf32, #tpu.memory_space<vmem>>) attributes {dimension_semantics = [#tpu.dimension_semantics<parallel>], iteration_bounds = array<i64: 2>, scalar_prefetch = 0 : i64, scratch_operands = 3 : i64, tpu.core_type = #tpu.core_type<tc>, window_params = [{transform_indices = @transform_0, window_bounds = array<i64: 1, 16, 16, 3>}, {pipeline_mode = #tpu.pipeline_mode<synchronous>, transform_indices = @transform_1, window_bounds = array<i64: 9, 3, 10>}, {pipeline_mode = #tpu.pipeline_mode<synchronous>, transform_indices = @transform_2, window_bounds = array<i64: 1, 10>}, {pipeline_mode = #tpu.pipeline_mode<synchronous>, transform_indices = @transform_3, window_bounds = array<i64: 9, 10, 16>}, {pipeline_mode = #tpu.pipeline_mode<synchronous>, transform_indices = @transform_4, window_bounds = array<i64: 1, 16>}, {pipeline_mode = #tpu.pipeline_mode<synchronous>, transform_indices = @transform_5, window_bounds = array<i64: 9, 16, 32>}, {pipeline_mode = #tpu.pipeline_mode<synchronous>, transform_indices = @transform_6, window_bounds = array<i64: 1, 32>}, {pipeline_mode = #tpu.pipeline_mode<synchronous>, transform_indices = @transform_7, window_bounds = array<i64: 32, 8>}, {pipeline_mode = #tpu.pipeline_mode<synchronous>, transform_indices = @transform_8, window_bounds = array<i64: 1, 8>}, {transform_indices = @transform_9, window_bounds = array<i64: 3>}, {transform_indices = @transform_10, window_bounds = array<i64: 1, 3, 3, 8>}]} {
    %c0 = arith.constant 0 : index
    %0 = memref.load %arg10[%c0] : memref<3xf32, #tpu.memory_space<smem>>
    %c1 = arith.constant 1 : index
    %1 = memref.load %arg10[%c1] : memref<3xf32, #tpu.memory_space<smem>>
    %c2 = arith.constant 2 : index
    %2 = memref.load %arg10[%c2] : memref<3xf32, #tpu.memory_space<smem>>
    %c0_i32 = arith.constant 0 : i32
    %c14_i32 = arith.constant 14 : i32
    %3 = arith.addi %c0_i32, %c14_i32 : i32
    %c1_i32 = arith.constant 1 : i32
    scf.for %arg15 = %c0_i32 to %3 step %c1_i32  : i32 {
      %cst = arith.constant 0.000000e+00 : f32
      %22 = vector.broadcast %cst : f32 to vector<14x10xf32>
      %c0_i32_12 = arith.constant 0 : i32
      %23 = arith.addi %arg15, %c0_i32_12 : i32
      %c0_13 = arith.constant 0 : index
      %24 = arith.index_cast %23 : i32 to index
      %c0_14 = arith.constant 0 : index
      %c0_15 = arith.constant 0 : index
      %25 = vector.load %arg1[%c0_13, %24, %c0_14, %c0_15] : memref<1x16x16x3xf32, #tpu.memory_space<vmem>>, vector<1x1x16x3xf32>
      %26 = vector.shape_cast %25 : vector<1x1x16x3xf32> to vector<16x3xf32>
      %27 = vector.extract_strided_slice %26 {offsets = [0, 0], sizes = [14, 3], strides = [1, 1]} : vector<16x3xf32> to vector<14x3xf32>
      %c0_16 = arith.constant 0 : index
      %c0_17 = arith.constant 0 : index
      %c0_18 = arith.constant 0 : index
      %28 = vector.load %arg2[%c0_16, %c0_17, %c0_18] : memref<9x3x10xf32, #tpu.memory_space<vmem>>, vector<1x3x10xf32>
      %29 = vector.shape_cast %28 : vector<1x3x10xf32> to vector<3x10xf32>
      %cst_19 = arith.constant dense<0.000000e+00> : vector<14x10xf32>
      %30 = tpu.matmul %27, %29, %cst_19 {dimension_numbers = #tpu.dot_dimension_numbers<[1], [0], [0], [1], [0, 0, 1, 1], [], []>} : vector<14x3xf32>, vector<3x10xf32>, vector<14x10xf32> -> vector<14x10xf32>
      %31 = arith.addf %22, %30 : vector<14x10xf32>
      %32 = vector.extract_strided_slice %26 {offsets = [1, 0], sizes = [14, 3], strides = [1, 1]} : vector<16x3xf32> to vector<14x3xf32>
      %c1_20 = arith.constant 1 : index
      %c0_21 = arith.constant 0 : index
      %c0_22 = arith.constant 0 : index
      %33 = vector.load %arg2[%c1_20, %c0_21, %c0_22] : memref<9x3x10xf32, #tpu.memory_space<vmem>>, vector<1x3x10xf32>
      %34 = vector.shape_cast %33 : vector<1x3x10xf32> to vector<3x10xf32>
      %cst_23 = arith.constant dense<0.000000e+00> : vector<14x10xf32>
      %35 = tpu.matmul %32, %34, %cst_23 {dimension_numbers = #tpu.dot_dimension_numbers<[1], [0], [0], [1], [0, 0, 1, 1], [], []>} : vector<14x3xf32>, vector<3x10xf32>, vector<14x10xf32> -> vector<14x10xf32>
      %36 = arith.addf %31, %35 : vector<14x10xf32>
      %37 = vector.extract_strided_slice %26 {offsets = [2, 0], sizes = [14, 3], strides = [1, 1]} : vector<16x3xf32> to vector<14x3xf32>
      %c2_24 = arith.constant 2 : index
      %c0_25 = arith.constant 0 : index
      %c0_26 = arith.constant 0 : index
      %38 = vector.load %arg2[%c2_24, %c0_25, %c0_26] : memref<9x3x10xf32, #tpu.memory_space<vmem>>, vector<1x3x10xf32>
      %39 = vector.shape_cast %38 : vector<1x3x10xf32> to vector<3x10xf32>
      %cst_27 = arith.constant dense<0.000000e+00> : vector<14x10xf32>
      %40 = tpu.matmul %37, %39, %cst_27 {dimension_numbers = #tpu.dot_dimension_numbers<[1], [0], [0], [1], [0, 0, 1, 1], [], []>} : vector<14x3xf32>, vector<3x10xf32>, vector<14x10xf32> -> vector<14x10xf32>
      %41 = arith.addf %36, %40 : vector<14x10xf32>
      %c1_i32_28 = arith.constant 1 : i32
      %42 = arith.addi %arg15, %c1_i32_28 : i32
      %c0_29 = arith.constant 0 : index
      %43 = arith.index_cast %42 : i32 to index
      %c0_30 = arith.constant 0 : index
      %c0_31 = arith.constant 0 : index
      %44 = vector.load %arg1[%c0_29, %43, %c0_30, %c0_31] : memref<1x16x16x3xf32, #tpu.memory_space<vmem>>, vector<1x1x16x3xf32>
      %45 = vector.shape_cast %44 : vector<1x1x16x3xf32> to vector<16x3xf32>
      %46 = vector.extract_strided_slice %45 {offsets = [0, 0], sizes = [14, 3], strides = [1, 1]} : vector<16x3xf32> to vector<14x3xf32>
      %c3 = arith.constant 3 : index
      %c0_32 = arith.constant 0 : index
      %c0_33 = arith.constant 0 : index
      %47 = vector.load %arg2[%c3, %c0_32, %c0_33] : memref<9x3x10xf32, #tpu.memory_space<vmem>>, vector<1x3x10xf32>
      %48 = vector.shape_cast %47 : vector<1x3x10xf32> to vector<3x10xf32>
      %cst_34 = arith.constant dense<0.000000e+00> : vector<14x10xf32>
      %49 = tpu.matmul %46, %48, %cst_34 {dimension_numbers = #tpu.dot_dimension_numbers<[1], [0], [0], [1], [0, 0, 1, 1], [], []>} : vector<14x3xf32>, vector<3x10xf32>, vector<14x10xf32> -> vector<14x10xf32>
      %50 = arith.addf %41, %49 : vector<14x10xf32>
      %51 = vector.extract_strided_slice %45 {offsets = [1, 0], sizes = [14, 3], strides = [1, 1]} : vector<16x3xf32> to vector<14x3xf32>
      %c4 = arith.constant 4 : index
      %c0_35 = arith.constant 0 : index
      %c0_36 = arith.constant 0 : index
      %52 = vector.load %arg2[%c4, %c0_35, %c0_36] : memref<9x3x10xf32, #tpu.memory_space<vmem>>, vector<1x3x10xf32>
      %53 = vector.shape_cast %52 : vector<1x3x10xf32> to vector<3x10xf32>
      %cst_37 = arith.constant dense<0.000000e+00> : vector<14x10xf32>
      %54 = tpu.matmul %51, %53, %cst_37 {dimension_numbers = #tpu.dot_dimension_numbers<[1], [0], [0], [1], [0, 0, 1, 1], [], []>} : vector<14x3xf32>, vector<3x10xf32>, vector<14x10xf32> -> vector<14x10xf32>
      %55 = arith.addf %50, %54 : vector<14x10xf32>
      %56 = vector.extract_strided_slice %45 {offsets = [2, 0], sizes = [14, 3], strides = [1, 1]} : vector<16x3xf32> to vector<14x3xf32>
      %c5 = arith.constant 5 : index
      %c0_38 = arith.constant 0 : index
      %c0_39 = arith.constant 0 : index
      %57 = vector.load %arg2[%c5, %c0_38, %c0_39] : memref<9x3x10xf32, #tpu.memory_space<vmem>>, vector<1x3x10xf32>
      %58 = vector.shape_cast %57 : vector<1x3x10xf32> to vector<3x10xf32>
      %cst_40 = arith.constant dense<0.000000e+00> : vector<14x10xf32>
      %59 = tpu.matmul %56, %58, %cst_40 {dimension_numbers = #tpu.dot_dimension_numbers<[1], [0], [0], [1], [0, 0, 1, 1], [], []>} : vector<14x3xf32>, vector<3x10xf32>, vector<14x10xf32> -> vector<14x10xf32>
      %60 = arith.addf %55, %59 : vector<14x10xf32>
      %c2_i32_41 = arith.constant 2 : i32
      %61 = arith.addi %arg15, %c2_i32_41 : i32
      %c0_42 = arith.constant 0 : index
      %62 = arith.index_cast %61 : i32 to index
      %c0_43 = arith.constant 0 : index
      %c0_44 = arith.constant 0 : index
      %63 = vector.load %arg1[%c0_42, %62, %c0_43, %c0_44] : memref<1x16x16x3xf32, #tpu.memory_space<vmem>>, vector<1x1x16x3xf32>
      %64 = vector.shape_cast %63 : vector<1x1x16x3xf32> to vector<16x3xf32>
      %65 = vector.extract_strided_slice %64 {offsets = [0, 0], sizes = [14, 3], strides = [1, 1]} : vector<16x3xf32> to vector<14x3xf32>
      %c6 = arith.constant 6 : index
      %c0_45 = arith.constant 0 : index
      %c0_46 = arith.constant 0 : index
      %66 = vector.load %arg2[%c6, %c0_45, %c0_46] : memref<9x3x10xf32, #tpu.memory_space<vmem>>, vector<1x3x10xf32>
      %67 = vector.shape_cast %66 : vector<1x3x10xf32> to vector<3x10xf32>
      %cst_47 = arith.constant dense<0.000000e+00> : vector<14x10xf32>
      %68 = tpu.matmul %65, %67, %cst_47 {dimension_numbers = #tpu.dot_dimension_numbers<[1], [0], [0], [1], [0, 0, 1, 1], [], []>} : vector<14x3xf32>, vector<3x10xf32>, vector<14x10xf32> -> vector<14x10xf32>
      %69 = arith.addf %60, %68 : vector<14x10xf32>
      %70 = vector.extract_strided_slice %64 {offsets = [1, 0], sizes = [14, 3], strides = [1, 1]} : vector<16x3xf32> to vector<14x3xf32>
      %c7 = arith.constant 7 : index
      %c0_48 = arith.constant 0 : index
      %c0_49 = arith.constant 0 : index
      %71 = vector.load %arg2[%c7, %c0_48, %c0_49] : memref<9x3x10xf32, #tpu.memory_space<vmem>>, vector<1x3x10xf32>
      %72 = vector.shape_cast %71 : vector<1x3x10xf32> to vector<3x10xf32>
      %cst_50 = arith.constant dense<0.000000e+00> : vector<14x10xf32>
      %73 = tpu.matmul %70, %72, %cst_50 {dimension_numbers = #tpu.dot_dimension_numbers<[1], [0], [0], [1], [0, 0, 1, 1], [], []>} : vector<14x3xf32>, vector<3x10xf32>, vector<14x10xf32> -> vector<14x10xf32>
      %74 = arith.addf %69, %73 : vector<14x10xf32>
      %75 = vector.extract_strided_slice %64 {offsets = [2, 0], sizes = [14, 3], strides = [1, 1]} : vector<16x3xf32> to vector<14x3xf32>
      %c8 = arith.constant 8 : index
      %c0_51 = arith.constant 0 : index
      %c0_52 = arith.constant 0 : index
      %76 = vector.load %arg2[%c8, %c0_51, %c0_52] : memref<9x3x10xf32, #tpu.memory_space<vmem>>, vector<1x3x10xf32>
      %77 = vector.shape_cast %76 : vector<1x3x10xf32> to vector<3x10xf32>
      %cst_53 = arith.constant dense<0.000000e+00> : vector<14x10xf32>
      %78 = tpu.matmul %75, %77, %cst_53 {dimension_numbers = #tpu.dot_dimension_numbers<[1], [0], [0], [1], [0, 0, 1, 1], [], []>} : vector<14x3xf32>, vector<3x10xf32>, vector<14x10xf32> -> vector<14x10xf32>
      %79 = arith.addf %74, %78 : vector<14x10xf32>
      %c0_54 = arith.constant 0 : index
      %c0_55 = arith.constant 0 : index
      %80 = vector.load %arg3[%c0_54, %c0_55] : memref<1x10xf32, #tpu.memory_space<vmem>>, vector<1x10xf32>
      %81 = vector.broadcast %80 : vector<1x10xf32> to vector<14x10xf32>
      %82 = arith.addf %79, %81 : vector<14x10xf32>
      %cst_56 = arith.constant 0.000000e+00 : f32
      %83 = vector.broadcast %cst_56 : f32 to vector<14x10xf32>
      %84 = arith.cmpf ogt, %82, %83 : vector<14x10xf32>
      %85 = vector.broadcast %0 : f32 to vector<14x10xf32>
      %86 = arith.mulf %85, %82 : vector<14x10xf32>
      %87 = arith.select %84, %82, %86 : vector<14x10xi1>, vector<14x10xf32>
      %88 = arith.index_cast %arg15 : i32 to index
      %c0_57 = arith.constant 0 : index
      %c0_58 = arith.constant 0 : index
      %89 = vector.load %arg12[%88, %c0_57, %c0_58] : memref<14x14x10xf32, #tpu.memory_space<vmem>>, vector<1x14x10xf32>
      %90 = vector.shape_cast %89 : vector<1x14x10xf32> to vector<14x10xf32>
      %91 = vector.shape_cast %87 : vector<14x10xf32> to vector<1x14x10xf32>
      tpu.vector_store %arg12[%88, %c0_57, %c0_58], %91 {strides = array<i32>} : memref<14x14x10xf32, #tpu.memory_space<vmem>>, vector<1x14x10xf32>,
    }
    %c14_i32_0 = arith.constant 14 : i32
    %4 = tpu.iota {dimensions = array<i32: 0>} : vector<7x14xi32>
    %5 = tpu.iota {dimensions = array<i32: 1>} : vector<7x14xi32>
    %c2_i32 = arith.constant 2 : i32
    %6 = vector.broadcast %c2_i32 : i32 to vector<7x14xi32>
    %7 = arith.muli %6, %4 : vector<7x14xi32>
    %8 = arith.cmpi eq, %5, %7 : vector<7x14xi32>
    %9 = arith.extui %8 : vector<7x14xi1> to vector<7x14xi32>
    %10 = arith.sitofp %9 : vector<7x14xi32> to vector<7x14xf32>
    %c2_i32_1 = arith.constant 2 : i32
    %11 = vector.broadcast %c2_i32_1 : i32 to vector<7x14xi32>
    %12 = arith.muli %11, %4 : vector<7x14xi32>
    %c1_i32_2 = arith.constant 1 : i32
    %13 = vector.broadcast %c1_i32_2 : i32 to vector<7x14xi32>
    %14 = arith.addi %12, %13 : vector<7x14xi32>
    %15 = arith.cmpi eq, %5, %14 : vector<7x14xi32>
    %16 = arith.extui %15 : vector<7x14xi1> to vector<7x14xi32>
    %17 = arith.sitofp %16 : vector<7x14xi32> to vector<7x14xf32>
    %c0_i32_3 = arith.constant 0 : i32
    %c7_i32 = arith.constant 7 : i32
    %18 = arith.addi %c0_i32_3, %c7_i32 : i32
    %c1_i32_4 = arith.constant 1 : i32
    scf.for %arg15 = %c0_i32_3 to %18 step %c1_i32_4  : i32 {
      %c2_i32_12 = arith.constant 2 : i32
      %22 = arith.muli %c2_i32_12, %arg15 : i32
      %23 = arith.index_cast %22 : i32 to index
      %c0_13 = arith.constant 0 : index
      %c0_14 = arith.constant 0 : index
      %24 = vector.load %arg12[%23, %c0_13, %c0_14] : memref<14x14x10xf32, #tpu.memory_space<vmem>>, vector<1x14x10xf32>
      %25 = vector.shape_cast %24 : vector<1x14x10xf32> to vector<14x10xf32>
      %c2_i32_15 = arith.constant 2 : i32
      %26 = arith.muli %c2_i32_15, %arg15 : i32
      %c1_i32_16 = arith.constant 1 : i32
      %27 = arith.addi %26, %c1_i32_16 : i32
      %28 = arith.index_cast %27 : i32 to index
      %c0_17 = arith.constant 0 : index
      %c0_18 = arith.constant 0 : index
      %29 = vector.load %arg12[%28, %c0_17, %c0_18] : memref<14x14x10xf32, #tpu.memory_space<vmem>>, vector<1x14x10xf32>
      %30 = vector.shape_cast %29 : vector<1x14x10xf32> to vector<14x10xf32>
      %31 = arith.maximumf %25, %30 : vector<14x10xf32>
      %cst = arith.constant dense<0.000000e+00> : vector<7x10xf32>
      %32 = tpu.matmul %10, %31, %cst {dimension_numbers = #tpu.dot_dimension_numbers<[1], [0], [0], [1], [0, 0, 1, 1], [], []>} : vector<7x14xf32>, vector<14x10xf32>, vector<7x10xf32> -> vector<7x10xf32>
      %cst_19 = arith.constant dense<0.000000e+00> : vector<7x10xf32>
      %33 = tpu.matmul %17, %31, %cst_19 {dimension_numbers = #tpu.dot_dimension_numbers<[1], [0], [0], [1], [0, 0, 1, 1], [], []>} : vector<7x14xf32>, vector<14x10xf32>, vector<7x10xf32> -> vector<7x10xf32>
      %34 = arith.maximumf %32, %33 : vector<7x10xf32>
      %35 = arith.index_cast %arg15 : i32 to index
      %c0_20 = arith.constant 0 : index
      %c0_21 = arith.constant 0 : index
      %36 = vector.load %arg13[%35, %c0_20, %c0_21] : memref<7x7x10xf32, #tpu.memory_space<vmem>>, vector<1x7x10xf32>
      %37 = vector.shape_cast %36 : vector<1x7x10xf32> to vector<7x10xf32>
      %38 = vector.shape_cast %34 : vector<7x10xf32> to vector<1x7x10xf32>
      tpu.vector_store %arg13[%35, %c0_20, %c0_21], %38 {strides = array<i32>} : memref<7x7x10xf32, #tpu.memory_space<vmem>>, vector<1x7x10xf32>,
    }
    %c7_i32_5 = arith.constant 7 : i32
    %c0_i32_6 = arith.constant 0 : i32
    %c5_i32 = arith.constant 5 : i32
    %19 = arith.addi %c0_i32_6, %c5_i32 : i32
    %c1_i32_7 = arith.constant 1 : i32
    scf.for %arg15 = %c0_i32_6 to %19 step %c1_i32_7  : i32 {
      %cst = arith.constant 0.000000e+00 : f32
      %22 = vector.broadcast %cst : f32 to vector<5x16xf32>
      %c0_i32_12 = arith.constant 0 : i32
      %23 = arith.addi %arg15, %c0_i32_12 : i32
      %24 = arith.index_cast %23 : i32 to index
      %c0_13 = arith.constant 0 : index
      %c0_14 = arith.constant 0 : index
      %25 = vector.load %arg13[%24, %c0_13, %c0_14] : memref<7x7x10xf32, #tpu.memory_space<vmem>>, vector<1x7x10xf32>
      %26 = vector.shape_cast %25 : vector<1x7x10xf32> to vector<7x10xf32>
      %27 = vector.extract_strided_slice %26 {offsets = [0, 0], sizes = [5, 10], strides = [1, 1]} : vector<7x10xf32> to vector<5x10xf32>
      %c0_15 = arith.constant 0 : index
      %c0_16 = arith.constant 0 : index
      %c0_17 = arith.constant 0 : index
      %28 = vector.load %arg4[%c0_15, %c0_16, %c0_17] : memref<9x10x16xf32, #tpu.memory_space<vmem>>, vector<1x10x16xf32>
      %29 = vector.shape_cast %28 : vector<1x10x16xf32> to vector<10x16xf32>
      %cst_18 = arith.constant dense<0.000000e+00> : vector<5x16xf32>
      %30 = tpu.matmul %27, %29, %cst_18 {dimension_numbers = #tpu.dot_dimension_numbers<[1], [0], [0], [1], [0, 0, 1, 1], [], []>} : vector<5x10xf32>, vector<10x16xf32>, vector<5x16xf32> -> vector<5x16xf32>
      %31 = arith.addf %22, %30 : vector<5x16xf32>
      %32 = vector.extract_strided_slice %26 {offsets = [1, 0], sizes = [5, 10], strides = [1, 1]} : vector<7x10xf32> to vector<5x10xf32>
      %c1_19 = arith.constant 1 : index
      %c0_20 = arith.constant 0 : index
      %c0_21 = arith.constant 0 : index
      %33 = vector.load %arg4[%c1_19, %c0_20, %c0_21] : memref<9x10x16xf32, #tpu.memory_space<vmem>>, vector<1x10x16xf32>
      %34 = vector.shape_cast %33 : vector<1x10x16xf32> to vector<10x16xf32>
      %cst_22 = arith.constant dense<0.000000e+00> : vector<5x16xf32>
      %35 = tpu.matmul %32, %34, %cst_22 {dimension_numbers = #tpu.dot_dimension_numbers<[1], [0], [0], [1], [0, 0, 1, 1], [], []>} : vector<5x10xf32>, vector<10x16xf32>, vector<5x16xf32> -> vector<5x16xf32>
      %36 = arith.addf %31, %35 : vector<5x16xf32>
      %37 = vector.extract_strided_slice %26 {offsets = [2, 0], sizes = [5, 10], strides = [1, 1]} : vector<7x10xf32> to vector<5x10xf32>
      %c2_23 = arith.constant 2 : index
      %c0_24 = arith.constant 0 : index
      %c0_25 = arith.constant 0 : index
      %38 = vector.load %arg4[%c2_23, %c0_24, %c0_25] : memref<9x10x16xf32, #tpu.memory_space<vmem>>, vector<1x10x16xf32>
      %39 = vector.shape_cast %38 : vector<1x10x16xf32> to vector<10x16xf32>
      %cst_26 = arith.constant dense<0.000000e+00> : vector<5x16xf32>
      %40 = tpu.matmul %37, %39, %cst_26 {dimension_numbers = #tpu.dot_dimension_numbers<[1], [0], [0], [1], [0, 0, 1, 1], [], []>} : vector<5x10xf32>, vector<10x16xf32>, vector<5x16xf32> -> vector<5x16xf32>
      %41 = arith.addf %36, %40 : vector<5x16xf32>
      %c1_i32_27 = arith.constant 1 : i32
      %42 = arith.addi %arg15, %c1_i32_27 : i32
      %43 = arith.index_cast %42 : i32 to index
      %c0_28 = arith.constant 0 : index
      %c0_29 = arith.constant 0 : index
      %44 = vector.load %arg13[%43, %c0_28, %c0_29] : memref<7x7x10xf32, #tpu.memory_space<vmem>>, vector<1x7x10xf32>
      %45 = vector.shape_cast %44 : vector<1x7x10xf32> to vector<7x10xf32>
      %46 = vector.extract_strided_slice %45 {offsets = [0, 0], sizes = [5, 10], strides = [1, 1]} : vector<7x10xf32> to vector<5x10xf32>
      %c3 = arith.constant 3 : index
      %c0_30 = arith.constant 0 : index
      %c0_31 = arith.constant 0 : index
      %47 = vector.load %arg4[%c3, %c0_30, %c0_31] : memref<9x10x16xf32, #tpu.memory_space<vmem>>, vector<1x10x16xf32>
      %48 = vector.shape_cast %47 : vector<1x10x16xf32> to vector<10x16xf32>
      %cst_32 = arith.constant dense<0.000000e+00> : vector<5x16xf32>
      %49 = tpu.matmul %46, %48, %cst_32 {dimension_numbers = #tpu.dot_dimension_numbers<[1], [0], [0], [1], [0, 0, 1, 1], [], []>} : vector<5x10xf32>, vector<10x16xf32>, vector<5x16xf32> -> vector<5x16xf32>
      %50 = arith.addf %41, %49 : vector<5x16xf32>
      %51 = vector.extract_strided_slice %45 {offsets = [1, 0], sizes = [5, 10], strides = [1, 1]} : vector<7x10xf32> to vector<5x10xf32>
      %c4 = arith.constant 4 : index
      %c0_33 = arith.constant 0 : index
      %c0_34 = arith.constant 0 : index
      %52 = vector.load %arg4[%c4, %c0_33, %c0_34] : memref<9x10x16xf32, #tpu.memory_space<vmem>>, vector<1x10x16xf32>
      %53 = vector.shape_cast %52 : vector<1x10x16xf32> to vector<10x16xf32>
      %cst_35 = arith.constant dense<0.000000e+00> : vector<5x16xf32>
      %54 = tpu.matmul %51, %53, %cst_35 {dimension_numbers = #tpu.dot_dimension_numbers<[1], [0], [0], [1], [0, 0, 1, 1], [], []>} : vector<5x10xf32>, vector<10x16xf32>, vector<5x16xf32> -> vector<5x16xf32>
      %55 = arith.addf %50, %54 : vector<5x16xf32>
      %56 = vector.extract_strided_slice %45 {offsets = [2, 0], sizes = [5, 10], strides = [1, 1]} : vector<7x10xf32> to vector<5x10xf32>
      %c5 = arith.constant 5 : index
      %c0_36 = arith.constant 0 : index
      %c0_37 = arith.constant 0 : index
      %57 = vector.load %arg4[%c5, %c0_36, %c0_37] : memref<9x10x16xf32, #tpu.memory_space<vmem>>, vector<1x10x16xf32>
      %58 = vector.shape_cast %57 : vector<1x10x16xf32> to vector<10x16xf32>
      %cst_38 = arith.constant dense<0.000000e+00> : vector<5x16xf32>
      %59 = tpu.matmul %56, %58, %cst_38 {dimension_numbers = #tpu.dot_dimension_numbers<[1], [0], [0], [1], [0, 0, 1, 1], [], []>} : vector<5x10xf32>, vector<10x16xf32>, vector<5x16xf32> -> vector<5x16xf32>
      %60 = arith.addf %55, %59 : vector<5x16xf32>
      %c2_i32_39 = arith.constant 2 : i32
      %61 = arith.addi %arg15, %c2_i32_39 : i32
      %62 = arith.index_cast %61 : i32 to index
      %c0_40 = arith.constant 0 : index
      %c0_41 = arith.constant 0 : index
      %63 = vector.load %arg13[%62, %c0_40, %c0_41] : memref<7x7x10xf32, #tpu.memory_space<vmem>>, vector<1x7x10xf32>
      %64 = vector.shape_cast %63 : vector<1x7x10xf32> to vector<7x10xf32>
      %65 = vector.extract_strided_slice %64 {offsets = [0, 0], sizes = [5, 10], strides = [1, 1]} : vector<7x10xf32> to vector<5x10xf32>
      %c6 = arith.constant 6 : index
      %c0_42 = arith.constant 0 : index
      %c0_43 = arith.constant 0 : index
      %66 = vector.load %arg4[%c6, %c0_42, %c0_43] : memref<9x10x16xf32, #tpu.memory_space<vmem>>, vector<1x10x16xf32>
      %67 = vector.shape_cast %66 : vector<1x10x16xf32> to vector<10x16xf32>
      %cst_44 = arith.constant dense<0.000000e+00> : vector<5x16xf32>
      %68 = tpu.matmul %65, %67, %cst_44 {dimension_numbers = #tpu.dot_dimension_numbers<[1], [0], [0], [1], [0, 0, 1, 1], [], []>} : vector<5x10xf32>, vector<10x16xf32>, vector<5x16xf32> -> vector<5x16xf32>
      %69 = arith.addf %60, %68 : vector<5x16xf32>
      %70 = vector.extract_strided_slice %64 {offsets = [1, 0], sizes = [5, 10], strides = [1, 1]} : vector<7x10xf32> to vector<5x10xf32>
      %c7 = arith.constant 7 : index
      %c0_45 = arith.constant 0 : index
      %c0_46 = arith.constant 0 : index
      %71 = vector.load %arg4[%c7, %c0_45, %c0_46] : memref<9x10x16xf32, #tpu.memory_space<vmem>>, vector<1x10x16xf32>
      %72 = vector.shape_cast %71 : vector<1x10x16xf32> to vector<10x16xf32>
      %cst_47 = arith.constant dense<0.000000e+00> : vector<5x16xf32>
      %73 = tpu.matmul %70, %72, %cst_47 {dimension_numbers = #tpu.dot_dimension_numbers<[1], [0], [0], [1], [0, 0, 1, 1], [], []>} : vector<5x10xf32>, vector<10x16xf32>, vector<5x16xf32> -> vector<5x16xf32>
      %74 = arith.addf %69, %73 : vector<5x16xf32>
      %75 = vector.extract_strided_slice %64 {offsets = [2, 0], sizes = [5, 10], strides = [1, 1]} : vector<7x10xf32> to vector<5x10xf32>
      %c8 = arith.constant 8 : index
      %c0_48 = arith.constant 0 : index
      %c0_49 = arith.constant 0 : index
      %76 = vector.load %arg4[%c8, %c0_48, %c0_49] : memref<9x10x16xf32, #tpu.memory_space<vmem>>, vector<1x10x16xf32>
      %77 = vector.shape_cast %76 : vector<1x10x16xf32> to vector<10x16xf32>
      %cst_50 = arith.constant dense<0.000000e+00> : vector<5x16xf32>
      %78 = tpu.matmul %75, %77, %cst_50 {dimension_numbers = #tpu.dot_dimension_numbers<[1], [0], [0], [1], [0, 0, 1, 1], [], []>} : vector<5x10xf32>, vector<10x16xf32>, vector<5x16xf32> -> vector<5x16xf32>
      %79 = arith.addf %74, %78 : vector<5x16xf32>
      %c0_51 = arith.constant 0 : index
      %c0_52 = arith.constant 0 : index
      %80 = vector.load %arg5[%c0_51, %c0_52] : memref<1x16xf32, #tpu.memory_space<vmem>>, vector<1x16xf32>
      %81 = vector.broadcast %80 : vector<1x16xf32> to vector<5x16xf32>
      %82 = arith.addf %79, %81 : vector<5x16xf32>
      %cst_53 = arith.constant 0.000000e+00 : f32
      %83 = vector.broadcast %cst_53 : f32 to vector<5x16xf32>
      %84 = arith.cmpf ogt, %82, %83 : vector<5x16xf32>
      %85 = vector.broadcast %1 : f32 to vector<5x16xf32>
      %86 = arith.mulf %85, %82 : vector<5x16xf32>
      %87 = arith.select %84, %82, %86 : vector<5x16xi1>, vector<5x16xf32>
      %88 = arith.index_cast %arg15 : i32 to index
      %c0_54 = arith.constant 0 : index
      %c0_55 = arith.constant 0 : index
      %89 = vector.load %arg14[%88, %c0_54, %c0_55] : memref<5x5x16xf32, #tpu.memory_space<vmem>>, vector<1x5x16xf32>
      %90 = vector.shape_cast %89 : vector<1x5x16xf32> to vector<5x16xf32>
      %91 = vector.shape_cast %87 : vector<5x16xf32> to vector<1x5x16xf32>
      tpu.vector_store %arg14[%88, %c0_54, %c0_55], %91 {strides = array<i32>} : memref<5x5x16xf32, #tpu.memory_space<vmem>>, vector<1x5x16xf32>,
    }
    %c5_i32_8 = arith.constant 5 : i32
    %20 = tpu.iota {dimensions = array<i32: 1>} : vector<3x8xi32>
    %c0_i32_9 = arith.constant 0 : i32
    %c3_i32 = arith.constant 3 : i32
    %21 = arith.addi %c0_i32_9, %c3_i32 : i32
    %c1_i32_10 = arith.constant 1 : i32
    scf.for %arg15 = %c0_i32_9 to %21 step %c1_i32_10  : i32 {
      %cst = arith.constant 0.000000e+00 : f32
      %22 = vector.broadcast %cst : f32 to vector<3x32xf32>
      %c0_i32_12 = arith.constant 0 : i32
      %23 = arith.addi %arg15, %c0_i32_12 : i32
      %24 = arith.index_cast %23 : i32 to index
      %c0_13 = arith.constant 0 : index
      %c0_14 = arith.constant 0 : index
      %25 = vector.load %arg14[%24, %c0_13, %c0_14] : memref<5x5x16xf32, #tpu.memory_space<vmem>>, vector<1x5x16xf32>
      %26 = vector.shape_cast %25 : vector<1x5x16xf32> to vector<5x16xf32>
      %27 = vector.extract_strided_slice %26 {offsets = [0, 0], sizes = [3, 16], strides = [1, 1]} : vector<5x16xf32> to vector<3x16xf32>
      %c0_15 = arith.constant 0 : index
      %c0_16 = arith.constant 0 : index
      %c0_17 = arith.constant 0 : index
      %28 = vector.load %arg6[%c0_15, %c0_16, %c0_17] : memref<9x16x32xf32, #tpu.memory_space<vmem>>, vector<1x16x32xf32>
      %29 = vector.shape_cast %28 : vector<1x16x32xf32> to vector<16x32xf32>
      %cst_18 = arith.constant dense<0.000000e+00> : vector<3x32xf32>
      %30 = tpu.matmul %27, %29, %cst_18 {dimension_numbers = #tpu.dot_dimension_numbers<[1], [0], [0], [1], [0, 0, 1, 1], [], []>} : vector<3x16xf32>, vector<16x32xf32>, vector<3x32xf32> -> vector<3x32xf32>
      %31 = arith.addf %22, %30 : vector<3x32xf32>
      %32 = vector.extract_strided_slice %26 {offsets = [1, 0], sizes = [3, 16], strides = [1, 1]} : vector<5x16xf32> to vector<3x16xf32>
      %c1_19 = arith.constant 1 : index
      %c0_20 = arith.constant 0 : index
      %c0_21 = arith.constant 0 : index
      %33 = vector.load %arg6[%c1_19, %c0_20, %c0_21] : memref<9x16x32xf32, #tpu.memory_space<vmem>>, vector<1x16x32xf32>
      %34 = vector.shape_cast %33 : vector<1x16x32xf32> to vector<16x32xf32>
      %cst_22 = arith.constant dense<0.000000e+00> : vector<3x32xf32>
      %35 = tpu.matmul %32, %34, %cst_22 {dimension_numbers = #tpu.dot_dimension_numbers<[1], [0], [0], [1], [0, 0, 1, 1], [], []>} : vector<3x16xf32>, vector<16x32xf32>, vector<3x32xf32> -> vector<3x32xf32>
      %36 = arith.addf %31, %35 : vector<3x32xf32>
      %37 = vector.extract_strided_slice %26 {offsets = [2, 0], sizes = [3, 16], strides = [1, 1]} : vector<5x16xf32> to vector<3x16xf32>
      %c2_23 = arith.constant 2 : index
      %c0_24 = arith.constant 0 : index
      %c0_25 = arith.constant 0 : index
      %38 = vector.load %arg6[%c2_23, %c0_24, %c0_25] : memref<9x16x32xf32, #tpu.memory_space<vmem>>, vector<1x16x32xf32>
      %39 = vector.shape_cast %38 : vector<1x16x32xf32> to vector<16x32xf32>
      %cst_26 = arith.constant dense<0.000000e+00> : vector<3x32xf32>
      %40 = tpu.matmul %37, %39, %cst_26 {dimension_numbers = #tpu.dot_dimension_numbers<[1], [0], [0], [1], [0, 0, 1, 1], [], []>} : vector<3x16xf32>, vector<16x32xf32>, vector<3x32xf32> -> vector<3x32xf32>
      %41 = arith.addf %36, %40 : vector<3x32xf32>
      %c1_i32_27 = arith.constant 1 : i32
      %42 = arith.addi %arg15, %c1_i32_27 : i32
      %43 = arith.index_cast %42 : i32 to index
      %c0_28 = arith.constant 0 : index
      %c0_29 = arith.constant 0 : index
      %44 = vector.load %arg14[%43, %c0_28, %c0_29] : memref<5x5x16xf32, #tpu.memory_space<vmem>>, vector<1x5x16xf32>
      %45 = vector.shape_cast %44 : vector<1x5x16xf32> to vector<5x16xf32>
      %46 = vector.extract_strided_slice %45 {offsets = [0, 0], sizes = [3, 16], strides = [1, 1]} : vector<5x16xf32> to vector<3x16xf32>
      %c3 = arith.constant 3 : index
      %c0_30 = arith.constant 0 : index
      %c0_31 = arith.constant 0 : index
      %47 = vector.load %arg6[%c3, %c0_30, %c0_31] : memref<9x16x32xf32, #tpu.memory_space<vmem>>, vector<1x16x32xf32>
      %48 = vector.shape_cast %47 : vector<1x16x32xf32> to vector<16x32xf32>
      %cst_32 = arith.constant dense<0.000000e+00> : vector<3x32xf32>
      %49 = tpu.matmul %46, %48, %cst_32 {dimension_numbers = #tpu.dot_dimension_numbers<[1], [0], [0], [1], [0, 0, 1, 1], [], []>} : vector<3x16xf32>, vector<16x32xf32>, vector<3x32xf32> -> vector<3x32xf32>
      %50 = arith.addf %41, %49 : vector<3x32xf32>
      %51 = vector.extract_strided_slice %45 {offsets = [1, 0], sizes = [3, 16], strides = [1, 1]} : vector<5x16xf32> to vector<3x16xf32>
      %c4 = arith.constant 4 : index
      %c0_33 = arith.constant 0 : index
      %c0_34 = arith.constant 0 : index
      %52 = vector.load %arg6[%c4, %c0_33, %c0_34] : memref<9x16x32xf32, #tpu.memory_space<vmem>>, vector<1x16x32xf32>
      %53 = vector.shape_cast %52 : vector<1x16x32xf32> to vector<16x32xf32>
      %cst_35 = arith.constant dense<0.000000e+00> : vector<3x32xf32>
      %54 = tpu.matmul %51, %53, %cst_35 {dimension_numbers = #tpu.dot_dimension_numbers<[1], [0], [0], [1], [0, 0, 1, 1], [], []>} : vector<3x16xf32>, vector<16x32xf32>, vector<3x32xf32> -> vector<3x32xf32>
      %55 = arith.addf %50, %54 : vector<3x32xf32>
      %56 = vector.extract_strided_slice %45 {offsets = [2, 0], sizes = [3, 16], strides = [1, 1]} : vector<5x16xf32> to vector<3x16xf32>
      %c5 = arith.constant 5 : index
      %c0_36 = arith.constant 0 : index
      %c0_37 = arith.constant 0 : index
      %57 = vector.load %arg6[%c5, %c0_36, %c0_37] : memref<9x16x32xf32, #tpu.memory_space<vmem>>, vector<1x16x32xf32>
      %58 = vector.shape_cast %57 : vector<1x16x32xf32> to vector<16x32xf32>
      %cst_38 = arith.constant dense<0.000000e+00> : vector<3x32xf32>
      %59 = tpu.matmul %56, %58, %cst_38 {dimension_numbers = #tpu.dot_dimension_numbers<[1], [0], [0], [1], [0, 0, 1, 1], [], []>} : vector<3x16xf32>, vector<16x32xf32>, vector<3x32xf32> -> vector<3x32xf32>
      %60 = arith.addf %55, %59 : vector<3x32xf32>
      %c2_i32_39 = arith.constant 2 : i32
      %61 = arith.addi %arg15, %c2_i32_39 : i32
      %62 = arith.index_cast %61 : i32 to index
      %c0_40 = arith.constant 0 : index
      %c0_41 = arith.constant 0 : index
      %63 = vector.load %arg14[%62, %c0_40, %c0_41] : memref<5x5x16xf32, #tpu.memory_space<vmem>>, vector<1x5x16xf32>
      %64 = vector.shape_cast %63 : vector<1x5x16xf32> to vector<5x16xf32>
      %65 = vector.extract_strided_slice %64 {offsets = [0, 0], sizes = [3, 16], strides = [1, 1]} : vector<5x16xf32> to vector<3x16xf32>
      %c6 = arith.constant 6 : index
      %c0_42 = arith.constant 0 : index
      %c0_43 = arith.constant 0 : index
      %66 = vector.load %arg6[%c6, %c0_42, %c0_43] : memref<9x16x32xf32, #tpu.memory_space<vmem>>, vector<1x16x32xf32>
      %67 = vector.shape_cast %66 : vector<1x16x32xf32> to vector<16x32xf32>
      %cst_44 = arith.constant dense<0.000000e+00> : vector<3x32xf32>
      %68 = tpu.matmul %65, %67, %cst_44 {dimension_numbers = #tpu.dot_dimension_numbers<[1], [0], [0], [1], [0, 0, 1, 1], [], []>} : vector<3x16xf32>, vector<16x32xf32>, vector<3x32xf32> -> vector<3x32xf32>
      %69 = arith.addf %60, %68 : vector<3x32xf32>
      %70 = vector.extract_strided_slice %64 {offsets = [1, 0], sizes = [3, 16], strides = [1, 1]} : vector<5x16xf32> to vector<3x16xf32>
      %c7 = arith.constant 7 : index
      %c0_45 = arith.constant 0 : index
      %c0_46 = arith.constant 0 : index
      %71 = vector.load %arg6[%c7, %c0_45, %c0_46] : memref<9x16x32xf32, #tpu.memory_space<vmem>>, vector<1x16x32xf32>
      %72 = vector.shape_cast %71 : vector<1x16x32xf32> to vector<16x32xf32>
      %cst_47 = arith.constant dense<0.000000e+00> : vector<3x32xf32>
      %73 = tpu.matmul %70, %72, %cst_47 {dimension_numbers = #tpu.dot_dimension_numbers<[1], [0], [0], [1], [0, 0, 1, 1], [], []>} : vector<3x16xf32>, vector<16x32xf32>, vector<3x32xf32> -> vector<3x32xf32>
      %74 = arith.addf %69, %73 : vector<3x32xf32>
      %75 = vector.extract_strided_slice %64 {offsets = [2, 0], sizes = [3, 16], strides = [1, 1]} : vector<5x16xf32> to vector<3x16xf32>
      %c8 = arith.constant 8 : index
      %c0_48 = arith.constant 0 : index
      %c0_49 = arith.constant 0 : index
      %76 = vector.load %arg6[%c8, %c0_48, %c0_49] : memref<9x16x32xf32, #tpu.memory_space<vmem>>, vector<1x16x32xf32>
      %77 = vector.shape_cast %76 : vector<1x16x32xf32> to vector<16x32xf32>
      %cst_50 = arith.constant dense<0.000000e+00> : vector<3x32xf32>
      %78 = tpu.matmul %75, %77, %cst_50 {dimension_numbers = #tpu.dot_dimension_numbers<[1], [0], [0], [1], [0, 0, 1, 1], [], []>} : vector<3x16xf32>, vector<16x32xf32>, vector<3x32xf32> -> vector<3x32xf32>
      %79 = arith.addf %74, %78 : vector<3x32xf32>
      %c0_51 = arith.constant 0 : index
      %c0_52 = arith.constant 0 : index
      %80 = vector.load %arg7[%c0_51, %c0_52] : memref<1x32xf32, #tpu.memory_space<vmem>>, vector<1x32xf32>
      %81 = vector.broadcast %80 : vector<1x32xf32> to vector<3x32xf32>
      %82 = arith.addf %79, %81 : vector<3x32xf32>
      %cst_53 = arith.constant 0.000000e+00 : f32
      %83 = vector.broadcast %cst_53 : f32 to vector<3x32xf32>
      %84 = arith.cmpf ogt, %82, %83 : vector<3x32xf32>
      %85 = vector.broadcast %2 : f32 to vector<3x32xf32>
      %86 = arith.mulf %85, %82 : vector<3x32xf32>
      %87 = arith.select %84, %82, %86 : vector<3x32xi1>, vector<3x32xf32>
      %c0_54 = arith.constant 0 : index
      %c0_55 = arith.constant 0 : index
      %88 = vector.load %arg8[%c0_54, %c0_55] : memref<32x8xf32, #tpu.memory_space<vmem>>, vector<32x8xf32>
      %cst_56 = arith.constant dense<0.000000e+00> : vector<3x8xf32>
      %89 = tpu.matmul %87, %88, %cst_56 {dimension_numbers = #tpu.dot_dimension_numbers<[1], [0], [0], [1], [0, 0, 1, 1], [], []>} : vector<3x32xf32>, vector<32x8xf32>, vector<3x8xf32> -> vector<3x8xf32>
      %c0_57 = arith.constant 0 : index
      %c0_58 = arith.constant 0 : index
      %90 = vector.load %arg9[%c0_57, %c0_58] : memref<1x8xf32, #tpu.memory_space<vmem>>, vector<1x8xf32>
      %91 = vector.broadcast %90 : vector<1x8xf32> to vector<3x8xf32>
      %92 = arith.addf %89, %91 : vector<3x8xf32>
      %cst_59 = arith.constant 0.000000e+00 : f32
      %93 = vector.broadcast %cst_59 : f32 to vector<3x8xf32>
      %94 = arith.subf %93, %92 : vector<3x8xf32>
      %95 = math.exp %94 : vector<3x8xf32>
      %cst_60 = arith.constant 1.000000e+00 : f32
      %96 = vector.broadcast %cst_60 : f32 to vector<3x8xf32>
      %97 = arith.addf %96, %95 : vector<3x8xf32>
      %cst_61 = arith.constant 1.000000e+00 : f32
      %98 = vector.broadcast %cst_61 : f32 to vector<3x8xf32>
      %99 = arith.divf %98, %97 : vector<3x8xf32>
      %c0_i32_62 = arith.constant 0 : i32
      %100 = vector.broadcast %c0_i32_62 : i32 to vector<3x8xi32>
      %101 = arith.cmpi eq, %20, %100 : vector<3x8xi32>
      %102 = arith.select %101, %99, %92 : vector<3x8xi1>, vector<3x8xf32>
      %c0_63 = arith.constant 0 : index
      %103 = arith.index_cast %arg15 : i32 to index
      %c0_64 = arith.constant 0 : index
      %c0_65 = arith.constant 0 : index
      %104 = vector.load %arg11[%c0_63, %103, %c0_64, %c0_65] : memref<1x3x3x8xf32, #tpu.memory_space<vmem>>, vector<1x1x3x8xf32>
      %105 = vector.shape_cast %104 : vector<1x1x3x8xf32> to vector<3x8xf32>
      %106 = vector.shape_cast %102 : vector<3x8xf32> to vector<1x1x3x8xf32>
      tpu.vector_store %arg11[%c0_63, %103, %c0_64, %c0_65], %106 {strides = array<i32>} : memref<1x3x3x8xf32, #tpu.memory_space<vmem>>, vector<1x1x3x8xf32>,
    }
    %c3_i32_11 = arith.constant 3 : i32
    return
  }
  func.func @transform_0(%arg0: i32) -> (i32, i32, i32, i32) {
    %c0_i32 = arith.constant 0 : i32
    %c0_i32_0 = arith.constant 0 : i32
    %c0_i32_1 = arith.constant 0 : i32
    %c0_i32_2 = arith.constant 0 : i32
    return %arg0, %c0_i32, %c0_i32_0, %c0_i32_1 : i32, i32, i32, i32
  }
  func.func @transform_1(%arg0: i32) -> (i32, i32, i32) {
    %c0_i32 = arith.constant 0 : i32
    %c0_i32_0 = arith.constant 0 : i32
    %c0_i32_1 = arith.constant 0 : i32
    %c0_i32_2 = arith.constant 0 : i32
    return %c0_i32, %c0_i32_0, %c0_i32_1 : i32, i32, i32
  }
  func.func @transform_2(%arg0: i32) -> (i32, i32) {
    %c0_i32 = arith.constant 0 : i32
    %c0_i32_0 = arith.constant 0 : i32
    %c0_i32_1 = arith.constant 0 : i32
    return %c0_i32, %c0_i32_0 : i32, i32
  }
  func.func @transform_3(%arg0: i32) -> (i32, i32, i32) {
    %c0_i32 = arith.constant 0 : i32
    %c0_i32_0 = arith.constant 0 : i32
    %c0_i32_1 = arith.constant 0 : i32
    %c0_i32_2 = arith.constant 0 : i32
    return %c0_i32, %c0_i32_0, %c0_i32_1 : i32, i32, i32
  }
  func.func @transform_4(%arg0: i32) -> (i32, i32) {
    %c0_i32 = arith.constant 0 : i32
    %c0_i32_0 = arith.constant 0 : i32
    %c0_i32_1 = arith.constant 0 : i32
    return %c0_i32, %c0_i32_0 : i32, i32
  }
  func.func @transform_5(%arg0: i32) -> (i32, i32, i32) {
    %c0_i32 = arith.constant 0 : i32
    %c0_i32_0 = arith.constant 0 : i32
    %c0_i32_1 = arith.constant 0 : i32
    %c0_i32_2 = arith.constant 0 : i32
    return %c0_i32, %c0_i32_0, %c0_i32_1 : i32, i32, i32
  }
  func.func @transform_6(%arg0: i32) -> (i32, i32) {
    %c0_i32 = arith.constant 0 : i32
    %c0_i32_0 = arith.constant 0 : i32
    %c0_i32_1 = arith.constant 0 : i32
    return %c0_i32, %c0_i32_0 : i32, i32
  }
  func.func @transform_7(%arg0: i32) -> (i32, i32) {
    %c0_i32 = arith.constant 0 : i32
    %c0_i32_0 = arith.constant 0 : i32
    %c0_i32_1 = arith.constant 0 : i32
    return %c0_i32, %c0_i32_0 : i32, i32
  }
  func.func @transform_8(%arg0: i32) -> (i32, i32) {
    %c0_i32 = arith.constant 0 : i32
    %c0_i32_0 = arith.constant 0 : i32
    %c0_i32_1 = arith.constant 0 : i32
    return %c0_i32, %c0_i32_0 : i32, i32
  }
  func.func @transform_9(%arg0: i32) -> i32 {
    %c0_i32 = arith.constant 0 : i32
    %c0_i32_0 = arith.constant 0 : i32
    return %c0_i32 : i32
  }
  func.func @transform_10(%arg0: i32) -> (i32, i32, i32, i32) {
    %c0_i32 = arith.constant 0 : i32
    %c0_i32_0 = arith.constant 0 : i32
    %c0_i32_1 = arith.constant 0 : i32
    %c0_i32_2 = arith.constant 0 : i32
    return %arg0, %c0_i32, %c0_i32_0, %c0_i32_1 : i32, i32, i32, i32
  }
}

</mosaic_0001>

<llo_original>
// kernel: pnet_forward.1
$region0: #{pnet_forward.1}
  #allocation0 [shape = 'u32[]', space=smem, size = 0x4, offset = 0x4, fixed_abs, tag = 'smem constant byte address 0x4 - core index']
  #allocation1 [shape = 'u32[144,128]{1,0:T(1,128)}', space=vmem, size = 0x12000, scoped, tag = 'internal scratch']
  #allocation2 [shape = 'f32[14,14,10]{2,1,0:T(8,128)}', space=vmem, size = 0x1c000, scoped, tag = 'scratch operand']
  #allocation3 [shape = 'f32[7,7,10]{2,1,0:T(8,128)}', space=vmem, size = 0x7000, scoped, tag = 'scratch operand']
  #allocation4 [shape = 'f32[5,5,16]{2,1,0:T(8,128)}', space=vmem, size = 0x5000, scoped, tag = 'scratch operand']
  %s0 = inlined_call_operand.vmem [shape: f32[2,16,16,3], index: 0, kind: input, shape index: {}]
  %s1 = inlined_call_operand.vmem [shape: f32[9,3,10], index: 1, kind: input, shape index: {}]
  %s2 = inlined_call_operand.vmem [shape: f32[1,10], index: 2, kind: input, shape index: {}]
  %s3 = inlined_call_operand.vmem [shape: f32[9,10,16], index: 3, kind: input, shape index: {}]
  %s4 = inlined_call_operand.vmem [shape: f32[1,16], index: 4, kind: input, shape index: {}]
  %s5 = inlined_call_operand.vmem [shape: f32[9,16,32], index: 5, kind: input, shape index: {}]
  %s6 = inlined_call_operand.vmem [shape: f32[1,32], index: 6, kind: input, shape index: {}]
  %s7 = inlined_call_operand.vmem [shape: f32[32,8], index: 7, kind: input, shape index: {}]
  %s8 = inlined_call_operand.vmem [shape: f32[1,8], index: 8, kind: input, shape index: {}]
  %s9 = inlined_call_operand.vmem [shape: f32[3], index: 9, kind: input, shape index: {}]
  %s10 = inlined_call_operand.vmem [shape: f32[2,3,3,8], index: 10, kind: output, shape index: {}]
  %s11 = sld [smem:[#allocation0]]
  $region105: #{pnet_forward.1} parent=0
    _
  %s13 = ssub.s32 1, %s11
  %s14 = scalar_select 0, %s13, %s11
  $region1: #{pnet_forward.1} parent=0
    #allocation5 [shape = 'u8[512]{0}', space=smem, size = 0x200, scoped, tag = 'input window, operand 9, single buffered']
    #allocation6 [shape = 's32[2]{0}', space=sflag, size = 0x8, scoped, tag = 'scoped memory for pnet_forward.1']
    %15 = vsyncpa [#allocation6], 0
    loop: start=0, step=1, limit=4
    $region2: #{pnet_forward.1} parent=1 // loop_pre_header
      _
    $region3: #{pnet_forward.1} parent=1 // loop_header
      %s17 = sphi 0, %s21
      %p18 = scmp.ge.s32.totalorder %s17, 4
      %s27 = sphi 0, %s29
      %s30 = sphi 0, %s27
      %s31 = sphi 0, %s30
      %s47 = sphi 0, %s31
      %s51 = sphi 0, %s51
      %s53 = sphi 0, %s51
      %s54 = sphi 0, %s53
      %s68 = sphi 0, %s54
      %s72 = sphi 0, %s72
      %s74 = sphi 0, %s72
      %s75 = sphi 0, %s74
      %s89 = sphi 0, %s75
      %s93 = sphi 0, %s93
      %s95 = sphi 0, %s93
      %s96 = sphi 0, %s95
      %s110 = sphi 0, %s96
      %s114 = sphi 0, %s114
      %s116 = sphi 0, %s114
      %s117 = sphi 0, %s116
      %s131 = sphi 0, %s117
      %s135 = sphi 0, %s135
      %s137 = sphi 0, %s135
      %s138 = sphi 0, %s137
      %s152 = sphi 0, %s138
      %s156 = sphi 0, %s156
      %s158 = sphi 0, %s156
      %s159 = sphi 0, %s158
      %s173 = sphi 0, %s159
      %s177 = sphi 0, %s177
      %s179 = sphi 0, %s177
      %s180 = sphi 0, %s179
      %s194 = sphi 0, %s180
      %s198 = sphi 0, %s198
      %s200 = sphi 0, %s198
      %s201 = sphi 0, %s200
      %s215 = sphi 0, %s201
      %s219 = sphi 0, %s219
      %s221 = sphi 0, %s219
      %s222 = sphi 0, %s221
      %s236 = sphi 0, %s222
      %s242 = sphi 0, %s244
      %s245 = sphi 0, %s242
      %s246 = sphi 0, %s245
      %s262 = sphi 0, %s246
    $region4: #{pnet_forward.1} parent=1 // loop_header_branch
      %20 = sbr.rel (%p18) target = $region8
    $region5: #{pnet_forward.1} parent=1 // loop_body
      %s22 = ssub.s32 %s17, 1
      %s23 = ssub.s32 %s17, 2
      %s24 = sadd.s32 %s17, 1
      %s25 = ssub.s32 %s17, %s24
      %p26 = scmp.eq.s32.totalorder %s25, 0
      %s28 = sadd.s32 %s27, 1
      %s29 = scalar_select %p26, %s27, %s28
      %p32 = pneg %p26
      %p33 = scmp.eq.s32.totalorder %s17, 1
      %p34 = por %p32, %p33
      %p35 = scmp.ne.s32.totalorder %s27, %s30
      %p36 = scmp.eq.s32.totalorder %s17, 0
      %p37 = por %p35, %p36
      %p38 = scmp.ne.s32.totalorder %s27, %s30
      %p39 = scmp.eq.s32.totalorder %s22, 1
      %p40 = por %p38, %p39
      %p41 = scmp.ne.s32.totalorder %s30, %s31
      %p42 = scmp.eq.s32.totalorder %s22, 0
      %p43 = por %p41, %p42
      %p44 = scmp.ne.s32.totalorder %s30, %s31
      %p45 = scmp.eq.s32.totalorder %s23, 1
      %p46 = por %p44, %p45
      %p48 = scmp.ne.s32.totalorder %s31, %s47
      %p49 = scmp.eq.s32.totalorder %s23, 0
      %p50 = por %p48, %p49
      %s52 = sadd.s32 %s51, 1
      %p55 = scmp.eq.s32.totalorder %s17, 1
      %p56 = scmp.ne.s32.totalorder %s51, %s53
      %p57 = scmp.eq.s32.totalorder %s17, 0
      %p58 = por %p56, %p57
      %p59 = scmp.ne.s32.totalorder %s51, %s53
      %p60 = scmp.eq.s32.totalorder %s22, 1
      %p61 = por %p59, %p60
      %p62 = scmp.ne.s32.totalorder %s53, %s54
      %p63 = scmp.eq.s32.totalorder %s22, 0
      %p64 = por %p62, %p63
      %p65 = scmp.ne.s32.totalorder %s53, %s54
      %p66 = scmp.eq.s32.totalorder %s23, 1
      %p67 = por %p65, %p66
      %p69 = scmp.ne.s32.totalorder %s54, %s68
      %p70 = scmp.eq.s32.totalorder %s23, 0
      %p71 = por %p69, %p70
      %s73 = sadd.s32 %s72, 1
      %p76 = scmp.eq.s32.totalorder %s17, 1
      %p77 = scmp.ne.s32.totalorder %s72, %s74
      %p78 = scmp.eq.s32.totalorder %s17, 0
      %p79 = por %p77, %p78
      %p80 = scmp.ne.s32.totalorder %s72, %s74
      %p81 = scmp.eq.s32.totalorder %s22, 1
      %p82 = por %p80, %p81
      %p83 = scmp.ne.s32.totalorder %s74, %s75
      %p84 = scmp.eq.s32.totalorder %s22, 0
      %p85 = por %p83, %p84
      %p86 = scmp.ne.s32.totalorder %s74, %s75
      %p87 = scmp.eq.s32.totalorder %s23, 1
      %p88 = por %p86, %p87
      %p90 = scmp.ne.s32.totalorder %s75, %s89
      %p91 = scmp.eq.s32.totalorder %s23, 0
      %p92 = por %p90, %p91
      %s94 = sadd.s32 %s93, 1
      %p97 = scmp.eq.s32.totalorder %s17, 1
      %p98 = scmp.ne.s32.totalorder %s93, %s95
      %p99 = scmp.eq.s32.totalorder %s17, 0
      %p100 = por %p98, %p99
      %p101 = scmp.ne.s32.totalorder %s93, %s95
      %p102 = scmp.eq.s32.totalorder %s22, 1
      %p103 = por %p101, %p102
      %p104 = scmp.ne.s32.totalorder %s95, %s96
      %p105 = scmp.eq.s32.totalorder %s22, 0
      %p106 = por %p104, %p105
      %p107 = scmp.ne.s32.totalorder %s95, %s96
      %p108 = scmp.eq.s32.totalorder %s23, 1
      %p109 = por %p107, %p108
      %p111 = scmp.ne.s32.totalorder %s96, %s110
      %p112 = scmp.eq.s32.totalorder %s23, 0
      %p113 = por %p111, %p112
      %s115 = sadd.s32 %s114, 1
      %p118 = scmp.eq.s32.totalorder %s17, 1
      %p119 = scmp.ne.s32.totalorder %s114, %s116
      %p120 = scmp.eq.s32.totalorder %s17, 0
      %p121 = por %p119, %p120
      %p122 = scmp.ne.s32.totalorder %s114, %s116
      %p123 = scmp.eq.s32.totalorder %s22, 1
      %p124 = por %p122, %p123
      %p125 = scmp.ne.s32.totalorder %s116, %s117
      %p126 = scmp.eq.s32.totalorder %s22, 0
      %p127 = por %p125, %p126
      %p128 = scmp.ne.s32.totalorder %s116, %s117
      %p129 = scmp.eq.s32.totalorder %s23, 1
      %p130 = por %p128, %p129
      %p132 = scmp.ne.s32.totalorder %s117, %s131
      %p133 = scmp.eq.s32.totalorder %s23, 0
      %p134 = por %p132, %p133
      %s136 = sadd.s32 %s135, 1
      %p139 = scmp.eq.s32.totalorder %s17, 1
      %p140 = scmp.ne.s32.totalorder %s135, %s137
      %p141 = scmp.eq.s32.totalorder %s17, 0
      %p142 = por %p140, %p141
      %p143 = scmp.ne.s32.totalorder %s135, %s137
      %p144 = scmp.eq.s32.totalorder %s22, 1
      %p145 = por %p143, %p144
      %p146 = scmp.ne.s32.totalorder %s137, %s138
      %p147 = scmp.eq.s32.totalorder %s22, 0
      %p148 = por %p146, %p147
      %p149 = scmp.ne.s32.totalorder %s137, %s138
      %p150 = scmp.eq.s32.totalorder %s23, 1
      %p151 = por %p149, %p150
      %p153 = scmp.ne.s32.totalorder %s138, %s152
      %p154 = scmp.eq.s32.totalorder %s23, 0
      %p155 = por %p153, %p154
      %s157 = sadd.s32 %s156, 1
      %p160 = scmp.eq.s32.totalorder %s17, 1
      %p161 = scmp.ne.s32.totalorder %s156, %s158
      %p162 = scmp.eq.s32.totalorder %s17, 0
      %p163 = por %p161, %p162
      %p164 = scmp.ne.s32.totalorder %s156, %s158
      %p165 = scmp.eq.s32.totalorder %s22, 1
      %p166 = por %p164, %p165
      %p167 = scmp.ne.s32.totalorder %s158, %s159
      %p168 = scmp.eq.s32.totalorder %s22, 0
      %p169 = por %p167, %p168
      %p170 = scmp.ne.s32.totalorder %s158, %s159
      %p171 = scmp.eq.s32.totalorder %s23, 1
      %p172 = por %p170, %p171
      %p174 = scmp.ne.s32.totalorder %s159, %s173
      %p175 = scmp.eq.s32.totalorder %s23, 0
      %p176 = por %p174, %p175
      %s178 = sadd.s32 %s177, 1
      %p181 = scmp.eq.s32.totalorder %s17, 1
      %p182 = scmp.ne.s32.totalorder %s177, %s179
      %p183 = scmp.eq.s32.totalorder %s17, 0
      %p184 = por %p182, %p183
      %p185 = scmp.ne.s32.totalorder %s177, %s179
      %p186 = scmp.eq.s32.totalorder %s22, 1
      %p187 = por %p185, %p186
      %p188 = scmp.ne.s32.totalorder %s179, %s180
      %p189 = scmp.eq.s32.totalorder %s22, 0
      %p190 = por %p188, %p189
      %p191 = scmp.ne.s32.totalorder %s179, %s180
      %p192 = scmp.eq.s32.totalorder %s23, 1
      %p193 = por %p191, %p192
      %p195 = scmp.ne.s32.totalorder %s180, %s194
      %p196 = scmp.eq.s32.totalorder %s23, 0
      %p197 = por %p195, %p196
      %s199 = sadd.s32 %s198, 1
      %p202 = scmp.eq.s32.totalorder %s17, 1
      %p203 = scmp.ne.s32.totalorder %s198, %s200
      %p204 = scmp.eq.s32.totalorder %s17, 0
      %p205 = por %p203, %p204
      %p206 = scmp.ne.s32.totalorder %s198, %s200
      %p207 = scmp.eq.s32.totalorder %s22, 1
      %p208 = por %p206, %p207
      %p209 = scmp.ne.s32.totalorder %s200, %s201
      %p210 = scmp.eq.s32.totalorder %s22, 0
      %p211 = por %p209, %p210
      %p212 = scmp.ne.s32.totalorder %s200, %s201
      %p213 = scmp.eq.s32.totalorder %s23, 1
      %p214 = por %p212, %p213
      %p216 = scmp.ne.s32.totalorder %s201, %s215
      %p217 = scmp.eq.s32.totalorder %s23, 0
      %p218 = por %p216, %p217
      %s220 = sadd.s32 %s219, 1
      %p223 = scmp.eq.s32.totalorder %s17, 1
      %p224 = scmp.ne.s32.totalorder %s219, %s221
      %p225 = scmp.eq.s32.totalorder %s17, 0
      %p226 = por %p224, %p225
      %p227 = scmp.ne.s32.totalorder %s219, %s221
      %p228 = scmp.eq.s32.totalorder %s22, 1
      %p229 = por %p227, %p228
      %p230 = scmp.ne.s32.totalorder %s221, %s222
      %p231 = scmp.eq.s32.totalorder %s22, 0
      %p232 = por %p230, %p231
      %p233 = scmp.ne.s32.totalorder %s221, %s222
      %p234 = scmp.eq.s32.totalorder %s23, 1
      %p235 = por %p233, %p234
      %p237 = scmp.ne.s32.totalorder %s222, %s236
      %p238 = scmp.eq.s32.totalorder %s23, 0
      %p239 = por %p237, %p238
      %s240 = ssub.s32 %s17, %s24
      %p241 = scmp.eq.s32.totalorder %s240, 0
      %s243 = sadd.s32 %s242, 1
      %s244 = scalar_select %p241, %s242, %s243
      %p247 = pneg %p241
      %p248 = scmp.eq.s32.totalorder %s17, 1
      %p249 = por %p247, %p248
      %p250 = scmp.ne.s32.totalorder %s242, %s245
      %p251 = scmp.eq.s32.totalorder %s17, 0
      %p252 = por %p250, %p251
      %p253 = scmp.ne.s32.totalorder %s242, %s245
      %p254 = scmp.eq.s32.totalorder %s22, 1
      %p255 = por %p253, %p254
      %p256 = scmp.ne.s32.totalorder %s245, %s246
      %p257 = scmp.eq.s32.totalorder %s22, 0
      %p258 = por %p256, %p257
      %p259 = scmp.ne.s32.totalorder %s245, %s246
      %p260 = scmp.eq.s32.totalorder %s23, 1
      %p261 = por %p259, %p260
      %p263 = scmp.ne.s32.totalorder %s246, %s262
      %p264 = scmp.eq.s32.totalorder %s23, 0
      %p265 = por %p263, %p264
      %p266 = scmp.le.s32.totalorder 1, %s17
      %p267 = scmp.lt.s32.totalorder %s17, 3
      %p268 = pnand %p266, %p267
      %p269 = pneg %p268
      // Predicated region
      $region9: #{pnet_forward.1} parent=5 // pred_check
        _
      $region10: #{pnet_forward.1} parent=5 // pred_check_branch
        %271 = sbr.rel (%p268) target = $region12
      $region11: #{pnet_forward.1} parent=5 // pred_region
        %s272 = ssub.s32 %s17, 1
        // Predicated region
        $region13: #{pnet_forward.1} parent=11 // pred_check
          %p273 = pneg %p64
        $region14: #{pnet_forward.1} parent=11 // pred_check_branch
          %275 = sbr.rel (%p273) target = $region16
        $region15: #{pnet_forward.1} parent=11 // pred_region
          _
        $region16: #{pnet_forward.1} parent=11 // pred_fallthru
          _
        // Predicated region
        $region17: #{pnet_forward.1} parent=11 // pred_check
          %p276 = pneg %p85
        $region18: #{pnet_forward.1} parent=11 // pred_check_branch
          %278 = sbr.rel (%p276) target = $region20
        $region19: #{pnet_forward.1} parent=11 // pred_region
          _
        $region20: #{pnet_forward.1} parent=11 // pred_fallthru
          _
        // Predicated region
        $region21: #{pnet_forward.1} parent=11 // pred_check
          %p279 = pneg %p106
        $region22: #{pnet_forward.1} parent=11 // pred_check_branch
          %281 = sbr.rel (%p279) target = $region24
        $region23: #{pnet_forward.1} parent=11 // pred_region
          _
        $region24: #{pnet_forward.1} parent=11 // pred_fallthru
          _
        // Predicated region
        $region25: #{pnet_forward.1} parent=11 // pred_check
          %p282 = pneg %p127
        $region26: #{pnet_forward.1} parent=11 // pred_check_branch
          %284 = sbr.rel (%p282) target = $region28
        $region27: #{pnet_forward.1} parent=11 // pred_region
          _
        $region28: #{pnet_forward.1} parent=11 // pred_fallthru
          _
        // Predicated region
        $region29: #{pnet_forward.1} parent=11 // pred_check
          %p285 = pneg %p148
        $region30: #{pnet_forward.1} parent=11 // pred_check_branch
          %287 = sbr.rel (%p285) target = $region32
        $region31: #{pnet_forward.1} parent=11 // pred_region
          _
        $region32: #{pnet_forward.1} parent=11 // pred_fallthru
          _
        // Predicated region
        $region33: #{pnet_forward.1} parent=11 // pred_check
          %p288 = pneg %p169
        $region34: #{pnet_forward.1} parent=11 // pred_check_branch
          %290 = sbr.rel (%p288) target = $region36
        $region35: #{pnet_forward.1} parent=11 // pred_region
          _
        $region36: #{pnet_forward.1} parent=11 // pred_fallthru
          _
        // Predicated region
        $region37: #{pnet_forward.1} parent=11 // pred_check
          %p291 = pneg %p190
        $region38: #{pnet_forward.1} parent=11 // pred_check_branch
          %293 = sbr.rel (%p291) target = $region40
        $region39: #{pnet_forward.1} parent=11 // pred_region
          _
        $region40: #{pnet_forward.1} parent=11 // pred_fallthru
          _
        // Predicated region
        $region41: #{pnet_forward.1} parent=11 // pred_check
          %p294 = pneg %p211
        $region42: #{pnet_forward.1} parent=11 // pred_check_branch
          %296 = sbr.rel (%p294) target = $region44
        $region43: #{pnet_forward.1} parent=11 // pred_region
          _
        $region44: #{pnet_forward.1} parent=11 // pred_fallthru
          _
        // Predicated region
        $region45: #{pnet_forward.1} parent=11 // pred_check
          %p297 = pneg %p232
        $region46: #{pnet_forward.1} parent=11 // pred_check_branch
          %299 = sbr.rel (%p297) target = $region48
        $region47: #{pnet_forward.1} parent=11 // pred_region
          %s301 = ssub.s32 16, 16
          %302 = vsyncadd [#allocation6], %s301
          %s304 = sshll.u32 %s9, 4
          %s305 = int_to_ptr.vmem [resolvable:$true] %s304
          %307 = dma.vmem_to_smem %s305, 16, [#allocation5], [#allocation6]
        $region48: #{pnet_forward.1} parent=11 // pred_fallthru
          _
      $region12: #{pnet_forward.1} parent=5 // pred_fallthru
        _
      %p308 = scmp.lt.s32.totalorder %s17, 2
      // Predicated region
      $region49: #{pnet_forward.1} parent=5 // pred_check
        %p309 = pneg %p308
      $region50: #{pnet_forward.1} parent=5 // pred_check_branch
        %311 = sbr.rel (%p309) target = $region52
      $region51: #{pnet_forward.1} parent=5 // pred_region
        // Predicated region
        $region53: #{pnet_forward.1} parent=51 // pred_check
          %p312 = pneg %p37
        $region54: #{pnet_forward.1} parent=51 // pred_check_branch
          %314 = sbr.rel (%p312) target = $region56
        $region55: #{pnet_forward.1} parent=51 // pred_region
          %p315 = scmp.lt.s32.totalorder %s17, 1
          %s316 = scalar_select %p315, %s17, 1
          %s317 = smul.addr %s316, 32
          %s318 = smul.addr %s317, 8
          %s319 = scalar_lea.vmem %s0, %s318
        $region56: #{pnet_forward.1} parent=51 // pred_fallthru
          _
      $region52: #{pnet_forward.1} parent=5 // pred_fallthru
        _
      %p320 = scmp.le.s32.totalorder 1, %s17
      %p321 = scmp.lt.s32.totalorder %s17, 3
      %p322 = pnand %p320, %p321
      %p323 = pneg %p322
      // Predicated region
      $region57: #{pnet_forward.1} parent=5 // pred_check
        _
      $region58: #{pnet_forward.1} parent=5 // pred_check_branch
        %325 = sbr.rel (%p322) target = $region60
      $region59: #{pnet_forward.1} parent=5 // pred_region
        %s326 = ssub.s32 %s17, 1
        // Predicated region
        $region61: #{pnet_forward.1} parent=59 // pred_check
          %p327 = pneg %p232
        $region62: #{pnet_forward.1} parent=59 // pred_check_branch
          %329 = sbr.rel (%p327) target = $region64
        $region63: #{pnet_forward.1} parent=59 // pred_region
          %330 = dma.done [#allocation6], 16
        $region64: #{pnet_forward.1} parent=59 // pred_fallthru
          _
        %331 = sfence
        %p332 = scmp.lt.s32.totalorder %s22, 1
        %s333 = scalar_select %p332, %s22, 1
        %s334 = smul.addr %s333, 32
        %s335 = smul.addr %s334, 8
        %s336 = scalar_lea.vmem %s0, %s335
        %p337 = pneg %p43
        %p338 = pneg %p40
        %p339 = pneg %p64
        %p340 = pneg %p61
        %p341 = pneg %p85
        %p342 = pneg %p82
        %p343 = pneg %p106
        %p344 = pneg %p103
        %p345 = pneg %p127
        %p346 = pneg %p124
        %p347 = pneg %p148
        %p348 = pneg %p145
        %p349 = pneg %p169
        %p350 = pneg %p166
        %p351 = pneg %p190
        %p352 = pneg %p187
        %p353 = pneg %p211
        %p354 = pneg %p208
        %p355 = pneg %p232
        %p356 = pneg %p229
        %p357 = pneg %p258
        %p358 = pneg %p255
        %p359 = scmp.lt.s32.totalorder %s22, 1
        %s360 = scalar_select %p359, %s22, 1
        %s361 = smul.addr %s360, 3
        %s362 = smul.addr %s361, 4
        %s363 = scalar_lea.vmem %s10, %s362
        %p364 = scmp.lt.s32.totalorder %s22, 1
        %s365 = scalar_select %p364, %s22, 1
        %s366 = smul.addr %s365, 32
        %s367 = smul.addr %s366, 8
        %s368 = scalar_lea.vmem %s0, %s367
        %p369 = scmp.lt.s32.totalorder %s22, 1
        %s370 = scalar_select %p369, %s22, 1
        %s371 = smul.addr %s370, 3
        %s372 = smul.addr %s371, 4
        %s373 = scalar_lea.vmem %s10, %s372
        %s374 = sld [smem:[#allocation5]]
        %s375 = sld [smem:[#allocation5 + $0x1]]
        %s376 = sld [smem:[#allocation5 + $0x2]]
        loop: start=0, step=1, limit=14
        $region65: #{pnet_forward.1} parent=59 // loop_pre_header
          _
        $region66: #{pnet_forward.1} parent=59 // loop_header
          %s378 = sphi 0, %s382
          %p379 = scmp.ge.s32.totalorder %s378, 14
        $region67: #{pnet_forward.1} parent=59 // loop_header_branch
          %381 = sbr.rel (%p379) target = $region71
        $region68: #{pnet_forward.1} parent=59 // loop_body
          %s383 = smul.u32 %s378, 16
          %s384 = scalar_lea.vmem %s368, %s383
          %v385 = vld [vmem:[%s384] sm:$0xff]
          %v386 = vld [vmem:[%s384 + $0x8] sm:$0xff]
          %v387 = vld [vmem:[%s1] sm:$0x7]
          %s388 = scalar_lea.vmem %s1, 4
          %v389 = vld [vmem:[%s388] sm:$0x7]
          %vm392 = vcmask 1046528
          %v393 = vrot.slane %v385, 1
          %v394 = vrot.slane %v386, 1
          %v395 = vsel %vm392, %v393, %v394
          %vm396 = vcmask 23552
          %v397 = vsel %vm396, %v395, 0
          %v399 = vsel %vm396, %v394, 0
          %vm401 = vcmask 1042432
          %v403 = vsel %vm401, %v389, 0
          %405 = vmatprep.subr.mxu0 0.0
          %406 = vmatpush1.msra.mxu0 0.0
          %407 = vmatprep.subr.mxu0 0.0
          %408 = vmatpush1.msra.mxu0 0.0
          %409 = vmatprep.subr.mxu0 0.0
          %410 = vmatpush1.msra.mxu0 0.0
          %411 = vmatprep.subr.mxu0 0.0
          %412 = vmatpush1.msra.mxu0 0.0
          %413 = vmatprep.subr.mxu0 0.0
          %414 = vmatpush1.msra.mxu0 0.0
          %415 = vmatprep.subr.mxu0 0.0
          %416 = vmatpush1.msra.mxu0 0.0
          %417 = vmatprep.subr.mxu0 0.0
          %418 = vmatpush1.msra.mxu0 0.0
          %419 = vmatprep.subr.mxu0 0.0
          %420 = vmatpush1.msra.mxu0 0.0
          %421 = vmatprep.subr.mxu0 0.0
          %422 = vmatpush1.msra.mxu0 0.0
          %423 = vmatprep.subr.mxu0 0.0
          %424 = vmatpush1.msra.mxu0 0.0
          %425 = vmatprep.subr.mxu0 0.0
          %426 = vmatpush1.msra.mxu0 0.0
          %427 = vmatprep.subr.mxu0 0.0
          %428 = vmatpush1.msra.mxu0 0.0
          %429 = vmatprep.subr.mxu0 0.0
          %430 = vmatpush1.msra.mxu0 0.0
          %431 = vmatprep.subr.mxu0 0.0
          %432 = vmatpush1.msra.mxu0 0.0
          %433 = vmatprep.subr.mxu0 0.0
          %434 = vmatpush1.msra.mxu0 0.0
          %435 = vmatprep.subr.mxu0 0.0
          %436 = vmatpush1.msra.mxu0 %v403
          %437 = vmatprep.subr.mxu0 0.0
          %438 = vmatpush2.msra.mxu0 0.0
          %439 = vmatprep.subr.mxu0 0.0
          %440 = vmatpush2.msra.mxu0 0.0
          %441 = vmatprep.subr.mxu0 0.0
          %442 = vmatpush2.msra.mxu0 0.0
          %443 = vmatprep.subr.mxu0 0.0
          %444 = vmatpush2.msra.mxu0 0.0
          %445 = vmatprep.subr.mxu0 0.0
          %446 = vmatpush2.msra.mxu0 0.0
          %447 = vmatprep.subr.mxu0 0.0
          %448 = vmatpush2.msra.mxu0 0.0
          %449 = vmatprep.subr.mxu0 0.0
          %450 = vmatpush2.msra.mxu0 0.0
          %451 = vmatprep.subr.mxu0 0.0
          %452 = vmatpush2.msra.mxu0 0.0
          %453 = vmatprep.subr.mxu0 0.0
          %454 = vmatpush2.msra.mxu0 0.0
          %455 = vmatprep.subr.mxu0 0.0
          %456 = vmatpush2.msra.mxu0 0.0
          %457 = vmatprep.subr.mxu0 0.0
          %458 = vmatpush2.msra.mxu0 0.0
          %459 = vmatprep.subr.mxu0 0.0
          %460 = vmatpush2.msra.mxu0 0.0
          %461 = vmatprep.subr.mxu0 0.0
          %462 = vmatpush2.msra.mxu0 0.0
          %463 = vmatprep.subr.mxu0 0.0
          %464 = vmatpush2.msra.mxu0 0.0
          %465 = vmatprep.subr.mxu0 0.0
          %466 = vmatpush2.msra.mxu0 0.0
          %467 = vmatprep.subr.mxu0 0.0
          %468 = vmatpush2.msra.mxu0 0.0
          %469 = vmatprep.mubr.f32.mxu0 0.0
          %470 = vmatmul.mubr.f32.gmra.mxu0 %v397
          %v471 = vpop.f32.mrf.mxu0
          %v472 = vadd.f32 0.0, %v471
          %v473 = vpop.f32.mrf.mxu0
          %474 = vmatprep.mubr.f32.mxu0 0.0
          %475 = vmatmul.mubr.f32.gmra.mxu0 %v399
          %v476 = vpop.f32.mrf.mxu0
          %v477 = vadd.f32 0.0, %v476
          %v478 = vpop.f32.mrf.mxu0
          %479 = vdwg.mxu0
          %v480 = vsel %vm396, %v385, 0
          %v482 = vsel %vm396, %v386, 0
          %v485 = vsel %vm401, %v387, 0
          %487 = vmatprep.subr.mxu0 0.0
          %488 = vmatpush1.msra.mxu0 0.0
          %489 = vmatprep.subr.mxu0 0.0
          %490 = vmatpush1.msra.mxu0 0.0
          %491 = vmatprep.subr.mxu0 0.0
          %492 = vmatpush1.msra.mxu0 0.0
          %493 = vmatprep.subr.mxu0 0.0
          %494 = vmatpush1.msra.mxu0 0.0
          %495 = vmatprep.subr.mxu0 0.0
          %496 = vmatpush1.msra.mxu0 0.0
          %497 = vmatprep.subr.mxu0 0.0
          %498 = vmatpush1.msra.mxu0 0.0
          %499 = vmatprep.subr.mxu0 0.0
          %500 = vmatpush1.msra.mxu0 0.0
          %501 = vmatprep.subr.mxu0 0.0
          %502 = vmatpush1.msra.mxu0 0.0
          %503 = vmatprep.subr.mxu0 0.0
          %504 = vmatpush1.msra.mxu0 0.0
          %505 = vmatprep.subr.mxu0 0.0
          %506 = vmatpush1.msra.mxu0 0.0
          %507 = vmatprep.subr.mxu0 0.0
          %508 = vmatpush1.msra.mxu0 0.0
          %509 = vmatprep.subr.mxu0 0.0
          %510 = vmatpush1.msra.mxu0 0.0
          %511 = vmatprep.subr.mxu0 0.0
          %512 = vmatpush1.msra.mxu0 0.0
          %513 = vmatprep.subr.mxu0 0.0
          %514 = vmatpush1.msra.mxu0 0.0
          %515 = vmatprep.subr.mxu0 0.0
          %516 = vmatpush1.msra.mxu0 0.0
          %517 = vmatprep.subr.mxu0 0.0
          %518 = vmatpush1.msra.mxu0 %v485
          %519 = vmatprep.subr.mxu0 0.0
          %520 = vmatpush2.msra.mxu0 0.0
          %521 = vmatprep.subr.mxu0 0.0
          %522 = vmatpush2.msra.mxu0 0.0
          %523 = vmatprep.subr.mxu0 0.0
          %524 = vmatpush2.msra.mxu0 0.0
          %525 = vmatprep.subr.mxu0 0.0
          %526 = vmatpush2.msra.mxu0 0.0
          %527 = vmatprep.subr.mxu0 0.0
          %528 = vmatpush2.msra.mxu0 0.0
          %529 = vmatprep.subr.mxu0 0.0
          %530 = vmatpush2.msra.mxu0 0.0
          %531 = vmatprep.subr.mxu0 0.0
          %532 = vmatpush2.msra.mxu0 0.0
          %533 = vmatprep.subr.mxu0 0.0
          %534 = vmatpush2.msra.mxu0 0.0
          %535 = vmatprep.subr.mxu0 0.0
          %536 = vmatpush2.msra.mxu0 0.0
          %537 = vmatprep.subr.mxu0 0.0
          %538 = vmatpush2.msra.mxu0 0.0
          %539 = vmatprep.subr.mxu0 0.0
          %540 = vmatpush2.msra.mxu0 0.0
          %541 = vmatprep.subr.mxu0 0.0
          %542 = vmatpush2.msra.mxu0 0.0
          %543 = vmatprep.subr.mxu0 0.0
          %544 = vmatpush2.msra.mxu0 0.0
          %545 = vmatprep.subr.mxu0 0.0
          %546 = vmatpush2.msra.mxu0 0.0
          %547 = vmatprep.subr.mxu0 0.0
          %548 = vmatpush2.msra.mxu0 0.0
          %549 = vmatprep.subr.mxu0 0.0
          %550 = vmatpush2.msra.mxu0 0.0
          %551 = vmatprep.mubr.f32.mxu0 0.0
          %552 = vmatmul.mubr.f32.gmra.mxu0 %v480
          %v553 = vpop.f32.mrf.mxu0
          %v554 = vadd.f32 %v472, %v553
          %v555 = vpop.f32.mrf.mxu0
          %556 = vmatprep.mubr.f32.mxu0 0.0
          %557 = vmatmul.mubr.f32.gmra.mxu0 %v482
          %v558 = vpop.f32.mrf.mxu0
          %v559 = vadd.f32 %v477, %v558
          %v560 = vpop.f32.mrf.mxu0
          %561 = vdwg.mxu0
          %s562 = scalar_lea.vmem %s1, 8
          %v563 = vld [vmem:[%s562] sm:$0x7]
          %vm564 = vcmask 1045504
          %v565 = vrot.slane %v385, 2
          %v566 = vrot.slane %v386, 2
          %v567 = vsel %vm564, %v565, %v566
          %v568 = vsel %vm396, %v567, 0
          %v570 = vsel %vm396, %v566, 0
          %v573 = vsel %vm401, %v563, 0
          %575 = vmatprep.subr.mxu0 0.0
          %576 = vmatpush1.msra.mxu0 0.0
          %577 = vmatprep.subr.mxu0 0.0
          %578 = vmatpush1.msra.mxu0 0.0
          %579 = vmatprep.subr.mxu0 0.0
          %580 = vmatpush1.msra.mxu0 0.0
          %581 = vmatprep.subr.mxu0 0.0
          %582 = vmatpush1.msra.mxu0 0.0
          %583 = vmatprep.subr.mxu0 0.0
          %584 = vmatpush1.msra.mxu0 0.0
          %585 = vmatprep.subr.mxu0 0.0
          %586 = vmatpush1.msra.mxu0 0.0
          %587 = vmatprep.subr.mxu0 0.0
          %588 = vmatpush1.msra.mxu0 0.0
          %589 = vmatprep.subr.mxu0 0.0
          %590 = vmatpush1.msra.mxu0 0.0
          %591 = vmatprep.subr.mxu0 0.0
          %592 = vmatpush1.msra.mxu0 0.0
          %593 = vmatprep.subr.mxu0 0.0
          %594 = vmatpush1.msra.mxu0 0.0
          %595 = vmatprep.subr.mxu0 0.0
          %596 = vmatpush1.msra.mxu0 0.0
          %597 = vmatprep.subr.mxu0 0.0
          %598 = vmatpush1.msra.mxu0 0.0
          %599 = vmatprep.subr.mxu0 0.0
          %600 = vmatpush1.msra.mxu0 0.0
          %601 = vmatprep.subr.mxu0 0.0
          %602 = vmatpush1.msra.mxu0 0.0
          %603 = vmatprep.subr.mxu0 0.0
          %604 = vmatpush1.msra.mxu0 0.0
          %605 = vmatprep.subr.mxu0 0.0
          %606 = vmatpush1.msra.mxu0 %v573
          %607 = vmatprep.subr.mxu0 0.0
          %608 = vmatpush2.msra.mxu0 0.0
          %609 = vmatprep.subr.mxu0 0.0
          %610 = vmatpush2.msra.mxu0 0.0
          %611 = vmatprep.subr.mxu0 0.0
          %612 = vmatpush2.msra.mxu0 0.0
          %613 = vmatprep.subr.mxu0 0.0
          %614 = vmatpush2.msra.mxu0 0.0
          %615 = vmatprep.subr.mxu0 0.0
          %616 = vmatpush2.msra.mxu0 0.0
          %617 = vmatprep.subr.mxu0 0.0
          %618 = vmatpush2.msra.mxu0 0.0
          %619 = vmatprep.subr.mxu0 0.0
          %620 = vmatpush2.msra.mxu0 0.0
          %621 = vmatprep.subr.mxu0 0.0
          %622 = vmatpush2.msra.mxu0 0.0
          %623 = vmatprep.subr.mxu0 0.0
          %624 = vmatpush2.msra.mxu0 0.0
          %625 = vmatprep.subr.mxu0 0.0
          %626 = vmatpush2.msra.mxu0 0.0
          %627 = vmatprep.subr.mxu0 0.0
          %628 = vmatpush2.msra.mxu0 0.0
          %629 = vmatprep.subr.mxu0 0.0
          %630 = vmatpush2.msra.mxu0 0.0
          %631 = vmatprep.subr.mxu0 0.0
          %632 = vmatpush2.msra.mxu0 0.0
          %633 = vmatprep.subr.mxu0 0.0
          %634 = vmatpush2.msra.mxu0 0.0
          %635 = vmatprep.subr.mxu0 0.0
          %636 = vmatpush2.msra.mxu0 0.0
          %637 = vmatprep.subr.mxu0 0.0
          %638 = vmatpush2.msra.mxu0 0.0
          %639 = vmatprep.mubr.f32.mxu0 0.0
          %640 = vmatmul.mubr.f32.gmra.mxu0 %v568
          %v641 = vpop.f32.mrf.mxu0
          %v642 = vadd.f32 0.0, %v641
          %v643 = vpop.f32.mrf.mxu0
          %644 = vmatprep.mubr.f32.mxu0 0.0
          %645 = vmatmul.mubr.f32.gmra.mxu0 %v570
          %v646 = vpop.f32.mrf.mxu0
          %v647 = vadd.f32 0.0, %v646
          %v648 = vpop.f32.mrf.mxu0
          %649 = vdwg.mxu0
          %v650 = vadd.f32 %v554, %v642
          %v651 = vadd.f32 %v559, %v647
          %s652 = sadd.s32 %s378, 1
          %s653 = smul.u32 %s652, 16
          %s654 = scalar_lea.vmem %s368, %s653
          %v655 = vld [vmem:[%s654] sm:$0xff]
          %v656 = vld [vmem:[%s654 + $0x8] sm:$0xff]
          %s657 = scalar_lea.vmem %s1, 12
          %v658 = vld [vmem:[%s657] sm:$0x7]
          %v660 = vsel %vm396, %v655, 0
          %v663 = vsel %vm396, %v656, 0
          %v666 = vsel %vm401, %v658, 0
          %668 = vmatprep.subr.mxu0 0.0
          %669 = vmatpush1.msra.mxu0 0.0
          %670 = vmatprep.subr.mxu0 0.0
          %671 = vmatpush1.msra.mxu0 0.0
          %672 = vmatprep.subr.mxu0 0.0
          %673 = vmatpush1.msra.mxu0 0.0
          %674 = vmatprep.subr.mxu0 0.0
          %675 = vmatpush1.msra.mxu0 0.0
          %676 = vmatprep.subr.mxu0 0.0
          %677 = vmatpush1.msra.mxu0 0.0
          %678 = vmatprep.subr.mxu0 0.0
          %679 = vmatpush1.msra.mxu0 0.0
          %680 = vmatprep.subr.mxu0 0.0
          %681 = vmatpush1.msra.mxu0 0.0
          %682 = vmatprep.subr.mxu0 0.0
          %683 = vmatpush1.msra.mxu0 0.0
          %684 = vmatprep.subr.mxu0 0.0
          %685 = vmatpush1.msra.mxu0 0.0
          %686 = vmatprep.subr.mxu0 0.0
          %687 = vmatpush1.msra.mxu0 0.0
          %688 = vmatprep.subr.mxu0 0.0
          %689 = vmatpush1.msra.mxu0 0.0
          %690 = vmatprep.subr.mxu0 0.0
          %691 = vmatpush1.msra.mxu0 0.0
          %692 = vmatprep.subr.mxu0 0.0
          %693 = vmatpush1.msra.mxu0 0.0
          %694 = vmatprep.subr.mxu0 0.0
          %695 = vmatpush1.msra.mxu0 0.0
          %696 = vmatprep.subr.mxu0 0.0
          %697 = vmatpush1.msra.mxu0 0.0
          %698 = vmatprep.subr.mxu0 0.0
          %699 = vmatpush1.msra.mxu0 %v666
          %700 = vmatprep.subr.mxu0 0.0
          %701 = vmatpush2.msra.mxu0 0.0
          %702 = vmatprep.subr.mxu0 0.0
          %703 = vmatpush2.msra.mxu0 0.0
          %704 = vmatprep.subr.mxu0 0.0
          %705 = vmatpush2.msra.mxu0 0.0
          %706 = vmatprep.subr.mxu0 0.0
          %707 = vmatpush2.msra.mxu0 0.0
          %708 = vmatprep.subr.mxu0 0.0
          %709 = vmatpush2.msra.mxu0 0.0
          %710 = vmatprep.subr.mxu0 0.0
          %711 = vmatpush2.msra.mxu0 0.0
          %712 = vmatprep.subr.mxu0 0.0
          %713 = vmatpush2.msra.mxu0 0.0
          %714 = vmatprep.subr.mxu0 0.0
          %715 = vmatpush2.msra.mxu0 0.0
          %716 = vmatprep.subr.mxu0 0.0
          %717 = vmatpush2.msra.mxu0 0.0
          %718 = vmatprep.subr.mxu0 0.0
          %719 = vmatpush2.msra.mxu0 0.0
          %720 = vmatprep.subr.mxu0 0.0
          %721 = vmatpush2.msra.mxu0 0.0
          %722 = vmatprep.subr.mxu0 0.0
          %723 = vmatpush2.msra.mxu0 0.0
          %724 = vmatprep.subr.mxu0 0.0
          %725 = vmatpush2.msra.mxu0 0.0
          %726 = vmatprep.subr.mxu0 0.0
          %727 = vmatpush2.msra.mxu0 0.0
          %728 = vmatprep.subr.mxu0 0.0
          %729 = vmatpush2.msra.mxu0 0.0
          %730 = vmatprep.subr.mxu0 0.0
          %731 = vmatpush2.msra.mxu0 0.0
          %732 = vmatprep.mubr.f32.mxu0 0.0
          %733 = vmatmul.mubr.f32.gmra.mxu0 %v660
          %v734 = vpop.f32.mrf.mxu0
          %v735 = vadd.f32 0.0, %v734
          %v736 = vpop.f32.mrf.mxu0
          %737 = vmatprep.mubr.f32.mxu0 0.0
          %738 = vmatmul.mubr.f32.gmra.mxu0 %v663
          %v739 = vpop.f32.mrf.mxu0
          %v740 = vadd.f32 0.0, %v739
          %v741 = vpop.f32.mrf.mxu0
          %742 = vdwg.mxu0
          %v743 = vadd.f32 %v650, %v735
          %v744 = vadd.f32 %v651, %v740
          %s745 = scalar_lea.vmem %s1, 16
          %v746 = vld [vmem:[%s745] sm:$0x7]
          %v747 = vrot.slane %v655, 1
          %v748 = vrot.slane %v656, 1
          %v749 = vsel %vm392, %v747, %v748
          %v750 = vsel %vm396, %v749, 0
          %v752 = vsel %vm396, %v748, 0
          %v755 = vsel %vm401, %v746, 0
          %757 = vmatprep.subr.mxu0 0.0
          %758 = vmatpush1.msra.mxu0 0.0
          %759 = vmatprep.subr.mxu0 0.0
          %760 = vmatpush1.msra.mxu0 0.0
          %761 = vmatprep.subr.mxu0 0.0
          %762 = vmatpush1.msra.mxu0 0.0
          %763 = vmatprep.subr.mxu0 0.0
          %764 = vmatpush1.msra.mxu0 0.0
          %765 = vmatprep.subr.mxu0 0.0
          %766 = vmatpush1.msra.mxu0 0.0
          %767 = vmatprep.subr.mxu0 0.0
          %768 = vmatpush1.msra.mxu0 0.0
          %769 = vmatprep.subr.mxu0 0.0
          %770 = vmatpush1.msra.mxu0 0.0
          %771 = vmatprep.subr.mxu0 0.0
          %772 = vmatpush1.msra.mxu0 0.0
          %773 = vmatprep.subr.mxu0 0.0
          %774 = vmatpush1.msra.mxu0 0.0
          %775 = vmatprep.subr.mxu0 0.0
          %776 = vmatpush1.msra.mxu0 0.0
          %777 = vmatprep.subr.mxu0 0.0
          %778 = vmatpush1.msra.mxu0 0.0
          %779 = vmatprep.subr.mxu0 0.0
          %780 = vmatpush1.msra.mxu0 0.0
          %781 = vmatprep.subr.mxu0 0.0
          %782 = vmatpush1.msra.mxu0 0.0
          %783 = vmatprep.subr.mxu0 0.0
          %784 = vmatpush1.msra.mxu0 0.0
          %785 = vmatprep.subr.mxu0 0.0
          %786 = vmatpush1.msra.mxu0 0.0
          %787 = vmatprep.subr.mxu0 0.0
          %788 = vmatpush1.msra.mxu0 %v755
          %789 = vmatprep.subr.mxu0 0.0
          %790 = vmatpush2.msra.mxu0 0.0
          %791 = vmatprep.subr.mxu0 0.0
          %792 = vmatpush2.msra.mxu0 0.0
          %793 = vmatprep.subr.mxu0 0.0
          %794 = vmatpush2.msra.mxu0 0.0
          %795 = vmatprep.subr.mxu0 0.0
          %796 = vmatpush2.msra.mxu0 0.0
          %797 = vmatprep.subr.mxu0 0.0
          %798 = vmatpush2.msra.mxu0 0.0
          %799 = vmatprep.subr.mxu0 0.0
          %800 = vmatpush2.msra.mxu0 0.0
          %801 = vmatprep.subr.mxu0 0.0
          %802 = vmatpush2.msra.mxu0 0.0
          %803 = vmatprep.subr.mxu0 0.0
          %804 = vmatpush2.msra.mxu0 0.0
          %805 = vmatprep.subr.mxu0 0.0
          %806 = vmatpush2.msra.mxu0 0.0
          %807 = vmatprep.subr.mxu0 0.0
          %808 = vmatpush2.msra.mxu0 0.0
          %809 = vmatprep.subr.mxu0 0.0
          %810 = vmatpush2.msra.mxu0 0.0
          %811 = vmatprep.subr.mxu0 0.0
          %812 = vmatpush2.msra.mxu0 0.0
          %813 = vmatprep.subr.mxu0 0.0
          %814 = vmatpush2.msra.mxu0 0.0
          %815 = vmatprep.subr.mxu0 0.0
          %816 = vmatpush2.msra.mxu0 0.0
          %817 = vmatprep.subr.mxu0 0.0
          %818 = vmatpush2.msra.mxu0 0.0
          %819 = vmatprep.subr.mxu0 0.0
          %820 = vmatpush2.msra.mxu0 0.0
          %821 = vmatprep.mubr.f32.mxu0 0.0
          %822 = vmatmul.mubr.f32.gmra.mxu0 %v750
          %v823 = vpop.f32.mrf.mxu0
          %v824 = vadd.f32 0.0, %v823
          %v825 = vpop.f32.mrf.mxu0
          %826 = vmatprep.mubr.f32.mxu0 0.0
          %827 = vmatmul.mubr.f32.gmra.mxu0 %v752
          %v828 = vpop.f32.mrf.mxu0
          %v829 = vadd.f32 0.0, %v828
          %v830 = vpop.f32.mrf.mxu0
          %831 = vdwg.mxu0
          %v832 = vadd.f32 %v743, %v824
          %v833 = vadd.f32 %v744, %v829
          %s834 = scalar_lea.vmem %s1, 20
          %v835 = vld [vmem:[%s834] sm:$0x7]
          %v836 = vrot.slane %v655, 2
          %v837 = vrot.slane %v656, 2
          %v838 = vsel %vm564, %v836, %v837
          %v839 = vsel %vm396, %v838, 0
          %v841 = vsel %vm396, %v837, 0
          %v844 = vsel %vm401, %v835, 0
          %846 = vmatprep.subr.mxu0 0.0
          %847 = vmatpush1.msra.mxu0 0.0
          %848 = vmatprep.subr.mxu0 0.0
          %849 = vmatpush1.msra.mxu0 0.0
          %850 = vmatprep.subr.mxu0 0.0
          %851 = vmatpush1.msra.mxu0 0.0
          %852 = vmatprep.subr.mxu0 0.0
          %853 = vmatpush1.msra.mxu0 0.0
          %854 = vmatprep.subr.mxu0 0.0
          %855 = vmatpush1.msra.mxu0 0.0
          %856 = vmatprep.subr.mxu0 0.0
          %857 = vmatpush1.msra.mxu0 0.0
          %858 = vmatprep.subr.mxu0 0.0
          %859 = vmatpush1.msra.mxu0 0.0
          %860 = vmatprep.subr.mxu0 0.0
          %861 = vmatpush1.msra.mxu0 0.0
          %862 = vmatprep.subr.mxu0 0.0
          %863 = vmatpush1.msra.mxu0 0.0
          %864 = vmatprep.subr.mxu0 0.0
          %865 = vmatpush1.msra.mxu0 0.0
          %866 = vmatprep.subr.mxu0 0.0
          %867 = vmatpush1.msra.mxu0 0.0
          %868 = vmatprep.subr.mxu0 0.0
          %869 = vmatpush1.msra.mxu0 0.0
          %870 = vmatprep.subr.mxu0 0.0
          %871 = vmatpush1.msra.mxu0 0.0
          %872 = vmatprep.subr.mxu0 0.0
          %873 = vmatpush1.msra.mxu0 0.0
          %874 = vmatprep.subr.mxu0 0.0
          %875 = vmatpush1.msra.mxu0 0.0
          %876 = vmatprep.subr.mxu0 0.0
          %877 = vmatpush1.msra.mxu0 %v844
          %878 = vmatprep.subr.mxu0 0.0
          %879 = vmatpush2.msra.mxu0 0.0
          %880 = vmatprep.subr.mxu0 0.0
          %881 = vmatpush2.msra.mxu0 0.0
          %882 = vmatprep.subr.mxu0 0.0
          %883 = vmatpush2.msra.mxu0 0.0
          %884 = vmatprep.subr.mxu0 0.0
          %885 = vmatpush2.msra.mxu0 0.0
          %886 = vmatprep.subr.mxu0 0.0
          %887 = vmatpush2.msra.mxu0 0.0
          %888 = vmatprep.subr.mxu0 0.0
          %889 = vmatpush2.msra.mxu0 0.0
          %890 = vmatprep.subr.mxu0 0.0
          %891 = vmatpush2.msra.mxu0 0.0
          %892 = vmatprep.subr.mxu0 0.0
          %893 = vmatpush2.msra.mxu0 0.0
          %894 = vmatprep.subr.mxu0 0.0
          %895 = vmatpush2.msra.mxu0 0.0
          %896 = vmatprep.subr.mxu0 0.0
          %897 = vmatpush2.msra.mxu0 0.0
          %898 = vmatprep.subr.mxu0 0.0
          %899 = vmatpush2.msra.mxu0 0.0
          %900 = vmatprep.subr.mxu0 0.0
          %901 = vmatpush2.msra.mxu0 0.0
          %902 = vmatprep.subr.mxu0 0.0
          %903 = vmatpush2.msra.mxu0 0.0
          %904 = vmatprep.subr.mxu0 0.0
          %905 = vmatpush2.msra.mxu0 0.0
          %906 = vmatprep.subr.mxu0 0.0
          %907 = vmatpush2.msra.mxu0 0.0
          %908 = vmatprep.subr.mxu0 0.0
          %909 = vmatpush2.msra.mxu0 0.0
          %910 = vmatprep.mubr.f32.mxu0 0.0
          %911 = vmatmul.mubr.f32.gmra.mxu0 %v839
          %v912 = vpop.f32.mrf.mxu0
          %v913 = vadd.f32 0.0, %v912
          %v914 = vpop.f32.mrf.mxu0
          %915 = vmatprep.mubr.f32.mxu0 0.0
          %916 = vmatmul.mubr.f32.gmra.mxu0 %v841
          %v917 = vpop.f32.mrf.mxu0
          %v918 = vadd.f32 0.0, %v917
          %v919 = vpop.f32.mrf.mxu0
          %920 = vdwg.mxu0
          %v921 = vadd.f32 %v832, %v913
          %v922 = vadd.f32 %v833, %v918
          %s923 = sadd.s32 %s378, 2
          %s924 = smul.u32 %s923, 16
          %s925 = scalar_lea.vmem %s368, %s924
          %v926 = vld [vmem:[%s925] sm:$0xff]
          %v927 = vld [vmem:[%s925 + $0x8] sm:$0xff]
          %s928 = scalar_lea.vmem %s1, 24
          %v929 = vld [vmem:[%s928] sm:$0x7]
          %v931 = vsel %vm396, %v926, 0
          %v934 = vsel %vm396, %v927, 0
          %v937 = vsel %vm401, %v929, 0
          %939 = vmatprep.subr.mxu0 0.0
          %940 = vmatpush1.msra.mxu0 0.0
          %941 = vmatprep.subr.mxu0 0.0
          %942 = vmatpush1.msra.mxu0 0.0
          %943 = vmatprep.subr.mxu0 0.0
          %944 = vmatpush1.msra.mxu0 0.0
          %945 = vmatprep.subr.mxu0 0.0
          %946 = vmatpush1.msra.mxu0 0.0
          %947 = vmatprep.subr.mxu0 0.0
          %948 = vmatpush1.msra.mxu0 0.0
          %949 = vmatprep.subr.mxu0 0.0
          %950 = vmatpush1.msra.mxu0 0.0
          %951 = vmatprep.subr.mxu0 0.0
          %952 = vmatpush1.msra.mxu0 0.0
          %953 = vmatprep.subr.mxu0 0.0
          %954 = vmatpush1.msra.mxu0 0.0
          %955 = vmatprep.subr.mxu0 0.0
          %956 = vmatpush1.msra.mxu0 0.0
          %957 = vmatprep.subr.mxu0 0.0
          %958 = vmatpush1.msra.mxu0 0.0
          %959 = vmatprep.subr.mxu0 0.0
          %960 = vmatpush1.msra.mxu0 0.0
          %961 = vmatprep.subr.mxu0 0.0
          %962 = vmatpush1.msra.mxu0 0.0
          %963 = vmatprep.subr.mxu0 0.0
          %964 = vmatpush1.msra.mxu0 0.0
          %965 = vmatprep.subr.mxu0 0.0
          %966 = vmatpush1.msra.mxu0 0.0
          %967 = vmatprep.subr.mxu0 0.0
          %968 = vmatpush1.msra.mxu0 0.0
          %969 = vmatprep.subr.mxu0 0.0
          %970 = vmatpush1.msra.mxu0 %v937
          %971 = vmatprep.subr.mxu0 0.0
          %972 = vmatpush2.msra.mxu0 0.0
          %973 = vmatprep.subr.mxu0 0.0
          %974 = vmatpush2.msra.mxu0 0.0
          %975 = vmatprep.subr.mxu0 0.0
          %976 = vmatpush2.msra.mxu0 0.0
          %977 = vmatprep.subr.mxu0 0.0
          %978 = vmatpush2.msra.mxu0 0.0
          %979 = vmatprep.subr.mxu0 0.0
          %980 = vmatpush2.msra.mxu0 0.0
          %981 = vmatprep.subr.mxu0 0.0
          %982 = vmatpush2.msra.mxu0 0.0
          %983 = vmatprep.subr.mxu0 0.0
          %984 = vmatpush2.msra.mxu0 0.0
          %985 = vmatprep.subr.mxu0 0.0
          %986 = vmatpush2.msra.mxu0 0.0
          %987 = vmatprep.subr.mxu0 0.0
          %988 = vmatpush2.msra.mxu0 0.0
          %989 = vmatprep.subr.mxu0 0.0
          %990 = vmatpush2.msra.mxu0 0.0
          %991 = vmatprep.subr.mxu0 0.0
          %992 = vmatpush2.msra.mxu0 0.0
          %993 = vmatprep.subr.mxu0 0.0
          %994 = vmatpush2.msra.mxu0 0.0
          %995 = vmatprep.subr.mxu0 0.0
          %996 = vmatpush2.msra.mxu0 0.0
          %997 = vmatprep.subr.mxu0 0.0
          %998 = vmatpush2.msra.mxu0 0.0
          %999 = vmatprep.subr.mxu0 0.0
          %1000 = vmatpush2.msra.mxu0 0.0
          %1001 = vmatprep.subr.mxu0 0.0
          %1002 = vmatpush2.msra.mxu0 0.0
          %1003 = vmatprep.mubr.f32.mxu0 0.0
          %1004 = vmatmul.mubr.f32.gmra.mxu0 %v931
          %v1005 = vpop.f32.mrf.mxu0
          %v1006 = vadd.f32 0.0, %v1005
          %v1007 = vpop.f32.mrf.mxu0
          %1008 = vmatprep.mubr.f32.mxu0 0.0
          %1009 = vmatmul.mubr.f32.gmra.mxu0 %v934
          %v1010 = vpop.f32.mrf.mxu0
          %v1011 = vadd.f32 0.0, %v1010
          %v1012 = vpop.f32.mrf.mxu0
          %1013 = vdwg.mxu0
          %v1014 = vadd.f32 %v921, %v1006
          %v1015 = vadd.f32 %v922, %v1011
          %s1016 = scalar_lea.vmem %s1, 28
          %v1017 = vld [vmem:[%s1016] sm:$0x7]
          %v1018 = vrot.slane %v926, 1
          %v1019 = vrot.slane %v927, 1
          %v1020 = vsel %vm392, %v1018, %v1019
          %v1021 = vsel %vm396, %v1020, 0
          %v1023 = vsel %vm396, %v1019, 0
          %v1026 = vsel %vm401, %v1017, 0
          %1028 = vmatprep.subr.mxu0 0.0
          %1029 = vmatpush1.msra.mxu0 0.0
          %1030 = vmatprep.subr.mxu0 0.0
          %1031 = vmatpush1.msra.mxu0 0.0
          %1032 = vmatprep.subr.mxu0 0.0
          %1033 = vmatpush1.msra.mxu0 0.0
          %1034 = vmatprep.subr.mxu0 0.0
          %1035 = vmatpush1.msra.mxu0 0.0
          %1036 = vmatprep.subr.mxu0 0.0
          %1037 = vmatpush1.msra.mxu0 0.0
          %1038 = vmatprep.subr.mxu0 0.0
          %1039 = vmatpush1.msra.mxu0 0.0
          %1040 = vmatprep.subr.mxu0 0.0
          %1041 = vmatpush1.msra.mxu0 0.0
          %1042 = vmatprep.subr.mxu0 0.0
          %1043 = vmatpush1.msra.mxu0 0.0
          %1044 = vmatprep.subr.mxu0 0.0
          %1045 = vmatpush1.msra.mxu0 0.0
          %1046 = vmatprep.subr.mxu0 0.0
          %1047 = vmatpush1.msra.mxu0 0.0
          %1048 = vmatprep.subr.mxu0 0.0
          %1049 = vmatpush1.msra.mxu0 0.0
          %1050 = vmatprep.subr.mxu0 0.0
          %1051 = vmatpush1.msra.mxu0 0.0
          %1052 = vmatprep.subr.mxu0 0.0
          %1053 = vmatpush1.msra.mxu0 0.0
          %1054 = vmatprep.subr.mxu0 0.0
          %1055 = vmatpush1.msra.mxu0 0.0
          %1056 = vmatprep.subr.mxu0 0.0
          %1057 = vmatpush1.msra.mxu0 0.0
          %1058 = vmatprep.subr.mxu0 0.0
          %1059 = vmatpush1.msra.mxu0 %v1026
          %1060 = vmatprep.subr.mxu0 0.0
          %1061 = vmatpush2.msra.mxu0 0.0
          %1062 = vmatprep.subr.mxu0 0.0
          %1063 = vmatpush2.msra.mxu0 0.0
          %1064 = vmatprep.subr.mxu0 0.0
          %1065 = vmatpush2.msra.mxu0 0.0
          %1066 = vmatprep.subr.mxu0 0.0
          %1067 = vmatpush2.msra.mxu0 0.0
          %1068 = vmatprep.subr.mxu0 0.0
          %1069 = vmatpush2.msra.mxu0 0.0
          %1070 = vmatprep.subr.mxu0 0.0
          %1071 = vmatpush2.msra.mxu0 0.0
          %1072 = vmatprep.subr.mxu0 0.0
          %1073 = vmatpush2.msra.mxu0 0.0
          %1074 = vmatprep.subr.mxu0 0.0
          %1075 = vmatpush2.msra.mxu0 0.0
          %1076 = vmatprep.subr.mxu0 0.0
          %1077 = vmatpush2.msra.mxu0 0.0
          %1078 = vmatprep.subr.mxu0 0.0
          %1079 = vmatpush2.msra.mxu0 0.0
          %1080 = vmatprep.subr.mxu0 0.0
          %1081 = vmatpush2.msra.mxu0 0.0
          %1082 = vmatprep.subr.mxu0 0.0
          %1083 = vmatpush2.msra.mxu0 0.0
          %1084 = vmatprep.subr.mxu0 0.0
          %1085 = vmatpush2.msra.mxu0 0.0
          %1086 = vmatprep.subr.mxu0 0.0
          %1087 = vmatpush2.msra.mxu0 0.0
          %1088 = vmatprep.subr.mxu0 0.0
          %1089 = vmatpush2.msra.mxu0 0.0
          %1090 = vmatprep.subr.mxu0 0.0
          %1091 = vmatpush2.msra.mxu0 0.0
          %1092 = vmatprep.mubr.f32.mxu0 0.0
          %1093 = vmatmul.mubr.f32.gmra.mxu0 %v1021
          %v1094 = vpop.f32.mrf.mxu0
          %v1095 = vadd.f32 0.0, %v1094
          %v1096 = vpop.f32.mrf.mxu0
          %1097 = vmatprep.mubr.f32.mxu0 0.0
          %1098 = vmatmul.mubr.f32.gmra.mxu0 %v1023
          %v1099 = vpop.f32.mrf.mxu0
          %v1100 = vadd.f32 0.0, %v1099
          %v1101 = vpop.f32.mrf.mxu0
          %1102 = vdwg.mxu0
          %v1103 = vadd.f32 %v1014, %v1095
          %v1104 = vadd.f32 %v1015, %v1100
          %s1105 = scalar_lea.vmem %s1, 32
          %v1106 = vld [vmem:[%s1105] sm:$0x7]
          %v1107 = vrot.slane %v926, 2
          %v1108 = vrot.slane %v927, 2
          %v1109 = vsel %vm564, %v1107, %v1108
          %v1110 = vsel %vm396, %v1109, 0
          %v1112 = vsel %vm396, %v1108, 0
          %v1115 = vsel %vm401, %v1106, 0
          %1117 = vmatprep.subr.mxu0 0.0
          %1118 = vmatpush1.msra.mxu0 0.0
          %1119 = vmatprep.subr.mxu0 0.0
          %1120 = vmatpush1.msra.mxu0 0.0
          %1121 = vmatprep.subr.mxu0 0.0
          %1122 = vmatpush1.msra.mxu0 0.0
          %1123 = vmatprep.subr.mxu0 0.0
          %1124 = vmatpush1.msra.mxu0 0.0
          %1125 = vmatprep.subr.mxu0 0.0
          %1126 = vmatpush1.msra.mxu0 0.0
          %1127 = vmatprep.subr.mxu0 0.0
          %1128 = vmatpush1.msra.mxu0 0.0
          %1129 = vmatprep.subr.mxu0 0.0
          %1130 = vmatpush1.msra.mxu0 0.0
          %1131 = vmatprep.subr.mxu0 0.0
          %1132 = vmatpush1.msra.mxu0 0.0
          %1133 = vmatprep.subr.mxu0 0.0
          %1134 = vmatpush1.msra.mxu0 0.0
          %1135 = vmatprep.subr.mxu0 0.0
          %1136 = vmatpush1.msra.mxu0 0.0
          %1137 = vmatprep.subr.mxu0 0.0
          %1138 = vmatpush1.msra.mxu0 0.0
          %1139 = vmatprep.subr.mxu0 0.0
          %1140 = vmatpush1.msra.mxu0 0.0
          %1141 = vmatprep.subr.mxu0 0.0
          %1142 = vmatpush1.msra.mxu0 0.0
          %1143 = vmatprep.subr.mxu0 0.0
          %1144 = vmatpush1.msra.mxu0 0.0
          %1145 = vmatprep.subr.mxu0 0.0
          %1146 = vmatpush1.msra.mxu0 0.0
          %1147 = vmatprep.subr.mxu0 0.0
          %1148 = vmatpush1.msra.mxu0 %v1115
          %1149 = vmatprep.subr.mxu0 0.0
          %1150 = vmatpush2.msra.mxu0 0.0
          %1151 = vmatprep.subr.mxu0 0.0
          %1152 = vmatpush2.msra.mxu0 0.0
          %1153 = vmatprep.subr.mxu0 0.0
          %1154 = vmatpush2.msra.mxu0 0.0
          %1155 = vmatprep.subr.mxu0 0.0
          %1156 = vmatpush2.msra.mxu0 0.0
          %1157 = vmatprep.subr.mxu0 0.0
          %1158 = vmatpush2.msra.mxu0 0.0
          %1159 = vmatprep.subr.mxu0 0.0
          %1160 = vmatpush2.msra.mxu0 0.0
          %1161 = vmatprep.subr.mxu0 0.0
          %1162 = vmatpush2.msra.mxu0 0.0
          %1163 = vmatprep.subr.mxu0 0.0
          %1164 = vmatpush2.msra.mxu0 0.0
          %1165 = vmatprep.subr.mxu0 0.0
          %1166 = vmatpush2.msra.mxu0 0.0
          %1167 = vmatprep.subr.mxu0 0.0
          %1168 = vmatpush2.msra.mxu0 0.0
          %1169 = vmatprep.subr.mxu0 0.0
          %1170 = vmatpush2.msra.mxu0 0.0
          %1171 = vmatprep.subr.mxu0 0.0
          %1172 = vmatpush2.msra.mxu0 0.0
          %1173 = vmatprep.subr.mxu0 0.0
          %1174 = vmatpush2.msra.mxu0 0.0
          %1175 = vmatprep.subr.mxu0 0.0
          %1176 = vmatpush2.msra.mxu0 0.0
          %1177 = vmatprep.subr.mxu0 0.0
          %1178 = vmatpush2.msra.mxu0 0.0
          %1179 = vmatprep.subr.mxu0 0.0
          %1180 = vmatpush2.msra.mxu0 0.0
          %1181 = vmatprep.mubr.f32.mxu0 0.0
          %1182 = vmatmul.mubr.f32.gmra.mxu0 %v1110
          %v1183 = vpop.f32.mrf.mxu0
          %v1184 = vadd.f32 0.0, %v1183
          %v1185 = vpop.f32.mrf.mxu0
          %1186 = vmatprep.mubr.f32.mxu0 0.0
          %1187 = vmatmul.mubr.f32.gmra.mxu0 %v1112
          %v1188 = vpop.f32.mrf.mxu0
          %v1189 = vadd.f32 0.0, %v1188
          %v1190 = vpop.f32.mrf.mxu0
          %1191 = vdwg.mxu0
          %v1192 = vadd.f32 %v1103, %v1184
          %v1193 = vadd.f32 %v1104, %v1189
          %v1194 = vld [vmem:[%s2] sm:$0x1]
          %v1196 = vlaneseq
          %v1197 = vshrl.u32 %v1196, 7
          %v1198 = vsub.s32 0, %v1197
          %v1199 = vrot.slane %v1194, %v1198
          %v1201 = vadd.f32 %v1192, %v1199
          %v1202 = vadd.f32 %v1193, %v1199
          %vm1203 = vcmp.gt.f32.partialorder %v1201, 0.0
          %vm1204 = vcmp.gt.f32.partialorder %v1202, 0.0
          %v1205 = vstv %s374
          %v1206 = vmul.f32 %v1205, %v1201
          %v1207 = vmul.f32 %v1205, %v1202
          %v1208 = vsel %vm1203, %v1201, %v1206
          %v1209 = vsel %vm1204, %v1202, %v1207
          %s1210 = scalar_lea.vmem [#allocation2], %s383
          %vm1211 = vcmask 80896
          %1212 = vst.msk [vmem:[%s1210] sm:$0xff] %vm1211, %v1208
          %vm1213 = vcmask 78848
          %1214 = vst.msk [vmem:[%s1210 + $0x8] sm:$0x3f] %vm1213, %v1209
        $region69: #{pnet_forward.1} parent=59 // loop_footer
          %s382 = sadd.s32 1, %s378
        $region70: #{pnet_forward.1} parent=59 // loop_footer_branch
          %377 = sbr.rel target = $region66
        $region71: #{pnet_forward.1} parent=59 // loop_exit
          _
        %v1215 = vlaneseq
        %v1216 = vshrl.u32 %v1215, 7
        %v1217 = vlaneseq
        %v1218 = vand.u32 %v1217, 127
        %v1219 = vmul.u32 %v1216, 2
        %vm1220 = vcmp.eq.s32.totalorder %v1218, %v1219
        %v1221 = vsel %vm1220, 1, 0
        %v1222 = vcvt.s32.f32 %v1221
        %v1223 = vadd.s32 %v1219, 1
        %vm1224 = vcmp.eq.s32.totalorder %v1218, %v1223
        %v1225 = vsel %vm1224, 1, 0
        %v1226 = vcvt.s32.f32 %v1225
        loop: start=0, step=1, limit=7
        $region72: #{pnet_forward.1} parent=59 // loop_pre_header
          _
        $region73: #{pnet_forward.1} parent=59 // loop_header
          %s1228 = sphi 0, %s1232
          %p1229 = scmp.ge.s32.totalorder %s1228, 7
        $region74: #{pnet_forward.1} parent=59 // loop_header_branch
          %1231 = sbr.rel (%p1229) target = $region78
        $region75: #{pnet_forward.1} parent=59 // loop_body
          %s1233 = smul.u32 %s1228, 2
          %s1234 = smul.u32 %s1233, 16
          %s1235 = scalar_lea.vmem [#allocation2], %s1234
          %v1236 = vld [vmem:[%s1235] sm:$0xff]
          %v1237 = vld [vmem:[%s1235 + $0x8] sm:$0x3f]
          %s1238 = sadd.s32 %s1233, 1
          %s1239 = smul.u32 %s1238, 16
          %s1240 = scalar_lea.vmem [#allocation2], %s1239
          %v1241 = vld [vmem:[%s1240] sm:$0xff]
          %v1242 = vld [vmem:[%s1240 + $0x8] sm:$0x3f]
          %v1243 = vmax.f32 %v1236, %v1241
          %v1244 = vmax.f32 %v1237, %v1242
          %vm1245 = vcmask 113664
          %v1247 = vsel %vm1245, %v1222, 0
          %vm1249 = vcmask 1045504
          %v1251 = vsel %vm1249, %v1244, 0
          %1253 = vmatprep.subr.mxu0 0.0
          %1254 = vmatpush1.msra.mxu0 0.0
          %1255 = vmatprep.subr.mxu0 0.0
          %1256 = vmatpush1.msra.mxu0 0.0
          %1257 = vmatprep.subr.mxu0 0.0
          %1258 = vmatpush1.msra.mxu0 0.0
          %1259 = vmatprep.subr.mxu0 0.0
          %1260 = vmatpush1.msra.mxu0 0.0
          %1261 = vmatprep.subr.mxu0 0.0
          %1262 = vmatpush1.msra.mxu0 0.0
          %1263 = vmatprep.subr.mxu0 0.0
          %1264 = vmatpush1.msra.mxu0 0.0
          %1265 = vmatprep.subr.mxu0 0.0
          %1266 = vmatpush1.msra.mxu0 0.0
          %1267 = vmatprep.subr.mxu0 0.0
          %1268 = vmatpush1.msra.mxu0 0.0
          %1269 = vmatprep.subr.mxu0 0.0
          %1270 = vmatpush1.msra.mxu0 0.0
          %1271 = vmatprep.subr.mxu0 0.0
          %1272 = vmatpush1.msra.mxu0 0.0
          %1273 = vmatprep.subr.mxu0 0.0
          %1274 = vmatpush1.msra.mxu0 0.0
          %1275 = vmatprep.subr.mxu0 0.0
          %1276 = vmatpush1.msra.mxu0 0.0
          %1277 = vmatprep.subr.mxu0 0.0
          %1278 = vmatpush1.msra.mxu0 0.0
          %1279 = vmatprep.subr.mxu0 0.0
          %1280 = vmatpush1.msra.mxu0 0.0
          %1281 = vmatprep.subr.mxu0 0.0
          %1282 = vmatpush1.msra.mxu0 %v1251
          %1283 = vmatprep.subr.mxu0 0.0
          %1284 = vmatpush1.msra.mxu0 %v1243
          %1285 = vmatprep.subr.mxu0 0.0
          %1286 = vmatpush2.msra.mxu0 0.0
          %1287 = vmatprep.subr.mxu0 0.0
          %1288 = vmatpush2.msra.mxu0 0.0
          %1289 = vmatprep.subr.mxu0 0.0
          %1290 = vmatpush2.msra.mxu0 0.0
          %1291 = vmatprep.subr.mxu0 0.0
          %1292 = vmatpush2.msra.mxu0 0.0
          %1293 = vmatprep.subr.mxu0 0.0
          %1294 = vmatpush2.msra.mxu0 0.0
          %1295 = vmatprep.subr.mxu0 0.0
          %1296 = vmatpush2.msra.mxu0 0.0
          %1297 = vmatprep.subr.mxu0 0.0
          %1298 = vmatpush2.msra.mxu0 0.0
          %1299 = vmatprep.subr.mxu0 0.0
          %1300 = vmatpush2.msra.mxu0 0.0
          %1301 = vmatprep.subr.mxu0 0.0
          %1302 = vmatpush2.msra.mxu0 0.0
          %1303 = vmatprep.subr.mxu0 0.0
          %1304 = vmatpush2.msra.mxu0 0.0
          %1305 = vmatprep.subr.mxu0 0.0
          %1306 = vmatpush2.msra.mxu0 0.0
          %1307 = vmatprep.subr.mxu0 0.0
          %1308 = vmatpush2.msra.mxu0 0.0
          %1309 = vmatprep.subr.mxu0 0.0
          %1310 = vmatpush2.msra.mxu0 0.0
          %1311 = vmatprep.subr.mxu0 0.0
          %1312 = vmatpush2.msra.mxu0 0.0
          %1313 = vmatprep.subr.mxu0 0.0
          %1314 = vmatpush2.msra.mxu0 0.0
          %1315 = vmatprep.subr.mxu0 0.0
          %1316 = vmatpush2.msra.mxu0 0.0
          %1317 = vmatprep.mubr.f32.mxu0 0.0
          %1318 = vmatmul.mubr.f32.gmra.mxu0 %v1247
          %v1319 = vpop.f32.mrf.mxu0
          %v1320 = vadd.f32 0.0, %v1319
          %v1321 = vpop.f32.mrf.mxu0
          %1322 = vdwg.mxu0
          %v1324 = vsel %vm1245, %v1226, 0
          %1326 = vmatprep.subr.mxu0 0.0
          %1327 = vmatpush1.msra.mxu0 0.0
          %1328 = vmatprep.subr.mxu0 0.0
          %1329 = vmatpush1.msra.mxu0 0.0
          %1330 = vmatprep.subr.mxu0 0.0
          %1331 = vmatpush1.msra.mxu0 0.0
          %1332 = vmatprep.subr.mxu0 0.0
          %1333 = vmatpush1.msra.mxu0 0.0
          %1334 = vmatprep.subr.mxu0 0.0
          %1335 = vmatpush1.msra.mxu0 0.0
          %1336 = vmatprep.subr.mxu0 0.0
          %1337 = vmatpush1.msra.mxu0 0.0
          %1338 = vmatprep.subr.mxu0 0.0
          %1339 = vmatpush1.msra.mxu0 0.0
          %1340 = vmatprep.subr.mxu0 0.0
          %1341 = vmatpush1.msra.mxu0 0.0
          %1342 = vmatprep.subr.mxu0 0.0
          %1343 = vmatpush1.msra.mxu0 0.0
          %1344 = vmatprep.subr.mxu0 0.0
          %1345 = vmatpush1.msra.mxu0 0.0
          %1346 = vmatprep.subr.mxu0 0.0
          %1347 = vmatpush1.msra.mxu0 0.0
          %1348 = vmatprep.subr.mxu0 0.0
          %1349 = vmatpush1.msra.mxu0 0.0
          %1350 = vmatprep.subr.mxu0 0.0
          %1351 = vmatpush1.msra.mxu0 0.0
          %1352 = vmatprep.subr.mxu0 0.0
          %1353 = vmatpush1.msra.mxu0 0.0
          %1354 = vmatprep.subr.mxu0 0.0
          %1355 = vmatpush1.msra.mxu0 %v1251
          %1356 = vmatprep.subr.mxu0 0.0
          %1357 = vmatpush1.msra.mxu0 %v1243
          %1358 = vmatprep.subr.mxu0 0.0
          %1359 = vmatpush2.msra.mxu0 0.0
          %1360 = vmatprep.subr.mxu0 0.0
          %1361 = vmatpush2.msra.mxu0 0.0
          %1362 = vmatprep.subr.mxu0 0.0
          %1363 = vmatpush2.msra.mxu0 0.0
          %1364 = vmatprep.subr.mxu0 0.0
          %1365 = vmatpush2.msra.mxu0 0.0
          %1366 = vmatprep.subr.mxu0 0.0
          %1367 = vmatpush2.msra.mxu0 0.0
          %1368 = vmatprep.subr.mxu0 0.0
          %1369 = vmatpush2.msra.mxu0 0.0
          %1370 = vmatprep.subr.mxu0 0.0
          %1371 = vmatpush2.msra.mxu0 0.0
          %1372 = vmatprep.subr.mxu0 0.0
          %1373 = vmatpush2.msra.mxu0 0.0
          %1374 = vmatprep.subr.mxu0 0.0
          %1375 = vmatpush2.msra.mxu0 0.0
          %1376 = vmatprep.subr.mxu0 0.0
          %1377 = vmatpush2.msra.mxu0 0.0
          %1378 = vmatprep.subr.mxu0 0.0
          %1379 = vmatpush2.msra.mxu0 0.0
          %1380 = vmatprep.subr.mxu0 0.0
          %1381 = vmatpush2.msra.mxu0 0.0
          %1382 = vmatprep.subr.mxu0 0.0
          %1383 = vmatpush2.msra.mxu0 0.0
          %1384 = vmatprep.subr.mxu0 0.0
          %1385 = vmatpush2.msra.mxu0 0.0
          %1386 = vmatprep.subr.mxu0 0.0
          %1387 = vmatpush2.msra.mxu0 0.0
          %1388 = vmatprep.subr.mxu0 0.0
          %1389 = vmatpush2.msra.mxu0 0.0
          %1390 = vmatprep.mubr.f32.mxu0 0.0
          %1391 = vmatmul.mubr.f32.gmra.mxu0 %v1324
          %v1392 = vpop.f32.mrf.mxu0
          %v1393 = vadd.f32 0.0, %v1392
          %v1394 = vpop.f32.mrf.mxu0
          %1395 = vdwg.mxu0
          %v1396 = vmax.f32 %v1320, %v1393
          %s1397 = smul.u32 %s1228, 8
          %s1398 = scalar_lea.vmem [#allocation3], %s1397
          %vm1399 = vcmask 79872
          %1400 = vst.msk [vmem:[%s1398] sm:$0x7f] %vm1399, %v1396
        $region76: #{pnet_forward.1} parent=59 // loop_footer
          %s1232 = sadd.s32 1, %s1228
        $region77: #{pnet_forward.1} parent=59 // loop_footer_branch
          %1227 = sbr.rel target = $region73
        $region78: #{pnet_forward.1} parent=59 // loop_exit
          _
        loop: start=0, step=1, limit=5
        $region79: #{pnet_forward.1} parent=59 // loop_pre_header
          _
        $region80: #{pnet_forward.1} parent=59 // loop_header
          %s1402 = sphi 0, %s1406
          %p1403 = scmp.ge.s32.totalorder %s1402, 5
        $region81: #{pnet_forward.1} parent=59 // loop_header_branch
          %1405 = sbr.rel (%p1403) target = $region85
        $region82: #{pnet_forward.1} parent=59 // loop_body
          %s1407 = smul.u32 %s1402, 8
          %s1408 = scalar_lea.vmem [#allocation3], %s1407
          %v1409 = vld [vmem:[%s1408] sm:$0x7f]
          %v1410 = vld [vmem:[%s3] sm:$0xff]
          %v1411 = vld [vmem:[%s3 + $0x8] sm:$0x3]
          %s1412 = scalar_lea.vmem %s3, 16
          %v1413 = vld [vmem:[%s1412] sm:$0xff]
          %v1414 = vld [vmem:[%s1412 + $0x8] sm:$0x3]
          %v1416 = vrot.slane %v1409, 1
          %vm1417 = vcmask 80896
          %v1418 = vsel %vm1417, %v1416, 0
          %vm1420 = vcmask 1041408
          %v1422 = vsel %vm1420, %v1414, 0
          %1424 = vmatprep.subr.mxu0 0.0
          %1425 = vmatpush1.msra.mxu0 0.0
          %1426 = vmatprep.subr.mxu0 0.0
          %1427 = vmatpush1.msra.mxu0 0.0
          %1428 = vmatprep.subr.mxu0 0.0
          %1429 = vmatpush1.msra.mxu0 0.0
          %1430 = vmatprep.subr.mxu0 0.0
          %1431 = vmatpush1.msra.mxu0 0.0
          %1432 = vmatprep.subr.mxu0 0.0
          %1433 = vmatpush1.msra.mxu0 0.0
          %1434 = vmatprep.subr.mxu0 0.0
          %1435 = vmatpush1.msra.mxu0 0.0
          %1436 = vmatprep.subr.mxu0 0.0
          %1437 = vmatpush1.msra.mxu0 0.0
          %1438 = vmatprep.subr.mxu0 0.0
          %1439 = vmatpush1.msra.mxu0 0.0
          %1440 = vmatprep.subr.mxu0 0.0
          %1441 = vmatpush1.msra.mxu0 0.0
          %1442 = vmatprep.subr.mxu0 0.0
          %1443 = vmatpush1.msra.mxu0 0.0
          %1444 = vmatprep.subr.mxu0 0.0
          %1445 = vmatpush1.msra.mxu0 0.0
          %1446 = vmatprep.subr.mxu0 0.0
          %1447 = vmatpush1.msra.mxu0 0.0
          %1448 = vmatprep.subr.mxu0 0.0
          %1449 = vmatpush1.msra.mxu0 0.0
          %1450 = vmatprep.subr.mxu0 0.0
          %1451 = vmatpush1.msra.mxu0 0.0
          %1452 = vmatprep.subr.mxu0 0.0
          %1453 = vmatpush1.msra.mxu0 %v1422
          %1454 = vmatprep.subr.mxu0 0.0
          %1455 = vmatpush1.msra.mxu0 %v1413
          %1456 = vmatprep.subr.mxu0 0.0
          %1457 = vmatpush2.msra.mxu0 0.0
          %1458 = vmatprep.subr.mxu0 0.0
          %1459 = vmatpush2.msra.mxu0 0.0
          %1460 = vmatprep.subr.mxu0 0.0
          %1461 = vmatpush2.msra.mxu0 0.0
          %1462 = vmatprep.subr.mxu0 0.0
          %1463 = vmatpush2.msra.mxu0 0.0
          %1464 = vmatprep.subr.mxu0 0.0
          %1465 = vmatpush2.msra.mxu0 0.0
          %1466 = vmatprep.subr.mxu0 0.0
          %1467 = vmatpush2.msra.mxu0 0.0
          %1468 = vmatprep.subr.mxu0 0.0
          %1469 = vmatpush2.msra.mxu0 0.0
          %1470 = vmatprep.subr.mxu0 0.0
          %1471 = vmatpush2.msra.mxu0 0.0
          %1472 = vmatprep.subr.mxu0 0.0
          %1473 = vmatpush2.msra.mxu0 0.0
          %1474 = vmatprep.subr.mxu0 0.0
          %1475 = vmatpush2.msra.mxu0 0.0
          %1476 = vmatprep.subr.mxu0 0.0
          %1477 = vmatpush2.msra.mxu0 0.0
          %1478 = vmatprep.subr.mxu0 0.0
          %1479 = vmatpush2.msra.mxu0 0.0
          %1480 = vmatprep.subr.mxu0 0.0
          %1481 = vmatpush2.msra.mxu0 0.0
          %1482 = vmatprep.subr.mxu0 0.0
          %1483 = vmatpush2.msra.mxu0 0.0
          %1484 = vmatprep.subr.mxu0 0.0
          %1485 = vmatpush2.msra.mxu0 0.0
          %1486 = vmatprep.subr.mxu0 0.0
          %1487 = vmatpush2.msra.mxu0 0.0
          %1488 = vmatprep.mubr.f32.mxu0 0.0
          %1489 = vmatmul.mubr.f32.gmra.mxu0 %v1418
          %v1490 = vpop.f32.mrf.mxu0
          %v1491 = vadd.f32 0.0, %v1490
          %v1492 = vpop.f32.mrf.mxu0
          %1493 = vdwg.mxu0
          %v1494 = vsel %vm1417, %v1409, 0
          %v1497 = vsel %vm1420, %v1411, 0
          %1499 = vmatprep.subr.mxu0 0.0
          %1500 = vmatpush1.msra.mxu0 0.0
          %1501 = vmatprep.subr.mxu0 0.0
          %1502 = vmatpush1.msra.mxu0 0.0
          %1503 = vmatprep.subr.mxu0 0.0
          %1504 = vmatpush1.msra.mxu0 0.0
          %1505 = vmatprep.subr.mxu0 0.0
          %1506 = vmatpush1.msra.mxu0 0.0
          %1507 = vmatprep.subr.mxu0 0.0
          %1508 = vmatpush1.msra.mxu0 0.0
          %1509 = vmatprep.subr.mxu0 0.0
          %1510 = vmatpush1.msra.mxu0 0.0
          %1511 = vmatprep.subr.mxu0 0.0
          %1512 = vmatpush1.msra.mxu0 0.0
          %1513 = vmatprep.subr.mxu0 0.0
          %1514 = vmatpush1.msra.mxu0 0.0
          %1515 = vmatprep.subr.mxu0 0.0
          %1516 = vmatpush1.msra.mxu0 0.0
          %1517 = vmatprep.subr.mxu0 0.0
          %1518 = vmatpush1.msra.mxu0 0.0
          %1519 = vmatprep.subr.mxu0 0.0
          %1520 = vmatpush1.msra.mxu0 0.0
          %1521 = vmatprep.subr.mxu0 0.0
          %1522 = vmatpush1.msra.mxu0 0.0
          %1523 = vmatprep.subr.mxu0 0.0
          %1524 = vmatpush1.msra.mxu0 0.0
          %1525 = vmatprep.subr.mxu0 0.0
          %1526 = vmatpush1.msra.mxu0 0.0
          %1527 = vmatprep.subr.mxu0 0.0
          %1528 = vmatpush1.msra.mxu0 %v1497
          %1529 = vmatprep.subr.mxu0 0.0
          %1530 = vmatpush1.msra.mxu0 %v1410
          %1531 = vmatprep.subr.mxu0 0.0
          %1532 = vmatpush2.msra.mxu0 0.0
          %1533 = vmatprep.subr.mxu0 0.0
          %1534 = vmatpush2.msra.mxu0 0.0
          %1535 = vmatprep.subr.mxu0 0.0
          %1536 = vmatpush2.msra.mxu0 0.0
          %1537 = vmatprep.subr.mxu0 0.0
          %1538 = vmatpush2.msra.mxu0 0.0
          %1539 = vmatprep.subr.mxu0 0.0
          %1540 = vmatpush2.msra.mxu0 0.0
          %1541 = vmatprep.subr.mxu0 0.0
          %1542 = vmatpush2.msra.mxu0 0.0
          %1543 = vmatprep.subr.mxu0 0.0
          %1544 = vmatpush2.msra.mxu0 0.0
          %1545 = vmatprep.subr.mxu0 0.0
          %1546 = vmatpush2.msra.mxu0 0.0
          %1547 = vmatprep.subr.mxu0 0.0
          %1548 = vmatpush2.msra.mxu0 0.0
          %1549 = vmatprep.subr.mxu0 0.0
          %1550 = vmatpush2.msra.mxu0 0.0
          %1551 = vmatprep.subr.mxu0 0.0
          %1552 = vmatpush2.msra.mxu0 0.0
          %1553 = vmatprep.subr.mxu0 0.0
          %1554 = vmatpush2.msra.mxu0 0.0
          %1555 = vmatprep.subr.mxu0 0.0
          %1556 = vmatpush2.msra.mxu0 0.0
          %1557 = vmatprep.subr.mxu0 0.0
          %1558 = vmatpush2.msra.mxu0 0.0
          %1559 = vmatprep.subr.mxu0 0.0
          %1560 = vmatpush2.msra.mxu0 0.0
          %1561 = vmatprep.subr.mxu0 0.0
          %1562 = vmatpush2.msra.mxu0 0.0
          %1563 = vmatprep.mubr.f32.mxu0 0.0
          %1564 = vmatmul.mubr.f32.gmra.mxu0 %v1494
          %v1565 = vpop.f32.mrf.mxu0
          %v1566 = vadd.f32 %v1491, %v1565
          %v1567 = vpop.f32.mrf.mxu0
          %1568 = vdwg.mxu0
          %s1569 = scalar_lea.vmem %s3, 32
          %v1570 = vld [vmem:[%s1569] sm:$0xff]
          %v1571 = vld [vmem:[%s1569 + $0x8] sm:$0x3]
          %v1572 = vrot.slane %v1409, 2
          %v1573 = vsel %vm1417, %v1572, 0
          %v1576 = vsel %vm1420, %v1571, 0
          %1578 = vmatprep.subr.mxu0 0.0
          %1579 = vmatpush1.msra.mxu0 0.0
          %1580 = vmatprep.subr.mxu0 0.0
          %1581 = vmatpush1.msra.mxu0 0.0
          %1582 = vmatprep.subr.mxu0 0.0
          %1583 = vmatpush1.msra.mxu0 0.0
          %1584 = vmatprep.subr.mxu0 0.0
          %1585 = vmatpush1.msra.mxu0 0.0
          %1586 = vmatprep.subr.mxu0 0.0
          %1587 = vmatpush1.msra.mxu0 0.0
          %1588 = vmatprep.subr.mxu0 0.0
          %1589 = vmatpush1.msra.mxu0 0.0
          %1590 = vmatprep.subr.mxu0 0.0
          %1591 = vmatpush1.msra.mxu0 0.0
          %1592 = vmatprep.subr.mxu0 0.0
          %1593 = vmatpush1.msra.mxu0 0.0
          %1594 = vmatprep.subr.mxu0 0.0
          %1595 = vmatpush1.msra.mxu0 0.0
          %1596 = vmatprep.subr.mxu0 0.0
          %1597 = vmatpush1.msra.mxu0 0.0
          %1598 = vmatprep.subr.mxu0 0.0
          %1599 = vmatpush1.msra.mxu0 0.0
          %1600 = vmatprep.subr.mxu0 0.0
          %1601 = vmatpush1.msra.mxu0 0.0
          %1602 = vmatprep.subr.mxu0 0.0
          %1603 = vmatpush1.msra.mxu0 0.0
          %1604 = vmatprep.subr.mxu0 0.0
          %1605 = vmatpush1.msra.mxu0 0.0
          %1606 = vmatprep.subr.mxu0 0.0
          %1607 = vmatpush1.msra.mxu0 %v1576
          %1608 = vmatprep.subr.mxu0 0.0
          %1609 = vmatpush1.msra.mxu0 %v1570
          %1610 = vmatprep.subr.mxu0 0.0
          %1611 = vmatpush2.msra.mxu0 0.0
          %1612 = vmatprep.subr.mxu0 0.0
          %1613 = vmatpush2.msra.mxu0 0.0
          %1614 = vmatprep.subr.mxu0 0.0
          %1615 = vmatpush2.msra.mxu0 0.0
          %1616 = vmatprep.subr.mxu0 0.0
          %1617 = vmatpush2.msra.mxu0 0.0
          %1618 = vmatprep.subr.mxu0 0.0
          %1619 = vmatpush2.msra.mxu0 0.0
          %1620 = vmatprep.subr.mxu0 0.0
          %1621 = vmatpush2.msra.mxu0 0.0
          %1622 = vmatprep.subr.mxu0 0.0
          %1623 = vmatpush2.msra.mxu0 0.0
          %1624 = vmatprep.subr.mxu0 0.0
          %1625 = vmatpush2.msra.mxu0 0.0
          %1626 = vmatprep.subr.mxu0 0.0
          %1627 = vmatpush2.msra.mxu0 0.0
          %1628 = vmatprep.subr.mxu0 0.0
          %1629 = vmatpush2.msra.mxu0 0.0
          %1630 = vmatprep.subr.mxu0 0.0
          %1631 = vmatpush2.msra.mxu0 0.0
          %1632 = vmatprep.subr.mxu0 0.0
          %1633 = vmatpush2.msra.mxu0 0.0
          %1634 = vmatprep.subr.mxu0 0.0
          %1635 = vmatpush2.msra.mxu0 0.0
          %1636 = vmatprep.subr.mxu0 0.0
          %1637 = vmatpush2.msra.mxu0 0.0
          %1638 = vmatprep.subr.mxu0 0.0
          %1639 = vmatpush2.msra.mxu0 0.0
          %1640 = vmatprep.subr.mxu0 0.0
          %1641 = vmatpush2.msra.mxu0 0.0
          %1642 = vmatprep.mubr.f32.mxu0 0.0
          %1643 = vmatmul.mubr.f32.gmra.mxu0 %v1573
          %v1644 = vpop.f32.mrf.mxu0
          %v1645 = vadd.f32 0.0, %v1644
          %v1646 = vpop.f32.mrf.mxu0
          %1647 = vdwg.mxu0
          %v1648 = vadd.f32 %v1566, %v1645
          %s1649 = sadd.s32 %s1402, 1
          %s1650 = smul.u32 %s1649, 8
          %s1651 = scalar_lea.vmem [#allocation3], %s1650
          %v1652 = vld [vmem:[%s1651] sm:$0x7f]
          %s1653 = scalar_lea.vmem %s3, 48
          %v1654 = vld [vmem:[%s1653] sm:$0xff]
          %v1655 = vld [vmem:[%s1653 + $0x8] sm:$0x3]
          %v1657 = vsel %vm1417, %v1652, 0
          %v1660 = vsel %vm1420, %v1655, 0
          %1662 = vmatprep.subr.mxu0 0.0
          %1663 = vmatpush1.msra.mxu0 0.0
          %1664 = vmatprep.subr.mxu0 0.0
          %1665 = vmatpush1.msra.mxu0 0.0
          %1666 = vmatprep.subr.mxu0 0.0
          %1667 = vmatpush1.msra.mxu0 0.0
          %1668 = vmatprep.subr.mxu0 0.0
          %1669 = vmatpush1.msra.mxu0 0.0
          %1670 = vmatprep.subr.mxu0 0.0
          %1671 = vmatpush1.msra.mxu0 0.0
          %1672 = vmatprep.subr.mxu0 0.0
          %1673 = vmatpush1.msra.mxu0 0.0
          %1674 = vmatprep.subr.mxu0 0.0
          %1675 = vmatpush1.msra.mxu0 0.0
          %1676 = vmatprep.subr.mxu0 0.0
          %1677 = vmatpush1.msra.mxu0 0.0
          %1678 = vmatprep.subr.mxu0 0.0
          %1679 = vmatpush1.msra.mxu0 0.0
          %1680 = vmatprep.subr.mxu0 0.0
          %1681 = vmatpush1.msra.mxu0 0.0
          %1682 = vmatprep.subr.mxu0 0.0
          %1683 = vmatpush1.msra.mxu0 0.0
          %1684 = vmatprep.subr.mxu0 0.0
          %1685 = vmatpush1.msra.mxu0 0.0
          %1686 = vmatprep.subr.mxu0 0.0
          %1687 = vmatpush1.msra.mxu0 0.0
          %1688 = vmatprep.subr.mxu0 0.0
          %1689 = vmatpush1.msra.mxu0 0.0
          %1690 = vmatprep.subr.mxu0 0.0
          %1691 = vmatpush1.msra.mxu0 %v1660
          %1692 = vmatprep.subr.mxu0 0.0
          %1693 = vmatpush1.msra.mxu0 %v1654
          %1694 = vmatprep.subr.mxu0 0.0
          %1695 = vmatpush2.msra.mxu0 0.0
          %1696 = vmatprep.subr.mxu0 0.0
          %1697 = vmatpush2.msra.mxu0 0.0
          %1698 = vmatprep.subr.mxu0 0.0
          %1699 = vmatpush2.msra.mxu0 0.0
          %1700 = vmatprep.subr.mxu0 0.0
          %1701 = vmatpush2.msra.mxu0 0.0
          %1702 = vmatprep.subr.mxu0 0.0
          %1703 = vmatpush2.msra.mxu0 0.0
          %1704 = vmatprep.subr.mxu0 0.0
          %1705 = vmatpush2.msra.mxu0 0.0
          %1706 = vmatprep.subr.mxu0 0.0
          %1707 = vmatpush2.msra.mxu0 0.0
          %1708 = vmatprep.subr.mxu0 0.0
          %1709 = vmatpush2.msra.mxu0 0.0
          %1710 = vmatprep.subr.mxu0 0.0
          %1711 = vmatpush2.msra.mxu0 0.0
          %1712 = vmatprep.subr.mxu0 0.0
          %1713 = vmatpush2.msra.mxu0 0.0
          %1714 = vmatprep.subr.mxu0 0.0
          %1715 = vmatpush2.msra.mxu0 0.0
          %1716 = vmatprep.subr.mxu0 0.0
          %1717 = vmatpush2.msra.mxu0 0.0
          %1718 = vmatprep.subr.mxu0 0.0
          %1719 = vmatpush2.msra.mxu0 0.0
          %1720 = vmatprep.subr.mxu0 0.0
          %1721 = vmatpush2.msra.mxu0 0.0
          %1722 = vmatprep.subr.mxu0 0.0
          %1723 = vmatpush2.msra.mxu0 0.0
          %1724 = vmatprep.subr.mxu0 0.0
          %1725 = vmatpush2.msra.mxu0 0.0
          %1726 = vmatprep.mubr.f32.mxu0 0.0
          %1727 = vmatmul.mubr.f32.gmra.mxu0 %v1657
          %v1728 = vpop.f32.mrf.mxu0
          %v1729 = vadd.f32 0.0, %v1728
          %v1730 = vpop.f32.mrf.mxu0
          %1731 = vdwg.mxu0
          %v1732 = vadd.f32 %v1648, %v1729
          %s1733 = scalar_lea.vmem %s3, 64
          %v1734 = vld [vmem:[%s1733] sm:$0xff]
          %v1735 = vld [vmem:[%s1733 + $0x8] sm:$0x3]
          %v1736 = vrot.slane %v1652, 1
          %v1737 = vsel %vm1417, %v1736, 0
          %v1740 = vsel %vm1420, %v1735, 0
          %1742 = vmatprep.subr.mxu0 0.0
          %1743 = vmatpush1.msra.mxu0 0.0
          %1744 = vmatprep.subr.mxu0 0.0
          %1745 = vmatpush1.msra.mxu0 0.0
          %1746 = vmatprep.subr.mxu0 0.0
          %1747 = vmatpush1.msra.mxu0 0.0
          %1748 = vmatprep.subr.mxu0 0.0
          %1749 = vmatpush1.msra.mxu0 0.0
          %1750 = vmatprep.subr.mxu0 0.0
          %1751 = vmatpush1.msra.mxu0 0.0
          %1752 = vmatprep.subr.mxu0 0.0
          %1753 = vmatpush1.msra.mxu0 0.0
          %1754 = vmatprep.subr.mxu0 0.0
          %1755 = vmatpush1.msra.mxu0 0.0
          %1756 = vmatprep.subr.mxu0 0.0
          %1757 = vmatpush1.msra.mxu0 0.0
          %1758 = vmatprep.subr.mxu0 0.0
          %1759 = vmatpush1.msra.mxu0 0.0
          %1760 = vmatprep.subr.mxu0 0.0
          %1761 = vmatpush1.msra.mxu0 0.0
          %1762 = vmatprep.subr.mxu0 0.0
          %1763 = vmatpush1.msra.mxu0 0.0
          %1764 = vmatprep.subr.mxu0 0.0
          %1765 = vmatpush1.msra.mxu0 0.0
          %1766 = vmatprep.subr.mxu0 0.0
          %1767 = vmatpush1.msra.mxu0 0.0
          %1768 = vmatprep.subr.mxu0 0.0
          %1769 = vmatpush1.msra.mxu0 0.0
          %1770 = vmatprep.subr.mxu0 0.0
          %1771 = vmatpush1.msra.mxu0 %v1740
          %1772 = vmatprep.subr.mxu0 0.0
          %1773 = vmatpush1.msra.mxu0 %v1734
          %1774 = vmatprep.subr.mxu0 0.0
          %1775 = vmatpush2.msra.mxu0 0.0
          %1776 = vmatprep.subr.mxu0 0.0
          %1777 = vmatpush2.msra.mxu0 0.0
          %1778 = vmatprep.subr.mxu0 0.0
          %1779 = vmatpush2.msra.mxu0 0.0
          %1780 = vmatprep.subr.mxu0 0.0
          %1781 = vmatpush2.msra.mxu0 0.0
          %1782 = vmatprep.subr.mxu0 0.0
          %1783 = vmatpush2.msra.mxu0 0.0
          %1784 = vmatprep.subr.mxu0 0.0
          %1785 = vmatpush2.msra.mxu0 0.0
          %1786 = vmatprep.subr.mxu0 0.0
          %1787 = vmatpush2.msra.mxu0 0.0
          %1788 = vmatprep.subr.mxu0 0.0
          %1789 = vmatpush2.msra.mxu0 0.0
          %1790 = vmatprep.subr.mxu0 0.0
          %1791 = vmatpush2.msra.mxu0 0.0
          %1792 = vmatprep.subr.mxu0 0.0
          %1793 = vmatpush2.msra.mxu0 0.0
          %1794 = vmatprep.subr.mxu0 0.0
          %1795 = vmatpush2.msra.mxu0 0.0
          %1796 = vmatprep.subr.mxu0 0.0
          %1797 = vmatpush2.msra.mxu0 0.0
          %1798 = vmatprep.subr.mxu0 0.0
          %1799 = vmatpush2.msra.mxu0 0.0
          %1800 = vmatprep.subr.mxu0 0.0
          %1801 = vmatpush2.msra.mxu0 0.0
          %1802 = vmatprep.subr.mxu0 0.0
          %1803 = vmatpush2.msra.mxu0 0.0
          %1804 = vmatprep.subr.mxu0 0.0
          %1805 = vmatpush2.msra.mxu0 0.0
          %1806 = vmatprep.mubr.f32.mxu0 0.0
          %1807 = vmatmul.mubr.f32.gmra.mxu0 %v1737
          %v1808 = vpop.f32.mrf.mxu0
          %v1809 = vadd.f32 0.0, %v1808
          %v1810 = vpop.f32.mrf.mxu0
          %1811 = vdwg.mxu0
          %v1812 = vadd.f32 %v1732, %v1809
          %s1813 = scalar_lea.vmem %s3, 80
          %v1814 = vld [vmem:[%s1813] sm:$0xff]
          %v1815 = vld [vmem:[%s1813 + $0x8] sm:$0x3]
          %v1816 = vrot.slane %v1652, 2
          %v1817 = vsel %vm1417, %v1816, 0
          %v1820 = vsel %vm1420, %v1815, 0
          %1822 = vmatprep.subr.mxu0 0.0
          %1823 = vmatpush1.msra.mxu0 0.0
          %1824 = vmatprep.subr.mxu0 0.0
          %1825 = vmatpush1.msra.mxu0 0.0
          %1826 = vmatprep.subr.mxu0 0.0
          %1827 = vmatpush1.msra.mxu0 0.0
          %1828 = vmatprep.subr.mxu0 0.0
          %1829 = vmatpush1.msra.mxu0 0.0
          %1830 = vmatprep.subr.mxu0 0.0
          %1831 = vmatpush1.msra.mxu0 0.0
          %1832 = vmatprep.subr.mxu0 0.0
          %1833 = vmatpush1.msra.mxu0 0.0
          %1834 = vmatprep.subr.mxu0 0.0
          %1835 = vmatpush1.msra.mxu0 0.0
          %1836 = vmatprep.subr.mxu0 0.0
          %1837 = vmatpush1.msra.mxu0 0.0
          %1838 = vmatprep.subr.mxu0 0.0
          %1839 = vmatpush1.msra.mxu0 0.0
          %1840 = vmatprep.subr.mxu0 0.0
          %1841 = vmatpush1.msra.mxu0 0.0
          %1842 = vmatprep.subr.mxu0 0.0
          %1843 = vmatpush1.msra.mxu0 0.0
          %1844 = vmatprep.subr.mxu0 0.0
          %1845 = vmatpush1.msra.mxu0 0.0
          %1846 = vmatprep.subr.mxu0 0.0
          %1847 = vmatpush1.msra.mxu0 0.0
          %1848 = vmatprep.subr.mxu0 0.0
          %1849 = vmatpush1.msra.mxu0 0.0
          %1850 = vmatprep.subr.mxu0 0.0
          %1851 = vmatpush1.msra.mxu0 %v1820
          %1852 = vmatprep.subr.mxu0 0.0
          %1853 = vmatpush1.msra.mxu0 %v1814
          %1854 = vmatprep.subr.mxu0 0.0
          %1855 = vmatpush2.msra.mxu0 0.0
          %1856 = vmatprep.subr.mxu0 0.0
          %1857 = vmatpush2.msra.mxu0 0.0
          %1858 = vmatprep.subr.mxu0 0.0
          %1859 = vmatpush2.msra.mxu0 0.0
          %1860 = vmatprep.subr.mxu0 0.0
          %1861 = vmatpush2.msra.mxu0 0.0
          %1862 = vmatprep.subr.mxu0 0.0
          %1863 = vmatpush2.msra.mxu0 0.0
          %1864 = vmatprep.subr.mxu0 0.0
          %1865 = vmatpush2.msra.mxu0 0.0
          %1866 = vmatprep.subr.mxu0 0.0
          %1867 = vmatpush2.msra.mxu0 0.0
          %1868 = vmatprep.subr.mxu0 0.0
          %1869 = vmatpush2.msra.mxu0 0.0
          %1870 = vmatprep.subr.mxu0 0.0
          %1871 = vmatpush2.msra.mxu0 0.0
          %1872 = vmatprep.subr.mxu0 0.0
          %1873 = vmatpush2.msra.mxu0 0.0
          %1874 = vmatprep.subr.mxu0 0.0
          %1875 = vmatpush2.msra.mxu0 0.0
          %1876 = vmatprep.subr.mxu0 0.0
          %1877 = vmatpush2.msra.mxu0 0.0
          %1878 = vmatprep.subr.mxu0 0.0
          %1879 = vmatpush2.msra.mxu0 0.0
          %1880 = vmatprep.subr.mxu0 0.0
          %1881 = vmatpush2.msra.mxu0 0.0
          %1882 = vmatprep.subr.mxu0 0.0
          %1883 = vmatpush2.msra.mxu0 0.0
          %1884 = vmatprep.subr.mxu0 0.0
          %1885 = vmatpush2.msra.mxu0 0.0
          %1886 = vmatprep.mubr.f32.mxu0 0.0
          %1887 = vmatmul.mubr.f32.gmra.mxu0 %v1817
          %v1888 = vpop.f32.mrf.mxu0
          %v1889 = vadd.f32 0.0, %v1888
          %v1890 = vpop.f32.mrf.mxu0
          %1891 = vdwg.mxu0
          %v1892 = vadd.f32 %v1812, %v1889
          %s1893 = sadd.s32 %s1402, 2
          %s1894 = smul.u32 %s1893, 8
          %s1895 = scalar_lea.vmem [#allocation3], %s1894
          %v1896 = vld [vmem:[%s1895] sm:$0x7f]
          %s1897 = scalar_lea.vmem %s3, 96
          %v1898 = vld [vmem:[%s1897] sm:$0xff]
          %v1899 = vld [vmem:[%s1897 + $0x8] sm:$0x3]
          %v1901 = vsel %vm1417, %v1896, 0
          %v1904 = vsel %vm1420, %v1899, 0
          %1906 = vmatprep.subr.mxu0 0.0
          %1907 = vmatpush1.msra.mxu0 0.0
          %1908 = vmatprep.subr.mxu0 0.0
          %1909 = vmatpush1.msra.mxu0 0.0
          %1910 = vmatprep.subr.mxu0 0.0
          %1911 = vmatpush1.msra.mxu0 0.0
          %1912 = vmatprep.subr.mxu0 0.0
          %1913 = vmatpush1.msra.mxu0 0.0
          %1914 = vmatprep.subr.mxu0 0.0
          %1915 = vmatpush1.msra.mxu0 0.0
          %1916 = vmatprep.subr.mxu0 0.0
          %1917 = vmatpush1.msra.mxu0 0.0
          %1918 = vmatprep.subr.mxu0 0.0
          %1919 = vmatpush1.msra.mxu0 0.0
          %1920 = vmatprep.subr.mxu0 0.0
          %1921 = vmatpush1.msra.mxu0 0.0
          %1922 = vmatprep.subr.mxu0 0.0
          %1923 = vmatpush1.msra.mxu0 0.0
          %1924 = vmatprep.subr.mxu0 0.0
          %1925 = vmatpush1.msra.mxu0 0.0
          %1926 = vmatprep.subr.mxu0 0.0
          %1927 = vmatpush1.msra.mxu0 0.0
          %1928 = vmatprep.subr.mxu0 0.0
          %1929 = vmatpush1.msra.mxu0 0.0
          %1930 = vmatprep.subr.mxu0 0.0
          %1931 = vmatpush1.msra.mxu0 0.0
          %1932 = vmatprep.subr.mxu0 0.0
          %1933 = vmatpush1.msra.mxu0 0.0
          %1934 = vmatprep.subr.mxu0 0.0
          %1935 = vmatpush1.msra.mxu0 %v1904
          %1936 = vmatprep.subr.mxu0 0.0
          %1937 = vmatpush1.msra.mxu0 %v1898
          %1938 = vmatprep.subr.mxu0 0.0
          %1939 = vmatpush2.msra.mxu0 0.0
          %1940 = vmatprep.subr.mxu0 0.0
          %1941 = vmatpush2.msra.mxu0 0.0
          %1942 = vmatprep.subr.mxu0 0.0
          %1943 = vmatpush2.msra.mxu0 0.0
          %1944 = vmatprep.subr.mxu0 0.0
          %1945 = vmatpush2.msra.mxu0 0.0
          %1946 = vmatprep.subr.mxu0 0.0
          %1947 = vmatpush2.msra.mxu0 0.0
          %1948 = vmatprep.subr.mxu0 0.0
          %1949 = vmatpush2.msra.mxu0 0.0
          %1950 = vmatprep.subr.mxu0 0.0
          %1951 = vmatpush2.msra.mxu0 0.0
          %1952 = vmatprep.subr.mxu0 0.0
          %1953 = vmatpush2.msra.mxu0 0.0
          %1954 = vmatprep.subr.mxu0 0.0
          %1955 = vmatpush2.msra.mxu0 0.0
          %1956 = vmatprep.subr.mxu0 0.0
          %1957 = vmatpush2.msra.mxu0 0.0
          %1958 = vmatprep.subr.mxu0 0.0
          %1959 = vmatpush2.msra.mxu0 0.0
          %1960 = vmatprep.subr.mxu0 0.0
          %1961 = vmatpush2.msra.mxu0 0.0
          %1962 = vmatprep.subr.mxu0 0.0
          %1963 = vmatpush2.msra.mxu0 0.0
          %1964 = vmatprep.subr.mxu0 0.0
          %1965 = vmatpush2.msra.mxu0 0.0
          %1966 = vmatprep.subr.mxu0 0.0
          %1967 = vmatpush2.msra.mxu0 0.0
          %1968 = vmatprep.subr.mxu0 0.0
          %1969 = vmatpush2.msra.mxu0 0.0
          %1970 = vmatprep.mubr.f32.mxu0 0.0
          %1971 = vmatmul.mubr.f32.gmra.mxu0 %v1901
          %v1972 = vpop.f32.mrf.mxu0
          %v1973 = vadd.f32 0.0, %v1972
          %v1974 = vpop.f32.mrf.mxu0
          %1975 = vdwg.mxu0
          %v1976 = vadd.f32 %v1892, %v1973
          %s1977 = scalar_lea.vmem %s3, 112
          %v1978 = vld [vmem:[%s1977] sm:$0xff]
          %v1979 = vld [vmem:[%s1977 + $0x8] sm:$0x3]
          %v1980 = vrot.slane %v1896, 1
          %v1981 = vsel %vm1417, %v1980, 0
          %v1984 = vsel %vm1420, %v1979, 0
          %1986 = vmatprep.subr.mxu0 0.0
          %1987 = vmatpush1.msra.mxu0 0.0
          %1988 = vmatprep.subr.mxu0 0.0
          %1989 = vmatpush1.msra.mxu0 0.0
          %1990 = vmatprep.subr.mxu0 0.0
          %1991 = vmatpush1.msra.mxu0 0.0
          %1992 = vmatprep.subr.mxu0 0.0
          %1993 = vmatpush1.msra.mxu0 0.0
          %1994 = vmatprep.subr.mxu0 0.0
          %1995 = vmatpush1.msra.mxu0 0.0
          %1996 = vmatprep.subr.mxu0 0.0
          %1997 = vmatpush1.msra.mxu0 0.0
          %1998 = vmatprep.subr.mxu0 0.0
          %1999 = vmatpush1.msra.mxu0 0.0
          %2000 = vmatprep.subr.mxu0 0.0
          %2001 = vmatpush1.msra.mxu0 0.0
          %2002 = vmatprep.subr.mxu0 0.0
          %2003 = vmatpush1.msra.mxu0 0.0
          %2004 = vmatprep.subr.mxu0 0.0
          %2005 = vmatpush1.msra.mxu0 0.0
          %2006 = vmatprep.subr.mxu0 0.0
          %2007 = vmatpush1.msra.mxu0 0.0
          %2008 = vmatprep.subr.mxu0 0.0
          %2009 = vmatpush1.msra.mxu0 0.0
          %2010 = vmatprep.subr.mxu0 0.0
          %2011 = vmatpush1.msra.mxu0 0.0
          %2012 = vmatprep.subr.mxu0 0.0
          %2013 = vmatpush1.msra.mxu0 0.0
          %2014 = vmatprep.subr.mxu0 0.0
          %2015 = vmatpush1.msra.mxu0 %v1984
          %2016 = vmatprep.subr.mxu0 0.0
          %2017 = vmatpush1.msra.mxu0 %v1978
          %2018 = vmatprep.subr.mxu0 0.0
          %2019 = vmatpush2.msra.mxu0 0.0
          %2020 = vmatprep.subr.mxu0 0.0
          %2021 = vmatpush2.msra.mxu0 0.0
          %2022 = vmatprep.subr.mxu0 0.0
          %2023 = vmatpush2.msra.mxu0 0.0
          %2024 = vmatprep.subr.mxu0 0.0
          %2025 = vmatpush2.msra.mxu0 0.0
          %2026 = vmatprep.subr.mxu0 0.0
          %2027 = vmatpush2.msra.mxu0 0.0
          %2028 = vmatprep.subr.mxu0 0.0
          %2029 = vmatpush2.msra.mxu0 0.0
          %2030 = vmatprep.subr.mxu0 0.0
          %2031 = vmatpush2.msra.mxu0 0.0
          %2032 = vmatprep.subr.mxu0 0.0
          %2033 = vmatpush2.msra.mxu0 0.0
          %2034 = vmatprep.subr.mxu0 0.0
          %2035 = vmatpush2.msra.mxu0 0.0
          %2036 = vmatprep.subr.mxu0 0.0
          %2037 = vmatpush2.msra.mxu0 0.0
          %2038 = vmatprep.subr.mxu0 0.0
          %2039 = vmatpush2.msra.mxu0 0.0
          %2040 = vmatprep.subr.mxu0 0.0
          %2041 = vmatpush2.msra.mxu0 0.0
          %2042 = vmatprep.subr.mxu0 0.0
          %2043 = vmatpush2.msra.mxu0 0.0
          %2044 = vmatprep.subr.mxu0 0.0
          %2045 = vmatpush2.msra.mxu0 0.0
          %2046 = vmatprep.subr.mxu0 0.0
          %2047 = vmatpush2.msra.mxu0 0.0
          %2048 = vmatprep.subr.mxu0 0.0
          %2049 = vmatpush2.msra.mxu0 0.0
          %2050 = vmatprep.mubr.f32.mxu0 0.0
          %2051 = vmatmul.mubr.f32.gmra.mxu0 %v1981
          %v2052 = vpop.f32.mrf.mxu0
          %v2053 = vadd.f32 0.0, %v2052
          %v2054 = vpop.f32.mrf.mxu0
          %2055 = vdwg.mxu0
          %v2056 = vadd.f32 %v1976, %v2053
          %s2057 = scalar_lea.vmem %s3, 128
          %v2058 = vld [vmem:[%s2057] sm:$0xff]
          %v2059 = vld [vmem:[%s2057 + $0x8] sm:$0x3]
          %v2060 = vrot.slane %v1896, 2
          %v2061 = vsel %vm1417, %v2060, 0
          %v2064 = vsel %vm1420, %v2059, 0
          %2066 = vmatprep.subr.mxu0 0.0
          %2067 = vmatpush1.msra.mxu0 0.0
          %2068 = vmatprep.subr.mxu0 0.0
          %2069 = vmatpush1.msra.mxu0 0.0
          %2070 = vmatprep.subr.mxu0 0.0
          %2071 = vmatpush1.msra.mxu0 0.0
          %2072 = vmatprep.subr.mxu0 0.0
          %2073 = vmatpush1.msra.mxu0 0.0
          %2074 = vmatprep.subr.mxu0 0.0
          %2075 = vmatpush1.msra.mxu0 0.0
          %2076 = vmatprep.subr.mxu0 0.0
          %2077 = vmatpush1.msra.mxu0 0.0
          %2078 = vmatprep.subr.mxu0 0.0
          %2079 = vmatpush1.msra.mxu0 0.0
          %2080 = vmatprep.subr.mxu0 0.0
          %2081 = vmatpush1.msra.mxu0 0.0
          %2082 = vmatprep.subr.mxu0 0.0
          %2083 = vmatpush1.msra.mxu0 0.0
          %2084 = vmatprep.subr.mxu0 0.0
          %2085 = vmatpush1.msra.mxu0 0.0
          %2086 = vmatprep.subr.mxu0 0.0
          %2087 = vmatpush1.msra.mxu0 0.0
          %2088 = vmatprep.subr.mxu0 0.0
          %2089 = vmatpush1.msra.mxu0 0.0
          %2090 = vmatprep.subr.mxu0 0.0
          %2091 = vmatpush1.msra.mxu0 0.0
          %2092 = vmatprep.subr.mxu0 0.0
          %2093 = vmatpush1.msra.mxu0 0.0
          %2094 = vmatprep.subr.mxu0 0.0
          %2095 = vmatpush1.msra.mxu0 %v2064
          %2096 = vmatprep.subr.mxu0 0.0
          %2097 = vmatpush1.msra.mxu0 %v2058
          %2098 = vmatprep.subr.mxu0 0.0
          %2099 = vmatpush2.msra.mxu0 0.0
          %2100 = vmatprep.subr.mxu0 0.0
          %2101 = vmatpush2.msra.mxu0 0.0
          %2102 = vmatprep.subr.mxu0 0.0
          %2103 = vmatpush2.msra.mxu0 0.0
          %2104 = vmatprep.subr.mxu0 0.0
          %2105 = vmatpush2.msra.mxu0 0.0
          %2106 = vmatprep.subr.mxu0 0.0
          %2107 = vmatpush2.msra.mxu0 0.0
          %2108 = vmatprep.subr.mxu0 0.0
          %2109 = vmatpush2.msra.mxu0 0.0
          %2110 = vmatprep.subr.mxu0 0.0
          %2111 = vmatpush2.msra.mxu0 0.0
          %2112 = vmatprep.subr.mxu0 0.0
          %2113 = vmatpush2.msra.mxu0 0.0
          %2114 = vmatprep.subr.mxu0 0.0
          %2115 = vmatpush2.msra.mxu0 0.0
          %2116 = vmatprep.subr.mxu0 0.0
          %2117 = vmatpush2.msra.mxu0 0.0
          %2118 = vmatprep.subr.mxu0 0.0
          %2119 = vmatpush2.msra.mxu0 0.0
          %2120 = vmatprep.subr.mxu0 0.0
          %2121 = vmatpush2.msra.mxu0 0.0
          %2122 = vmatprep.subr.mxu0 0.0
          %2123 = vmatpush2.msra.mxu0 0.0
          %2124 = vmatprep.subr.mxu0 0.0
          %2125 = vmatpush2.msra.mxu0 0.0
          %2126 = vmatprep.subr.mxu0 0.0
          %2127 = vmatpush2.msra.mxu0 0.0
          %2128 = vmatprep.subr.mxu0 0.0
          %2129 = vmatpush2.msra.mxu0 0.0
          %2130 = vmatprep.mubr.f32.mxu0 0.0
          %2131 = vmatmul.mubr.f32.gmra.mxu0 %v2061
          %v2132 = vpop.f32.mrf.mxu0
          %v2133 = vadd.f32 0.0, %v2132
          %v2134 = vpop.f32.mrf.mxu0
          %2135 = vdwg.mxu0
          %v2136 = vadd.f32 %v2056, %v2133
          %v2137 = vld [vmem:[%s4] sm:$0x1]
          %v2139 = vlaneseq
          %v2140 = vshrl.u32 %v2139, 7
          %v2141 = vsub.s32 0, %v2140
          %v2142 = vrot.slane %v2137, %v2141
          %v2144 = vadd.f32 %v2136, %v2142
          %vm2145 = vcmp.gt.f32.partialorder %v2144, 0.0
          %v2146 = vstv %s375
          %v2147 = vmul.f32 %v2146, %v2144
          %v2148 = vsel %vm2145, %v2144, %v2147
          %s2149 = scalar_lea.vmem [#allocation4], %s1407
          %vm2150 = vcmask 126976
          %2151 = vst.msk [vmem:[%s2149] sm:$0x1f] %vm2150, %v2148
        $region83: #{pnet_forward.1} parent=59 // loop_footer
          %s1406 = sadd.s32 1, %s1402
        $region84: #{pnet_forward.1} parent=59 // loop_footer_branch
          %1401 = sbr.rel target = $region80
        $region85: #{pnet_forward.1} parent=59 // loop_exit
          _
        loop: start=0, step=1, limit=3
        $region86: #{pnet_forward.1} parent=59 // loop_pre_header
          _
        $region87: #{pnet_forward.1} parent=59 // loop_header
          %s2153 = sphi 0, %s2157
          %p2154 = scmp.ge.s32.totalorder %s2153, 3
        $region88: #{pnet_forward.1} parent=59 // loop_header_branch
          %2156 = sbr.rel (%p2154) target = $region92
        $region89: #{pnet_forward.1} parent=59 // loop_body
          %s2158 = smul.u32 %s2153, 8
          %s2159 = scalar_lea.vmem [#allocation4], %s2158
          %v2160 = vld [vmem:[%s2159] sm:$0x1f]
          %v2161 = vld [vmem:[%s5] sm:$0xff]
          %v2162 = vld [vmem:[%s5 + $0x8] sm:$0xff]
          %s2163 = scalar_lea.vmem %s5, 16
          %v2164 = vld [vmem:[%s2163] sm:$0xff]
          %v2165 = vld [vmem:[%s2163 + $0x8] sm:$0xff]
          %v2167 = vrot.slane %v2160, 1
          %vm2168 = vcmask 130048
          %v2169 = vsel %vm2168, %v2167, 0
          %2171 = vmatprep.subr.mxu0 0.0
          %2172 = vmatpush1.msra.mxu0 0.0
          %2173 = vmatprep.subr.mxu0 0.0
          %2174 = vmatpush1.msra.mxu0 0.0
          %2175 = vmatprep.subr.mxu0 0.0
          %2176 = vmatpush1.msra.mxu0 0.0
          %2177 = vmatprep.subr.mxu0 0.0
          %2178 = vmatpush1.msra.mxu0 0.0
          %2179 = vmatprep.subr.mxu0 0.0
          %2180 = vmatpush1.msra.mxu0 0.0
          %2181 = vmatprep.subr.mxu0 0.0
          %2182 = vmatpush1.msra.mxu0 0.0
          %2183 = vmatprep.subr.mxu0 0.0
          %2184 = vmatpush1.msra.mxu0 0.0
          %2185 = vmatprep.subr.mxu0 0.0
          %2186 = vmatpush1.msra.mxu0 0.0
          %2187 = vmatprep.subr.mxu0 0.0
          %2188 = vmatpush1.msra.mxu0 0.0
          %2189 = vmatprep.subr.mxu0 0.0
          %2190 = vmatpush1.msra.mxu0 0.0
          %2191 = vmatprep.subr.mxu0 0.0
          %2192 = vmatpush1.msra.mxu0 0.0
          %2193 = vmatprep.subr.mxu0 0.0
          %2194 = vmatpush1.msra.mxu0 0.0
          %2195 = vmatprep.subr.mxu0 0.0
          %2196 = vmatpush1.msra.mxu0 0.0
          %2197 = vmatprep.subr.mxu0 0.0
          %2198 = vmatpush1.msra.mxu0 0.0
          %2199 = vmatprep.subr.mxu0 0.0
          %2200 = vmatpush1.msra.mxu0 %v2165
          %2201 = vmatprep.subr.mxu0 0.0
          %2202 = vmatpush1.msra.mxu0 %v2164
          %2203 = vmatprep.subr.mxu0 0.0
          %2204 = vmatpush2.msra.mxu0 0.0
          %2205 = vmatprep.subr.mxu0 0.0
          %2206 = vmatpush2.msra.mxu0 0.0
          %2207 = vmatprep.subr.mxu0 0.0
          %2208 = vmatpush2.msra.mxu0 0.0
          %2209 = vmatprep.subr.mxu0 0.0
          %2210 = vmatpush2.msra.mxu0 0.0
          %2211 = vmatprep.subr.mxu0 0.0
          %2212 = vmatpush2.msra.mxu0 0.0
          %2213 = vmatprep.subr.mxu0 0.0
          %2214 = vmatpush2.msra.mxu0 0.0
          %2215 = vmatprep.subr.mxu0 0.0
          %2216 = vmatpush2.msra.mxu0 0.0
          %2217 = vmatprep.subr.mxu0 0.0
          %2218 = vmatpush2.msra.mxu0 0.0
          %2219 = vmatprep.subr.mxu0 0.0
          %2220 = vmatpush2.msra.mxu0 0.0
          %2221 = vmatprep.subr.mxu0 0.0
          %2222 = vmatpush2.msra.mxu0 0.0
          %2223 = vmatprep.subr.mxu0 0.0
          %2224 = vmatpush2.msra.mxu0 0.0
          %2225 = vmatprep.subr.mxu0 0.0
          %2226 = vmatpush2.msra.mxu0 0.0
          %2227 = vmatprep.subr.mxu0 0.0
          %2228 = vmatpush2.msra.mxu0 0.0
          %2229 = vmatprep.subr.mxu0 0.0
          %2230 = vmatpush2.msra.mxu0 0.0
          %2231 = vmatprep.subr.mxu0 0.0
          %2232 = vmatpush2.msra.mxu0 0.0
          %2233 = vmatprep.subr.mxu0 0.0
          %2234 = vmatpush2.msra.mxu0 0.0
          %2235 = vmatprep.mubr.f32.mxu0 0.0
          %2236 = vmatmul.mubr.f32.gmra.mxu0 %v2169
          %v2237 = vpop.f32.mrf.mxu0
          %v2238 = vadd.f32 0.0, %v2237
          %v2239 = vpop.f32.mrf.mxu0
          %2240 = vdwg.mxu0
          %v2241 = vsel %vm2168, %v2160, 0
          %2243 = vmatprep.subr.mxu0 0.0
          %2244 = vmatpush1.msra.mxu0 0.0
          %2245 = vmatprep.subr.mxu0 0.0
          %2246 = vmatpush1.msra.mxu0 0.0
          %2247 = vmatprep.subr.mxu0 0.0
          %2248 = vmatpush1.msra.mxu0 0.0
          %2249 = vmatprep.subr.mxu0 0.0
          %2250 = vmatpush1.msra.mxu0 0.0
          %2251 = vmatprep.subr.mxu0 0.0
          %2252 = vmatpush1.msra.mxu0 0.0
          %2253 = vmatprep.subr.mxu0 0.0
          %2254 = vmatpush1.msra.mxu0 0.0
          %2255 = vmatprep.subr.mxu0 0.0
          %2256 = vmatpush1.msra.mxu0 0.0
          %2257 = vmatprep.subr.mxu0 0.0
          %2258 = vmatpush1.msra.mxu0 0.0
          %2259 = vmatprep.subr.mxu0 0.0
          %2260 = vmatpush1.msra.mxu0 0.0
          %2261 = vmatprep.subr.mxu0 0.0
          %2262 = vmatpush1.msra.mxu0 0.0
          %2263 = vmatprep.subr.mxu0 0.0
          %2264 = vmatpush1.msra.mxu0 0.0
          %2265 = vmatprep.subr.mxu0 0.0
          %2266 = vmatpush1.msra.mxu0 0.0
          %2267 = vmatprep.subr.mxu0 0.0
          %2268 = vmatpush1.msra.mxu0 0.0
          %2269 = vmatprep.subr.mxu0 0.0
          %2270 = vmatpush1.msra.mxu0 0.0
          %2271 = vmatprep.subr.mxu0 0.0
          %2272 = vmatpush1.msra.mxu0 %v2162
          %2273 = vmatprep.subr.mxu0 0.0
          %2274 = vmatpush1.msra.mxu0 %v2161
          %2275 = vmatprep.subr.mxu0 0.0
          %2276 = vmatpush2.msra.mxu0 0.0
          %2277 = vmatprep.subr.mxu0 0.0
          %2278 = vmatpush2.msra.mxu0 0.0
          %2279 = vmatprep.subr.mxu0 0.0
          %2280 = vmatpush2.msra.mxu0 0.0
          %2281 = vmatprep.subr.mxu0 0.0
          %2282 = vmatpush2.msra.mxu0 0.0
          %2283 = vmatprep.subr.mxu0 0.0
          %2284 = vmatpush2.msra.mxu0 0.0
          %2285 = vmatprep.subr.mxu0 0.0
          %2286 = vmatpush2.msra.mxu0 0.0
          %2287 = vmatprep.subr.mxu0 0.0
          %2288 = vmatpush2.msra.mxu0 0.0
          %2289 = vmatprep.subr.mxu0 0.0
          %2290 = vmatpush2.msra.mxu0 0.0
          %2291 = vmatprep.subr.mxu0 0.0
          %2292 = vmatpush2.msra.mxu0 0.0
          %2293 = vmatprep.subr.mxu0 0.0
          %2294 = vmatpush2.msra.mxu0 0.0
          %2295 = vmatprep.subr.mxu0 0.0
          %2296 = vmatpush2.msra.mxu0 0.0
          %2297 = vmatprep.subr.mxu0 0.0
          %2298 = vmatpush2.msra.mxu0 0.0
          %2299 = vmatprep.subr.mxu0 0.0
          %2300 = vmatpush2.msra.mxu0 0.0
          %2301 = vmatprep.subr.mxu0 0.0
          %2302 = vmatpush2.msra.mxu0 0.0
          %2303 = vmatprep.subr.mxu0 0.0
          %2304 = vmatpush2.msra.mxu0 0.0
          %2305 = vmatprep.subr.mxu0 0.0
          %2306 = vmatpush2.msra.mxu0 0.0
          %2307 = vmatprep.mubr.f32.mxu0 0.0
          %2308 = vmatmul.mubr.f32.gmra.mxu0 %v2241
          %v2309 = vpop.f32.mrf.mxu0
          %v2310 = vadd.f32 %v2238, %v2309
          %v2311 = vpop.f32.mrf.mxu0
          %2312 = vdwg.mxu0
          %s2313 = scalar_lea.vmem %s5, 32
          %v2314 = vld [vmem:[%s2313] sm:$0xff]
          %v2315 = vld [vmem:[%s2313 + $0x8] sm:$0xff]
          %v2316 = vrot.slane %v2160, 2
          %v2317 = vsel %vm2168, %v2316, 0
          %2319 = vmatprep.subr.mxu0 0.0
          %2320 = vmatpush1.msra.mxu0 0.0
          %2321 = vmatprep.subr.mxu0 0.0
          %2322 = vmatpush1.msra.mxu0 0.0
          %2323 = vmatprep.subr.mxu0 0.0
          %2324 = vmatpush1.msra.mxu0 0.0
          %2325 = vmatprep.subr.mxu0 0.0
          %2326 = vmatpush1.msra.mxu0 0.0
          %2327 = vmatprep.subr.mxu0 0.0
          %2328 = vmatpush1.msra.mxu0 0.0
          %2329 = vmatprep.subr.mxu0 0.0
          %2330 = vmatpush1.msra.mxu0 0.0
          %2331 = vmatprep.subr.mxu0 0.0
          %2332 = vmatpush1.msra.mxu0 0.0
          %2333 = vmatprep.subr.mxu0 0.0
          %2334 = vmatpush1.msra.mxu0 0.0
          %2335 = vmatprep.subr.mxu0 0.0
          %2336 = vmatpush1.msra.mxu0 0.0
          %2337 = vmatprep.subr.mxu0 0.0
          %2338 = vmatpush1.msra.mxu0 0.0
          %2339 = vmatprep.subr.mxu0 0.0
          %2340 = vmatpush1.msra.mxu0 0.0
          %2341 = vmatprep.subr.mxu0 0.0
          %2342 = vmatpush1.msra.mxu0 0.0
          %2343 = vmatprep.subr.mxu0 0.0
          %2344 = vmatpush1.msra.mxu0 0.0
          %2345 = vmatprep.subr.mxu0 0.0
          %2346 = vmatpush1.msra.mxu0 0.0
          %2347 = vmatprep.subr.mxu0 0.0
          %2348 = vmatpush1.msra.mxu0 %v2315
          %2349 = vmatprep.subr.mxu0 0.0
          %2350 = vmatpush1.msra.mxu0 %v2314
          %2351 = vmatprep.subr.mxu0 0.0
          %2352 = vmatpush2.msra.mxu0 0.0
          %2353 = vmatprep.subr.mxu0 0.0
          %2354 = vmatpush2.msra.mxu0 0.0
          %2355 = vmatprep.subr.mxu0 0.0
          %2356 = vmatpush2.msra.mxu0 0.0
          %2357 = vmatprep.subr.mxu0 0.0
          %2358 = vmatpush2.msra.mxu0 0.0
          %2359 = vmatprep.subr.mxu0 0.0
          %2360 = vmatpush2.msra.mxu0 0.0
          %2361 = vmatprep.subr.mxu0 0.0
          %2362 = vmatpush2.msra.mxu0 0.0
          %2363 = vmatprep.subr.mxu0 0.0
          %2364 = vmatpush2.msra.mxu0 0.0
          %2365 = vmatprep.subr.mxu0 0.0
          %2366 = vmatpush2.msra.mxu0 0.0
          %2367 = vmatprep.subr.mxu0 0.0
          %2368 = vmatpush2.msra.mxu0 0.0
          %2369 = vmatprep.subr.mxu0 0.0
          %2370 = vmatpush2.msra.mxu0 0.0
          %2371 = vmatprep.subr.mxu0 0.0
          %2372 = vmatpush2.msra.mxu0 0.0
          %2373 = vmatprep.subr.mxu0 0.0
          %2374 = vmatpush2.msra.mxu0 0.0
          %2375 = vmatprep.subr.mxu0 0.0
          %2376 = vmatpush2.msra.mxu0 0.0
          %2377 = vmatprep.subr.mxu0 0.0
          %2378 = vmatpush2.msra.mxu0 0.0
          %2379 = vmatprep.subr.mxu0 0.0
          %2380 = vmatpush2.msra.mxu0 0.0
          %2381 = vmatprep.subr.mxu0 0.0
          %2382 = vmatpush2.msra.mxu0 0.0
          %2383 = vmatprep.mubr.f32.mxu0 0.0
          %2384 = vmatmul.mubr.f32.gmra.mxu0 %v2317
          %v2385 = vpop.f32.mrf.mxu0
          %v2386 = vadd.f32 0.0, %v2385
          %v2387 = vpop.f32.mrf.mxu0
          %2388 = vdwg.mxu0
          %v2389 = vadd.f32 %v2310, %v2386
          %s2390 = sadd.s32 %s2153, 1
          %s2391 = smul.u32 %s2390, 8
          %s2392 = scalar_lea.vmem [#allocation4], %s2391
          %v2393 = vld [vmem:[%s2392] sm:$0x1f]
          %s2394 = scalar_lea.vmem %s5, 48
          %v2395 = vld [vmem:[%s2394] sm:$0xff]
          %v2396 = vld [vmem:[%s2394 + $0x8] sm:$0xff]
          %v2398 = vsel %vm2168, %v2393, 0
          %2400 = vmatprep.subr.mxu0 0.0
          %2401 = vmatpush1.msra.mxu0 0.0
          %2402 = vmatprep.subr.mxu0 0.0
          %2403 = vmatpush1.msra.mxu0 0.0
          %2404 = vmatprep.subr.mxu0 0.0
          %2405 = vmatpush1.msra.mxu0 0.0
          %2406 = vmatprep.subr.mxu0 0.0
          %2407 = vmatpush1.msra.mxu0 0.0
          %2408 = vmatprep.subr.mxu0 0.0
          %2409 = vmatpush1.msra.mxu0 0.0
          %2410 = vmatprep.subr.mxu0 0.0
          %2411 = vmatpush1.msra.mxu0 0.0
          %2412 = vmatprep.subr.mxu0 0.0
          %2413 = vmatpush1.msra.mxu0 0.0
          %2414 = vmatprep.subr.mxu0 0.0
          %2415 = vmatpush1.msra.mxu0 0.0
          %2416 = vmatprep.subr.mxu0 0.0
          %2417 = vmatpush1.msra.mxu0 0.0
          %2418 = vmatprep.subr.mxu0 0.0
          %2419 = vmatpush1.msra.mxu0 0.0
          %2420 = vmatprep.subr.mxu0 0.0
          %2421 = vmatpush1.msra.mxu0 0.0
          %2422 = vmatprep.subr.mxu0 0.0
          %2423 = vmatpush1.msra.mxu0 0.0
          %2424 = vmatprep.subr.mxu0 0.0
          %2425 = vmatpush1.msra.mxu0 0.0
          %2426 = vmatprep.subr.mxu0 0.0
          %2427 = vmatpush1.msra.mxu0 0.0
          %2428 = vmatprep.subr.mxu0 0.0
          %2429 = vmatpush1.msra.mxu0 %v2396
          %2430 = vmatprep.subr.mxu0 0.0
          %2431 = vmatpush1.msra.mxu0 %v2395
          %2432 = vmatprep.subr.mxu0 0.0
          %2433 = vmatpush2.msra.mxu0 0.0
          %2434 = vmatprep.subr.mxu0 0.0
          %2435 = vmatpush2.msra.mxu0 0.0
          %2436 = vmatprep.subr.mxu0 0.0
          %2437 = vmatpush2.msra.mxu0 0.0
          %2438 = vmatprep.subr.mxu0 0.0
          %2439 = vmatpush2.msra.mxu0 0.0
          %2440 = vmatprep.subr.mxu0 0.0
          %2441 = vmatpush2.msra.mxu0 0.0
          %2442 = vmatprep.subr.mxu0 0.0
          %2443 = vmatpush2.msra.mxu0 0.0
          %2444 = vmatprep.subr.mxu0 0.0
          %2445 = vmatpush2.msra.mxu0 0.0
          %2446 = vmatprep.subr.mxu0 0.0
          %2447 = vmatpush2.msra.mxu0 0.0
          %2448 = vmatprep.subr.mxu0 0.0
          %2449 = vmatpush2.msra.mxu0 0.0
          %2450 = vmatprep.subr.mxu0 0.0
          %2451 = vmatpush2.msra.mxu0 0.0
          %2452 = vmatprep.subr.mxu0 0.0
          %2453 = vmatpush2.msra.mxu0 0.0
          %2454 = vmatprep.subr.mxu0 0.0
          %2455 = vmatpush2.msra.mxu0 0.0
          %2456 = vmatprep.subr.mxu0 0.0
          %2457 = vmatpush2.msra.mxu0 0.0
          %2458 = vmatprep.subr.mxu0 0.0
          %2459 = vmatpush2.msra.mxu0 0.0
          %2460 = vmatprep.subr.mxu0 0.0
          %2461 = vmatpush2.msra.mxu0 0.0
          %2462 = vmatprep.subr.mxu0 0.0
          %2463 = vmatpush2.msra.mxu0 0.0
          %2464 = vmatprep.mubr.f32.mxu0 0.0
          %2465 = vmatmul.mubr.f32.gmra.mxu0 %v2398
          %v2466 = vpop.f32.mrf.mxu0
          %v2467 = vadd.f32 0.0, %v2466
          %v2468 = vpop.f32.mrf.mxu0
          %2469 = vdwg.mxu0
          %v2470 = vadd.f32 %v2389, %v2467
          %s2471 = scalar_lea.vmem %s5, 64
          %v2472 = vld [vmem:[%s2471] sm:$0xff]
          %v2473 = vld [vmem:[%s2471 + $0x8] sm:$0xff]
          %v2474 = vrot.slane %v2393, 1
          %v2475 = vsel %vm2168, %v2474, 0
          %2477 = vmatprep.subr.mxu0 0.0
          %2478 = vmatpush1.msra.mxu0 0.0
          %2479 = vmatprep.subr.mxu0 0.0
          %2480 = vmatpush1.msra.mxu0 0.0
          %2481 = vmatprep.subr.mxu0 0.0
          %2482 = vmatpush1.msra.mxu0 0.0
          %2483 = vmatprep.subr.mxu0 0.0
          %2484 = vmatpush1.msra.mxu0 0.0
          %2485 = vmatprep.subr.mxu0 0.0
          %2486 = vmatpush1.msra.mxu0 0.0
          %2487 = vmatprep.subr.mxu0 0.0
          %2488 = vmatpush1.msra.mxu0 0.0
          %2489 = vmatprep.subr.mxu0 0.0
          %2490 = vmatpush1.msra.mxu0 0.0
          %2491 = vmatprep.subr.mxu0 0.0
          %2492 = vmatpush1.msra.mxu0 0.0
          %2493 = vmatprep.subr.mxu0 0.0
          %2494 = vmatpush1.msra.mxu0 0.0
          %2495 = vmatprep.subr.mxu0 0.0
          %2496 = vmatpush1.msra.mxu0 0.0
          %2497 = vmatprep.subr.mxu0 0.0
          %2498 = vmatpush1.msra.mxu0 0.0
          %2499 = vmatprep.subr.mxu0 0.0
          %2500 = vmatpush1.msra.mxu0 0.0
          %2501 = vmatprep.subr.mxu0 0.0
          %2502 = vmatpush1.msra.mxu0 0.0
          %2503 = vmatprep.subr.mxu0 0.0
          %2504 = vmatpush1.msra.mxu0 0.0
          %2505 = vmatprep.subr.mxu0 0.0
          %2506 = vmatpush1.msra.mxu0 %v2473
          %2507 = vmatprep.subr.mxu0 0.0
          %2508 = vmatpush1.msra.mxu0 %v2472
          %2509 = vmatprep.subr.mxu0 0.0
          %2510 = vmatpush2.msra.mxu0 0.0
          %2511 = vmatprep.subr.mxu0 0.0
          %2512 = vmatpush2.msra.mxu0 0.0
          %2513 = vmatprep.subr.mxu0 0.0
          %2514 = vmatpush2.msra.mxu0 0.0
          %2515 = vmatprep.subr.mxu0 0.0
          %2516 = vmatpush2.msra.mxu0 0.0
          %2517 = vmatprep.subr.mxu0 0.0
          %2518 = vmatpush2.msra.mxu0 0.0
          %2519 = vmatprep.subr.mxu0 0.0
          %2520 = vmatpush2.msra.mxu0 0.0
          %2521 = vmatprep.subr.mxu0 0.0
          %2522 = vmatpush2.msra.mxu0 0.0
          %2523 = vmatprep.subr.mxu0 0.0
          %2524 = vmatpush2.msra.mxu0 0.0
          %2525 = vmatprep.subr.mxu0 0.0
          %2526 = vmatpush2.msra.mxu0 0.0
          %2527 = vmatprep.subr.mxu0 0.0
          %2528 = vmatpush2.msra.mxu0 0.0
          %2529 = vmatprep.subr.mxu0 0.0
          %2530 = vmatpush2.msra.mxu0 0.0
          %2531 = vmatprep.subr.mxu0 0.0
          %2532 = vmatpush2.msra.mxu0 0.0
          %2533 = vmatprep.subr.mxu0 0.0
          %2534 = vmatpush2.msra.mxu0 0.0
          %2535 = vmatprep.subr.mxu0 0.0
          %2536 = vmatpush2.msra.mxu0 0.0
          %2537 = vmatprep.subr.mxu0 0.0
          %2538 = vmatpush2.msra.mxu0 0.0
          %2539 = vmatprep.subr.mxu0 0.0
          %2540 = vmatpush2.msra.mxu0 0.0
          %2541 = vmatprep.mubr.f32.mxu0 0.0
          %2542 = vmatmul.mubr.f32.gmra.mxu0 %v2475
          %v2543 = vpop.f32.mrf.mxu0
          %v2544 = vadd.f32 0.0, %v2543
          %v2545 = vpop.f32.mrf.mxu0
          %2546 = vdwg.mxu0
          %v2547 = vadd.f32 %v2470, %v2544
          %s2548 = scalar_lea.vmem %s5, 80
          %v2549 = vld [vmem:[%s2548] sm:$0xff]
          %v2550 = vld [vmem:[%s2548 + $0x8] sm:$0xff]
          %v2551 = vrot.slane %v2393, 2
          %v2552 = vsel %vm2168, %v2551, 0
          %2554 = vmatprep.subr.mxu0 0.0
          %2555 = vmatpush1.msra.mxu0 0.0
          %2556 = vmatprep.subr.mxu0 0.0
          %2557 = vmatpush1.msra.mxu0 0.0
          %2558 = vmatprep.subr.mxu0 0.0
          %2559 = vmatpush1.msra.mxu0 0.0
          %2560 = vmatprep.subr.mxu0 0.0
          %2561 = vmatpush1.msra.mxu0 0.0
          %2562 = vmatprep.subr.mxu0 0.0
          %2563 = vmatpush1.msra.mxu0 0.0
          %2564 = vmatprep.subr.mxu0 0.0
          %2565 = vmatpush1.msra.mxu0 0.0
          %2566 = vmatprep.subr.mxu0 0.0
          %2567 = vmatpush1.msra.mxu0 0.0
          %2568 = vmatprep.subr.mxu0 0.0
          %2569 = vmatpush1.msra.mxu0 0.0
          %2570 = vmatprep.subr.mxu0 0.0
          %2571 = vmatpush1.msra.mxu0 0.0
          %2572 = vmatprep.subr.mxu0 0.0
          %2573 = vmatpush1.msra.mxu0 0.0
          %2574 = vmatprep.subr.mxu0 0.0
          %2575 = vmatpush1.msra.mxu0 0.0
          %2576 = vmatprep.subr.mxu0 0.0
          %2577 = vmatpush1.msra.mxu0 0.0
          %2578 = vmatprep.subr.mxu0 0.0
          %2579 = vmatpush1.msra.mxu0 0.0
          %2580 = vmatprep.subr.mxu0 0.0
          %2581 = vmatpush1.msra.mxu0 0.0
          %2582 = vmatprep.subr.mxu0 0.0
          %2583 = vmatpush1.msra.mxu0 %v2550
          %2584 = vmatprep.subr.mxu0 0.0
          %2585 = vmatpush1.msra.mxu0 %v2549
          %2586 = vmatprep.subr.mxu0 0.0
          %2587 = vmatpush2.msra.mxu0 0.0
          %2588 = vmatprep.subr.mxu0 0.0
          %2589 = vmatpush2.msra.mxu0 0.0
          %2590 = vmatprep.subr.mxu0 0.0
          %2591 = vmatpush2.msra.mxu0 0.0
          %2592 = vmatprep.subr.mxu0 0.0
          %2593 = vmatpush2.msra.mxu0 0.0
          %2594 = vmatprep.subr.mxu0 0.0
          %2595 = vmatpush2.msra.mxu0 0.0
          %2596 = vmatprep.subr.mxu0 0.0
          %2597 = vmatpush2.msra.mxu0 0.0
          %2598 = vmatprep.subr.mxu0 0.0
          %2599 = vmatpush2.msra.mxu0 0.0
          %2600 = vmatprep.subr.mxu0 0.0
          %2601 = vmatpush2.msra.mxu0 0.0
          %2602 = vmatprep.subr.mxu0 0.0
          %2603 = vmatpush2.msra.mxu0 0.0
          %2604 = vmatprep.subr.mxu0 0.0
          %2605 = vmatpush2.msra.mxu0 0.0
          %2606 = vmatprep.subr.mxu0 0.0
          %2607 = vmatpush2.msra.mxu0 0.0
          %2608 = vmatprep.subr.mxu0 0.0
          %2609 = vmatpush2.msra.mxu0 0.0
          %2610 = vmatprep.subr.mxu0 0.0
          %2611 = vmatpush2.msra.mxu0 0.0
          %2612 = vmatprep.subr.mxu0 0.0
          %2613 = vmatpush2.msra.mxu0 0.0
          %2614 = vmatprep.subr.mxu0 0.0
          %2615 = vmatpush2.msra.mxu0 0.0
          %2616 = vmatprep.subr.mxu0 0.0
          %2617 = vmatpush2.msra.mxu0 0.0
          %2618 = vmatprep.mubr.f32.mxu0 0.0
          %2619 = vmatmul.mubr.f32.gmra.mxu0 %v2552
          %v2620 = vpop.f32.mrf.mxu0
          %v2621 = vadd.f32 0.0, %v2620
          %v2622 = vpop.f32.mrf.mxu0
          %2623 = vdwg.mxu0
          %v2624 = vadd.f32 %v2547, %v2621
          %s2625 = sadd.s32 %s2153, 2
          %s2626 = smul.u32 %s2625, 8
          %s2627 = scalar_lea.vmem [#allocation4], %s2626
          %v2628 = vld [vmem:[%s2627] sm:$0x1f]
          %s2629 = scalar_lea.vmem %s5, 96
          %v2630 = vld [vmem:[%s2629] sm:$0xff]
          %v2631 = vld [vmem:[%s2629 + $0x8] sm:$0xff]
          %v2633 = vsel %vm2168, %v2628, 0
          %2635 = vmatprep.subr.mxu0 0.0
          %2636 = vmatpush1.msra.mxu0 0.0
          %2637 = vmatprep.subr.mxu0 0.0
          %2638 = vmatpush1.msra.mxu0 0.0
          %2639 = vmatprep.subr.mxu0 0.0
          %2640 = vmatpush1.msra.mxu0 0.0
          %2641 = vmatprep.subr.mxu0 0.0
          %2642 = vmatpush1.msra.mxu0 0.0
          %2643 = vmatprep.subr.mxu0 0.0
          %2644 = vmatpush1.msra.mxu0 0.0
          %2645 = vmatprep.subr.mxu0 0.0
          %2646 = vmatpush1.msra.mxu0 0.0
          %2647 = vmatprep.subr.mxu0 0.0
          %2648 = vmatpush1.msra.mxu0 0.0
          %2649 = vmatprep.subr.mxu0 0.0
          %2650 = vmatpush1.msra.mxu0 0.0
          %2651 = vmatprep.subr.mxu0 0.0
          %2652 = vmatpush1.msra.mxu0 0.0
          %2653 = vmatprep.subr.mxu0 0.0
          %2654 = vmatpush1.msra.mxu0 0.0
          %2655 = vmatprep.subr.mxu0 0.0
          %2656 = vmatpush1.msra.mxu0 0.0
          %2657 = vmatprep.subr.mxu0 0.0
          %2658 = vmatpush1.msra.mxu0 0.0
          %2659 = vmatprep.subr.mxu0 0.0
          %2660 = vmatpush1.msra.mxu0 0.0
          %2661 = vmatprep.subr.mxu0 0.0
          %2662 = vmatpush1.msra.mxu0 0.0
          %2663 = vmatprep.subr.mxu0 0.0
          %2664 = vmatpush1.msra.mxu0 %v2631
          %2665 = vmatprep.subr.mxu0 0.0
          %2666 = vmatpush1.msra.mxu0 %v2630
          %2667 = vmatprep.subr.mxu0 0.0
          %2668 = vmatpush2.msra.mxu0 0.0
          %2669 = vmatprep.subr.mxu0 0.0
          %2670 = vmatpush2.msra.mxu0 0.0
          %2671 = vmatprep.subr.mxu0 0.0
          %2672 = vmatpush2.msra.mxu0 0.0
          %2673 = vmatprep.subr.mxu0 0.0
          %2674 = vmatpush2.msra.mxu0 0.0
          %2675 = vmatprep.subr.mxu0 0.0
          %2676 = vmatpush2.msra.mxu0 0.0
          %2677 = vmatprep.subr.mxu0 0.0
          %2678 = vmatpush2.msra.mxu0 0.0
          %2679 = vmatprep.subr.mxu0 0.0
          %2680 = vmatpush2.msra.mxu0 0.0
          %2681 = vmatprep.subr.mxu0 0.0
          %2682 = vmatpush2.msra.mxu0 0.0
          %2683 = vmatprep.subr.mxu0 0.0
          %2684 = vmatpush2.msra.mxu0 0.0
          %2685 = vmatprep.subr.mxu0 0.0
          %2686 = vmatpush2.msra.mxu0 0.0
          %2687 = vmatprep.subr.mxu0 0.0
          %2688 = vmatpush2.msra.mxu0 0.0
          %2689 = vmatprep.subr.mxu0 0.0
          %2690 = vmatpush2.msra.mxu0 0.0
          %2691 = vmatprep.subr.mxu0 0.0
          %2692 = vmatpush2.msra.mxu0 0.0
          %2693 = vmatprep.subr.mxu0 0.0
          %2694 = vmatpush2.msra.mxu0 0.0
          %2695 = vmatprep.subr.mxu0 0.0
          %2696 = vmatpush2.msra.mxu0 0.0
          %2697 = vmatprep.subr.mxu0 0.0
          %2698 = vmatpush2.msra.mxu0 0.0
          %2699 = vmatprep.mubr.f32.mxu0 0.0
          %2700 = vmatmul.mubr.f32.gmra.mxu0 %v2633
          %v2701 = vpop.f32.mrf.mxu0
          %v2702 = vadd.f32 0.0, %v2701
          %v2703 = vpop.f32.mrf.mxu0
          %2704 = vdwg.mxu0
          %v2705 = vadd.f32 %v2624, %v2702
          %s2706 = scalar_lea.vmem %s5, 112
          %v2707 = vld [vmem:[%s2706] sm:$0xff]
          %v2708 = vld [vmem:[%s2706 + $0x8] sm:$0xff]
          %v2709 = vrot.slane %v2628, 1
          %v2710 = vsel %vm2168, %v2709, 0
          %2712 = vmatprep.subr.mxu0 0.0
          %2713 = vmatpush1.msra.mxu0 0.0
          %2714 = vmatprep.subr.mxu0 0.0
          %2715 = vmatpush1.msra.mxu0 0.0
          %2716 = vmatprep.subr.mxu0 0.0
          %2717 = vmatpush1.msra.mxu0 0.0
          %2718 = vmatprep.subr.mxu0 0.0
          %2719 = vmatpush1.msra.mxu0 0.0
          %2720 = vmatprep.subr.mxu0 0.0
          %2721 = vmatpush1.msra.mxu0 0.0
          %2722 = vmatprep.subr.mxu0 0.0
          %2723 = vmatpush1.msra.mxu0 0.0
          %2724 = vmatprep.subr.mxu0 0.0
          %2725 = vmatpush1.msra.mxu0 0.0
          %2726 = vmatprep.subr.mxu0 0.0
          %2727 = vmatpush1.msra.mxu0 0.0
          %2728 = vmatprep.subr.mxu0 0.0
          %2729 = vmatpush1.msra.mxu0 0.0
          %2730 = vmatprep.subr.mxu0 0.0
          %2731 = vmatpush1.msra.mxu0 0.0
          %2732 = vmatprep.subr.mxu0 0.0
          %2733 = vmatpush1.msra.mxu0 0.0
          %2734 = vmatprep.subr.mxu0 0.0
          %2735 = vmatpush1.msra.mxu0 0.0
          %2736 = vmatprep.subr.mxu0 0.0
          %2737 = vmatpush1.msra.mxu0 0.0
          %2738 = vmatprep.subr.mxu0 0.0
          %2739 = vmatpush1.msra.mxu0 0.0
          %2740 = vmatprep.subr.mxu0 0.0
          %2741 = vmatpush1.msra.mxu0 %v2708
          %2742 = vmatprep.subr.mxu0 0.0
          %2743 = vmatpush1.msra.mxu0 %v2707
          %2744 = vmatprep.subr.mxu0 0.0
          %2745 = vmatpush2.msra.mxu0 0.0
          %2746 = vmatprep.subr.mxu0 0.0
          %2747 = vmatpush2.msra.mxu0 0.0
          %2748 = vmatprep.subr.mxu0 0.0
          %2749 = vmatpush2.msra.mxu0 0.0
          %2750 = vmatprep.subr.mxu0 0.0
          %2751 = vmatpush2.msra.mxu0 0.0
          %2752 = vmatprep.subr.mxu0 0.0
          %2753 = vmatpush2.msra.mxu0 0.0
          %2754 = vmatprep.subr.mxu0 0.0
          %2755 = vmatpush2.msra.mxu0 0.0
          %2756 = vmatprep.subr.mxu0 0.0
          %2757 = vmatpush2.msra.mxu0 0.0
          %2758 = vmatprep.subr.mxu0 0.0
          %2759 = vmatpush2.msra.mxu0 0.0
          %2760 = vmatprep.subr.mxu0 0.0
          %2761 = vmatpush2.msra.mxu0 0.0
          %2762 = vmatprep.subr.mxu0 0.0
          %2763 = vmatpush2.msra.mxu0 0.0
          %2764 = vmatprep.subr.mxu0 0.0
          %2765 = vmatpush2.msra.mxu0 0.0
          %2766 = vmatprep.subr.mxu0 0.0
          %2767 = vmatpush2.msra.mxu0 0.0
          %2768 = vmatprep.subr.mxu0 0.0
          %2769 = vmatpush2.msra.mxu0 0.0
          %2770 = vmatprep.subr.mxu0 0.0
          %2771 = vmatpush2.msra.mxu0 0.0
          %2772 = vmatprep.subr.mxu0 0.0
          %2773 = vmatpush2.msra.mxu0 0.0
          %2774 = vmatprep.subr.mxu0 0.0
          %2775 = vmatpush2.msra.mxu0 0.0
          %2776 = vmatprep.mubr.f32.mxu0 0.0
          %2777 = vmatmul.mubr.f32.gmra.mxu0 %v2710
          %v2778 = vpop.f32.mrf.mxu0
          %v2779 = vadd.f32 0.0, %v2778
          %v2780 = vpop.f32.mrf.mxu0
          %2781 = vdwg.mxu0
          %v2782 = vadd.f32 %v2705, %v2779
          %s2783 = scalar_lea.vmem %s5, 128
          %v2784 = vld [vmem:[%s2783] sm:$0xff]
          %v2785 = vld [vmem:[%s2783 + $0x8] sm:$0xff]
          %v2786 = vrot.slane %v2628, 2
          %v2787 = vsel %vm2168, %v2786, 0
          %2789 = vmatprep.subr.mxu0 0.0
          %2790 = vmatpush1.msra.mxu0 0.0
          %2791 = vmatprep.subr.mxu0 0.0
          %2792 = vmatpush1.msra.mxu0 0.0
          %2793 = vmatprep.subr.mxu0 0.0
          %2794 = vmatpush1.msra.mxu0 0.0
          %2795 = vmatprep.subr.mxu0 0.0
          %2796 = vmatpush1.msra.mxu0 0.0
          %2797 = vmatprep.subr.mxu0 0.0
          %2798 = vmatpush1.msra.mxu0 0.0
          %2799 = vmatprep.subr.mxu0 0.0
          %2800 = vmatpush1.msra.mxu0 0.0
          %2801 = vmatprep.subr.mxu0 0.0
          %2802 = vmatpush1.msra.mxu0 0.0
          %2803 = vmatprep.subr.mxu0 0.0
          %2804 = vmatpush1.msra.mxu0 0.0
          %2805 = vmatprep.subr.mxu0 0.0
          %2806 = vmatpush1.msra.mxu0 0.0
          %2807 = vmatprep.subr.mxu0 0.0
          %2808 = vmatpush1.msra.mxu0 0.0
          %2809 = vmatprep.subr.mxu0 0.0
          %2810 = vmatpush1.msra.mxu0 0.0
          %2811 = vmatprep.subr.mxu0 0.0
          %2812 = vmatpush1.msra.mxu0 0.0
          %2813 = vmatprep.subr.mxu0 0.0
          %2814 = vmatpush1.msra.mxu0 0.0
          %2815 = vmatprep.subr.mxu0 0.0
          %2816 = vmatpush1.msra.mxu0 0.0
          %2817 = vmatprep.subr.mxu0 0.0
          %2818 = vmatpush1.msra.mxu0 %v2785
          %2819 = vmatprep.subr.mxu0 0.0
          %2820 = vmatpush1.msra.mxu0 %v2784
          %2821 = vmatprep.subr.mxu0 0.0
          %2822 = vmatpush2.msra.mxu0 0.0
          %2823 = vmatprep.subr.mxu0 0.0
          %2824 = vmatpush2.msra.mxu0 0.0
          %2825 = vmatprep.subr.mxu0 0.0
          %2826 = vmatpush2.msra.mxu0 0.0
          %2827 = vmatprep.subr.mxu0 0.0
          %2828 = vmatpush2.msra.mxu0 0.0
          %2829 = vmatprep.subr.mxu0 0.0
          %2830 = vmatpush2.msra.mxu0 0.0
          %2831 = vmatprep.subr.mxu0 0.0
          %2832 = vmatpush2.msra.mxu0 0.0
          %2833 = vmatprep.subr.mxu0 0.0
          %2834 = vmatpush2.msra.mxu0 0.0
          %2835 = vmatprep.subr.mxu0 0.0
          %2836 = vmatpush2.msra.mxu0 0.0
          %2837 = vmatprep.subr.mxu0 0.0
          %2838 = vmatpush2.msra.mxu0 0.0
          %2839 = vmatprep.subr.mxu0 0.0
          %2840 = vmatpush2.msra.mxu0 0.0
          %2841 = vmatprep.subr.mxu0 0.0
          %2842 = vmatpush2.msra.mxu0 0.0
          %2843 = vmatprep.subr.mxu0 0.0
          %2844 = vmatpush2.msra.mxu0 0.0
          %2845 = vmatprep.subr.mxu0 0.0
          %2846 = vmatpush2.msra.mxu0 0.0
          %2847 = vmatprep.subr.mxu0 0.0
          %2848 = vmatpush2.msra.mxu0 0.0
          %2849 = vmatprep.subr.mxu0 0.0
          %2850 = vmatpush2.msra.mxu0 0.0
          %2851 = vmatprep.subr.mxu0 0.0
          %2852 = vmatpush2.msra.mxu0 0.0
          %2853 = vmatprep.mubr.f32.mxu0 0.0
          %2854 = vmatmul.mubr.f32.gmra.mxu0 %v2787
          %v2855 = vpop.f32.mrf.mxu0
          %v2856 = vadd.f32 0.0, %v2855
          %v2857 = vpop.f32.mrf.mxu0
          %2858 = vdwg.mxu0
          %v2859 = vadd.f32 %v2782, %v2856
          %v2860 = vld [vmem:[%s6] sm:$0x1]
          %v2862 = vlaneseq
          %v2863 = vshrl.u32 %v2862, 7
          %v2864 = vsub.s32 0, %v2863
          %v2865 = vrot.slane %v2860, %v2864
          %v2867 = vadd.f32 %v2859, %v2865
          %vm2868 = vcmp.gt.f32.partialorder %v2867, 0.0
          %v2869 = vstv %s376
          %v2870 = vmul.f32 %v2869, %v2867
          %v2871 = vsel %vm2868, %v2867, %v2870
          %v2872 = vld [vmem:[%s7] sm:$0xff]
          %v2873 = vld [vmem:[%s7 + $0x8] sm:$0xff]
          %v2874 = vld [vmem:[%s7 + $0x10] sm:$0xff]
          %v2875 = vld [vmem:[%s7 + $0x18] sm:$0xff]
          %v2876 = vld [vmem:[%s8] sm:$0x1]
          %v2878 = vlaneseq
          %v2879 = vshrl.u32 %v2878, 7
          %v2880 = vsub.s32 0, %v2879
          %v2881 = vrot.slane %v2876, %v2880
          %vm2883 = vcmask 261120
          %v2885 = vsel %vm2883, %v2871, 0
          %2887 = vmatprep.subr.mxu0 0.0
          %2888 = vmatpush1.msra.mxu0 0.0
          %2889 = vmatprep.subr.mxu0 0.0
          %2890 = vmatpush1.msra.mxu0 0.0
          %2891 = vmatprep.subr.mxu0 0.0
          %2892 = vmatpush1.msra.mxu0 0.0
          %2893 = vmatprep.subr.mxu0 0.0
          %2894 = vmatpush1.msra.mxu0 0.0
          %2895 = vmatprep.subr.mxu0 0.0
          %2896 = vmatpush1.msra.mxu0 0.0
          %2897 = vmatprep.subr.mxu0 0.0
          %2898 = vmatpush1.msra.mxu0 0.0
          %2899 = vmatprep.subr.mxu0 0.0
          %2900 = vmatpush1.msra.mxu0 0.0
          %2901 = vmatprep.subr.mxu0 0.0
          %2902 = vmatpush1.msra.mxu0 0.0
          %2903 = vmatprep.subr.mxu0 0.0
          %2904 = vmatpush1.msra.mxu0 0.0
          %2905 = vmatprep.subr.mxu0 0.0
          %2906 = vmatpush1.msra.mxu0 0.0
          %2907 = vmatprep.subr.mxu0 0.0
          %2908 = vmatpush1.msra.mxu0 0.0
          %2909 = vmatprep.subr.mxu0 0.0
          %2910 = vmatpush1.msra.mxu0 0.0
          %2911 = vmatprep.subr.mxu0 0.0
          %2912 = vmatpush1.msra.mxu0 %v2875
          %2913 = vmatprep.subr.mxu0 0.0
          %2914 = vmatpush1.msra.mxu0 %v2874
          %2915 = vmatprep.subr.mxu0 0.0
          %2916 = vmatpush1.msra.mxu0 %v2873
          %2917 = vmatprep.subr.mxu0 0.0
          %2918 = vmatpush1.msra.mxu0 %v2872
          %2919 = vmatprep.subr.mxu0 0.0
          %2920 = vmatpush2.msra.mxu0 0.0
          %2921 = vmatprep.subr.mxu0 0.0
          %2922 = vmatpush2.msra.mxu0 0.0
          %2923 = vmatprep.subr.mxu0 0.0
          %2924 = vmatpush2.msra.mxu0 0.0
          %2925 = vmatprep.subr.mxu0 0.0
          %2926 = vmatpush2.msra.mxu0 0.0
          %2927 = vmatprep.subr.mxu0 0.0
          %2928 = vmatpush2.msra.mxu0 0.0
          %2929 = vmatprep.subr.mxu0 0.0
          %2930 = vmatpush2.msra.mxu0 0.0
          %2931 = vmatprep.subr.mxu0 0.0
          %2932 = vmatpush2.msra.mxu0 0.0
          %2933 = vmatprep.subr.mxu0 0.0
          %2934 = vmatpush2.msra.mxu0 0.0
          %2935 = vmatprep.subr.mxu0 0.0
          %2936 = vmatpush2.msra.mxu0 0.0
          %2937 = vmatprep.subr.mxu0 0.0
          %2938 = vmatpush2.msra.mxu0 0.0
          %2939 = vmatprep.subr.mxu0 0.0
          %2940 = vmatpush2.msra.mxu0 0.0
          %2941 = vmatprep.subr.mxu0 0.0
          %2942 = vmatpush2.msra.mxu0 0.0
          %2943 = vmatprep.subr.mxu0 0.0
          %2944 = vmatpush2.msra.mxu0 0.0
          %2945 = vmatprep.subr.mxu0 0.0
          %2946 = vmatpush2.msra.mxu0 0.0
          %2947 = vmatprep.subr.mxu0 0.0
          %2948 = vmatpush2.msra.mxu0 0.0
          %2949 = vmatprep.subr.mxu0 0.0
          %2950 = vmatpush2.msra.mxu0 0.0
          %2951 = vmatprep.mubr.f32.mxu0 0.0
          %2952 = vmatmul.mubr.f32.gmra.mxu0 %v2885
          %v2953 = vpop.f32.mrf.mxu0
          %v2954 = vadd.f32 %v2881, %v2953
          %v2955 = vpop.f32.mrf.mxu0
          %2956 = vdwg.mxu0
          %v2957 = vsub.f32 0.0, %v2954
          %v2958 = vmul.f32 %v2957, 1.442695
          %v2959 = vpow.pop %v2958
          %v2960 = vadd.f32 %v2959, 1.0
          %v2961 = vrcp.pop %v2960
          %v2962 = vmul.f32 1.0, %v2961
          %vm2963 = vcmp.eq.s32.totalorder %v1218, 0
          %v2964 = vsel %vm2963, %v2962, %v2954
          %s2965 = smul.u32 %s2153, 4
          %s2966 = scalar_lea.vmem %s373, %s2965
          %vm2967 = vcmask 59392
          %2968 = vst.msk [vmem:[%s2966] sm:$0x7] %vm2967, %v2964
        $region90: #{pnet_forward.1} parent=59 // loop_footer
          %s2157 = sadd.s32 1, %s2153
        $region91: #{pnet_forward.1} parent=59 // loop_footer_branch
          %2152 = sbr.rel target = $region87
        $region92: #{pnet_forward.1} parent=59 // loop_exit
          _
        %p2969 = scmp.lt.s32.totalorder %s22, 1
        %s2970 = scalar_select %p2969, %s22, 1
        %s2971 = smul.addr %s2970, 3
        %s2972 = smul.addr %s2971, 4
        %s2973 = scalar_lea.vmem %s10, %s2972
        // Predicated region
        $region93: #{pnet_forward.1} parent=59 // pred_check
          %p2974 = pneg %p255
        $region94: #{pnet_forward.1} parent=59 // pred_check_branch
          %2976 = sbr.rel (%p2974) target = $region96
        $region95: #{pnet_forward.1} parent=59 // pred_region
          _
        $region96: #{pnet_forward.1} parent=59 // pred_fallthru
          _
      $region60: #{pnet_forward.1} parent=5 // pred_fallthru
        _
      %p2977 = scmp.le.s32.totalorder 2, %s17
      // Predicated region
      $region97: #{pnet_forward.1} parent=5 // pred_check
        %p2978 = pneg %p2977
      $region98: #{pnet_forward.1} parent=5 // pred_check_branch
        %2980 = sbr.rel (%p2978) target = $region100
      $region99: #{pnet_forward.1} parent=5 // pred_region
        %s2981 = ssub.s32 %s17, 2
        // Predicated region
        $region101: #{pnet_forward.1} parent=99 // pred_check
          %p2982 = pneg %p261
        $region102: #{pnet_forward.1} parent=99 // pred_check_branch
          %2984 = sbr.rel (%p2982) target = $region104
        $region103: #{pnet_forward.1} parent=99 // pred_region
          %p2985 = scmp.lt.s32.totalorder %s23, 1
          %s2986 = scalar_select %p2985, %s23, 1
          %s2987 = smul.addr %s2986, 3
          %s2988 = smul.addr %s2987, 4
          %s2989 = scalar_lea.vmem %s10, %s2988
        $region104: #{pnet_forward.1} parent=99 // pred_fallthru
          _
      $region100: #{pnet_forward.1} parent=5 // pred_fallthru
        _
    $region6: #{pnet_forward.1} parent=1 // loop_footer
      %s21 = sadd.s32 1, %s17
    $region7: #{pnet_forward.1} parent=1 // loop_footer_branch
      %16 = sbr.rel target = $region3
    $region8: #{pnet_forward.1} parent=1 // loop_exit
      _
    %2990 = vsyncpa [#allocation6], 1
    %s2991 = scalar_lea.sflag [#allocation6], 1
    %2992 = vsyncpa %s2991, 1

</llo_original>
